<compile_context>
chip_gen: v5e
topology: v5e:2x2
jax: 0.10.0
libtpu: 0.0.40
codegen_flags: <defaults>
</compile_context>

<pallas_src>
import functools

import jax
import jax.numpy as jnp
from jax.experimental import pallas as pl
from jax.experimental.pallas import tpu as pltpu

_VMEM_LIMIT = 48 * 1024 * 1024  # fits v7x (64 MiB physical), raises v5e/v6e defaults


def _round_up(x, m):
    return (x + m - 1) // m * m


def _pick_band_height(H, Wpp, target_rows):
    """Largest divisor of H such that one band has <= target_rows flattened rows."""
    best = 1
    for d in range(1, H + 1):
        if H % d == 0 and d * Wpp <= target_rows:
            best = d
    return best


# --------------------------------------------------------------------------
# Pass A: 3x3 conv (9 accumulating K=Cin MXU dots on a flattened row band)
#         + per-channel sum / sum-of-squares for BatchNorm batch statistics.
# --------------------------------------------------------------------------
def _conv_stats_kernel(mask_ref, band_ref, w_ref, o_ref, sum_ref, sq_ref,
                       sum_s, sq_s, *, offsets, l_out):
    """One (band, Cout-tile) step.

    band_ref: (LB, Cin_p)      flattened padded pixel rows incl. halo
    w_ref:    (9, Cin_p, tc)   tap-major weights
    mask_ref: (l_out, 1)       1.0 on valid output columns, 0.0 on garbage cols
    o_ref:    (l_out, tc)      conv output (bf16)
    sum_ref/sq_ref: (1, tc)    written on the last band step only
    sum_s/sq_s:     (1, tc)    f32 VMEM accumulators (persist across the grid)
    """
    b = pl.program_id(1)

    @pl.when(b == 0)
    def _():
        sum_s[...] = jnp.zeros_like(sum_s)
        sq_s[...] = jnp.zeros_like(sq_s)

    # 3x3 conv: tap (kh, kw) is band rows [kh*Wpp+kw, kh*Wpp+kw + l_out).
    acc = jnp.dot(band_ref[pl.ds(offsets[0], l_out), :], w_ref[0],
                  preferred_element_type=jnp.float32)
    for t in range(1, 9):
        acc += jnp.dot(band_ref[pl.ds(offsets[t], l_out), :], w_ref[t],
                       preferred_element_type=jnp.float32)

    acc = acc * mask_ref[...]                  # zero garbage columns -> exact stats
    o_ref[...] = acc.astype(o_ref.dtype)
    sum_s[...] += jnp.sum(acc, axis=0, keepdims=True)
    sq_s[...] += jnp.sum(acc * acc, axis=0, keepdims=True)

    @pl.when(b == pl.num_programs(1) - 1)
    def _():
        sum_ref[...] = sum_s[...]
        sq_ref[...] = sq_s[...]


def _conv_stats(mask, bands, w_taps, *, tile_c, out_dtype, offsets, l_out):
    NB, LB, Cin_p = bands.shape
    C_pad = w_taps.shape[-1]
    n_ct = C_pad // tile_c
    kern = functools.partial(_conv_stats_kernel, offsets=offsets, l_out=l_out)
    return pl.pallas_call(
        kern,
        out_shape=(
            jax.ShapeDtypeStruct((NB, l_out, C_pad), out_dtype),
            jax.ShapeDtypeStruct((1, C_pad), jnp.float32),
            jax.ShapeDtypeStruct((1, C_pad), jnp.float32),
        ),
        grid_spec=pltpu.PrefetchScalarGridSpec(
            num_scalar_prefetch=0,
            grid=(n_ct, NB),
            in_specs=[
                pl.BlockSpec((None, l_out, 1), lambda c, b: (0, 0, 0)),
                pl.BlockSpec((None, LB, Cin_p), lambda c, b: (b, 0, 0)),
                pl.BlockSpec((9, Cin_p, tile_c), lambda c, b: (0, 0, c)),
            ],
            out_specs=(
                pl.BlockSpec((None, l_out, tile_c), lambda c, b: (b, 0, c)),
                pl.BlockSpec((1, tile_c), lambda c, b: (0, c)),
                pl.BlockSpec((1, tile_c), lambda c, b: (0, c)),
            ),
            scratch_shapes=[pltpu.VMEM((1, tile_c), jnp.float32),
                            pltpu.VMEM((1, tile_c), jnp.float32)],
        ),
        # Cout tiles are independent ("parallel", v7x megacore); the band axis
        # carries the stats reduction -> "arbitrary".
        compiler_params=pltpu.CompilerParams(
            dimension_semantics=("parallel", "arbitrary"),
            vmem_limit_bytes=_VMEM_LIMIT),
    )(mask, bands, w_taps)


# --------------------------------------------------------------------------
# Pass B: fused BN scale/shift (+ optional residual) (+ ReLU), streaming pass.
# --------------------------------------------------------------------------
def _bn_act_kernel(y_ref, scale_ref, shift_ref, o_ref, *, relu):
    y = y_ref[...].astype(jnp.float32) * scale_ref[...] + shift_ref[...]
    if relu:
        y = jnp.maximum(y, 0.0)
    o_ref[...] = y.astype(o_ref.dtype)


def _bn_add_act_kernel(y_ref, res_ref, scale_ref, shift_ref, o_ref, *, relu):
    y = (y_ref[...].astype(jnp.float32) * scale_ref[...] + shift_ref[...]
         + res_ref[...].astype(jnp.float32))
    if relu:
        y = jnp.maximum(y, 0.0)
    o_ref[...] = y.astype(o_ref.dtype)


def _bn_act(conv_out, scale, shift, residual, *, relu):
    NB, L_out, C_pad = conv_out.shape
    row_spec = pl.BlockSpec((None, L_out, C_pad), lambda b: (b, 0, 0))
    vec_spec = pl.BlockSpec((1, C_pad), lambda b: (0, 0))
    if residual is None:
        kern = functools.partial(_bn_act_kernel, relu=relu)
        in_specs = [row_spec, vec_spec, vec_spec]
        args = (conv_out, scale, shift)
    else:
        kern = functools.partial(_bn_add_act_kernel, relu=relu)
        in_specs = [row_spec, row_spec, vec_spec, vec_spec]
        args = (conv_out, residual, scale, shift)
    return pl.pallas_call(
        kern,
        out_shape=jax.ShapeDtypeStruct((NB, L_out, C_pad), conv_out.dtype),
        grid_spec=pltpu.PrefetchScalarGridSpec(
            num_scalar_prefetch=0,
            grid=(NB,),
            in_specs=in_specs,
            out_specs=row_spec,
        ),
        # Reuse the conv_out buffer for the output (one less HBM slab).
        input_output_aliases={0: 0},
        compiler_params=pltpu.CompilerParams(
            dimension_semantics=("parallel",),
            vmem_limit_bytes=_VMEM_LIMIT),
    )(*args)


# --------------------------------------------------------------------------
# XLA-side glue: banding, mask, weight reshaping, BN folding, extraction.
# --------------------------------------------------------------------------
def _build_bands(x, th, n_bands, Wpp):
    """x: (N, H, W, C) -> overlapping row bands, flattened: (N*n_bands, LB, C).

    Padded image xpp: rows pad (1 top, 2 bottom), cols pad (2 left, 1 right),
    so xpp[i, j] = x[i-1, j-2].  Band b = flat rows [b*th*Wpp, b*th*Wpp + LB).
    Only ~ (th+3)/th of the input bytes (vs 9x for full im2col).
    """
    N, H, W, C = x.shape
    xpp = jnp.pad(x, ((0, 0), (1, 2), (2, 1), (0, 0)))          # (N, H+3, Wpp, C)
    flat = xpp.reshape(N, (H + 3) * Wpp, C)
    LB = (th + 3) * Wpp
    bands = [flat[:, b * th * Wpp: b * th * Wpp + LB, :] for b in range(n_bands)]
    bands = jnp.stack(bands, axis=1)                             # (N, nb, LB, C)
    return bands.reshape(N * n_bands, LB, C)


def _band_rows(x, th, n_bands, Wpp):
    """Halo-free banding of x aligned with the valid output columns [1, W+1)."""
    N, H, W, C = x.shape
    xq = jnp.pad(x, ((0, 0), (0, 0), (1, Wpp - W - 1), (0, 0)))  # (N, H, Wpp, C)
    return xq.reshape(N * n_bands, th * Wpp, C)


def _extract(banded, N, n_bands, th, Wpp, W, Cout):
    """(N*nb, th*Wpp, C_pad) banded layout -> (N, H, W, Cout)."""
    y = banded.reshape(N, n_bands, th, Wpp, banded.shape[-1])
    y = y[:, :, :, 1:W + 1, :Cout]
    return y.reshape(N, n_bands * th, W, Cout)


def _conv_bn_stage(x_nhwc, weight, gamma, beta, *, eps, relu,
                   residual_nhwc=None, matmul_dtype=jnp.bfloat16,
                   target_rows=1024):
    """conv3x3(pad=1, bias=False) -> BN(batch stats) [-> +residual] [-> ReLU]."""
    N, H, W, Cin = x_nhwc.shape
    Cout = weight.shape[0]
    Wpp = W + 3
    th = _pick_band_height(H, Wpp, target_rows)      # th | H  (no row masking)
    n_bands = H // th
    L_out = th * Wpp
    Cin_p = _round_up(Cin, 8)
    C_pad = _round_up(Cout, 128)
    tile_c = 256 if C_pad % 256 == 0 else 128        # fill 256-wide MXU on v6e/v7x

    # Banded bf16 input (the only big stream pass A reads).
    xb = x_nhwc.astype(matmul_dtype)
    if Cin_p != Cin:
        xb = jnp.pad(xb, ((0, 0), (0, 0), (0, 0), (0, Cin_p - Cin)))
    bands = _build_bands(xb, th, n_bands, Wpp)

    # Tap-major weights: (Cout, Cin, 3, 3) -> (9, Cin_p, C_pad), t = kh*3 + kw.
    w_taps = jnp.transpose(weight, (2, 3, 1, 0)).reshape(9, Cin, Cout)
    w_taps = jnp.pad(w_taps, ((0, 0), (0, Cin_p - Cin), (0, C_pad - Cout)))
    w_taps = w_taps.astype(matmul_dtype)

    # Valid-column mask (garbage columns come from the flat-offset trick).
    col = jnp.arange(L_out, dtype=jnp.int32) % Wpp
    mask = ((col >= 1) & (col <= W)).astype(jnp.float32).reshape(1, L_out, 1)

    offsets = tuple(kh * Wpp + kw for kh in range(3) for kw in range(3))

    conv_out, ch_sum, ch_sq = _conv_stats(
        mask, bands, w_taps, tile_c=tile_c, out_dtype=matmul_dtype,
        offsets=offsets, l_out=L_out)

    # Fold BN into one per-channel scale/shift (training-mode biased batch stats).
    # NOTE: one-pass E[x^2]-E[x]^2 in f32; use matmul_dtype=float32 for parity tests.
    P = N * H * W
    mean = ch_sum / P
    var = jnp.maximum(ch_sq / P - mean * mean, 0.0)
    g = jnp.pad(gamma.astype(jnp.float32), (0, C_pad - Cout)).reshape(1, C_pad)
    bvec = jnp.pad(beta.astype(jnp.float32), (0, C_pad - Cout)).reshape(1, C_pad)
    scale = g * jax.lax.rsqrt(var + eps)
    shift = bvec - mean * scale

    res_banded = None
    if residual_nhwc is not None:
        rb = residual_nhwc.astype(matmul_dtype)
        rb = jnp.pad(rb, ((0, 0), (0, 0), (0, 0), (0, C_pad - Cout)))
        res_banded = _band_rows(rb, th, n_bands, Wpp)

    y = _bn_act(conv_out, scale, shift, res_banded, relu=relu)
    return _extract(y, N, n_bands, th, Wpp, W, Cout)


def basic_block(x_nchw, w1, g1, b1, w2, g2, b2, *, eps=1e-5,
                matmul_dtype=jnp.bfloat16, target_rows=1024):
    """ResNet BasicBlock forward (stride=1, expansion=1, downsample=None).

    x_nchw: (N, C, H, W); w1: (C_out, C_in, 3, 3); w2: (C_out, C_out, 3, 3).
    Returns (N, C_out, H, W).  Training-mode BatchNorm batch statistics.
    """
    # TODO(synk): stride>1 / downsample branch not implemented (identity residual only).
    N, Cin, H, W = x_nchw.shape
    assert w2.shape[0] == Cin, "identity residual requires in_channels == out_channels"

    x_nhwc = jnp.transpose(x_nchw, (0, 2, 3, 1))

    # Stage 1: conv1 -> bn1 -> relu           (stored / streamed in bf16)
    y1 = _conv_bn_stage(x_nhwc, w1, g1, b1, eps=eps, relu=True,
                        matmul_dtype=matmul_dtype, target_rows=target_rows)

    # Stage 2: conv2 -> bn2 -> (+identity) -> relu   (residual fused in pass B)
    out_nhwc = _conv_bn_stage(y1, w2, g2, b2, eps=eps, relu=True,
                              residual_nhwc=x_nhwc, matmul_dtype=matmul_dtype,
                              target_rows=target_rows)

    return jnp.transpose(out_nhwc, (0, 3, 1, 2)).astype(x_nchw.dtype)


# --------------------------------------------------------------------------
# Pure-JAX reference (for a loose correctness check at the toy shape).
# --------------------------------------------------------------------------
def _reference(x_nchw, w1, g1, b1, w2, g2, b2, eps=1e-5):
    def conv(xh, w):
        return jax.lax.conv_general_dilated(
            xh, jnp.transpose(w, (2, 3, 1, 0)), window_strides=(1, 1),
            padding="SAME", dimension_numbers=("NHWC", "HWIO", "NHWC"))

    def bn(y, g, b):
        m = jnp.mean(y, axis=(0, 1, 2))
        v = jnp.mean((y - m) ** 2, axis=(0, 1, 2))
        return (y - m) * jax.lax.rsqrt(v + eps) * g + b

    xh = jnp.transpose(x_nchw, (0, 2, 3, 1))
    y = jax.nn.relu(bn(conv(xh, w1), g1, b1))
    y = jax.nn.relu(bn(conv(y, w2), g2, b2) + xh)
    return jnp.transpose(y, (0, 3, 1, 2))


if __name__ == "__main__":
    # BasicBlock(in_channels=4, out_channels=4, stride=1, downsample=None);
    # input x: (2, 4, 16, 16) NCHW.  (Real ResNet shapes use Cin>=64, 56x56+.)
    N, Cin, Cout, H, W, KH, KW = 2, 4, 4, 16, 16, 3, 3

    key = jax.random.PRNGKey(0)
    kx, k1, k2, kg1, kb1, kg2, kb2 = jax.random.split(key, 7)
    x = jax.random.normal(kx, (N, Cin, H, W), dtype=jnp.float32)

    fan_in = Cin * KH * KW
    bound = 1.0 / (fan_in ** 0.5)
    w1 = jax.random.uniform(k1, (Cout, Cin, KH, KW), jnp.float32, -bound, bound)
    w2 = jax.random.uniform(k2, (Cout, Cout, KH, KW), jnp.float32, -bound, bound)
    g1 = jax.random.uniform(kg1, (Cout,), jnp.float32, 0.8, 1.2)
    b1 = jax.random.uniform(kb1, (Cout,), jnp.float32, -0.2, 0.2)
    g2 = jax.random.uniform(kg2, (Cout,), jnp.float32, 0.8, 1.2)
    b2 = jax.random.uniform(kb2, (Cout,), jnp.float32, -0.2, 0.2)

    out = basic_block(x, w1, g1, b1, w2, g2, b2)
    jax.block_until_ready(out)

    assert out.shape == (N, Cout, H, W)
    assert bool(jnp.all(out >= 0.0))  # final ReLU

    ref = _reference(x, w1, g1, b1, w2, g2, b2)
    max_err = float(jnp.max(jnp.abs(out - ref)))
    assert max_err < 0.25, f"max abs error vs reference too large: {max_err}"

    print("KERNEL_OK")
</pallas_src>

<mosaic_0001>
module attributes {stable_mosaic.version = 11 : i64} {
  func.func @_conv_stats_kernel(%arg0: i32, %arg1: i32, %arg2: memref<1x304x1xf32, #tpu.memory_space<vmem>>, %arg3: memref<1x361x8xbf16, #tpu.memory_space<vmem>>, %arg4: memref<9x8x128xbf16, #tpu.memory_space<vmem>>, %arg5: memref<1x304x128xbf16, #tpu.memory_space<vmem>>, %arg6: memref<1x128xf32, #tpu.memory_space<vmem>>, %arg7: memref<1x128xf32, #tpu.memory_space<vmem>>, %arg8: memref<1x128xf32, #tpu.memory_space<vmem>>, %arg9: memref<1x128xf32, #tpu.memory_space<vmem>>) attributes {dimension_semantics = [#tpu.dimension_semantics<parallel>, #tpu.dimension_semantics<arbitrary>], iteration_bounds = array<i64: 1, 2>, scalar_prefetch = 0 : i64, scratch_operands = 2 : i64, tpu.core_type = #tpu.core_type<tc>, window_params = [{pipeline_mode = #tpu.pipeline_mode<synchronous>, transform_indices = @transform_0, window_bounds = array<i64: 1, 304, 1>}, {transform_indices = @transform_1, window_bounds = array<i64: 1, 361, 8>}, {transform_indices = @transform_2, window_bounds = array<i64: 9, 8, 128>}, {transform_indices = @transform_3, window_bounds = array<i64: 1, 304, 128>}, {transform_indices = @transform_4, window_bounds = array<i64: 1, 128>}, {transform_indices = @transform_5, window_bounds = array<i64: 1, 128>}]} {
    %c0_i32 = arith.constant 0 : i32
    %0 = arith.cmpi eq, %arg1, %c0_i32 : i32
    %1 = arith.extui %0 : i1 to i32
    %c0_i32_0 = arith.constant 0 : i32
    %2 = arith.cmpi ne, %1, %c0_i32_0 : i32
    scf.if %2 {
      %cst_65 = arith.constant 0.000000e+00 : f32
      %78 = vector.broadcast %cst_65 : f32 to vector<1x128xf32>
      %c0_66 = arith.constant 0 : index
      %c0_67 = arith.constant 0 : index
      %79 = vector.load %arg8[%c0_66, %c0_67] : memref<1x128xf32, #tpu.memory_space<vmem>>, vector<1x128xf32>
      tpu.vector_store %arg8[%c0_66, %c0_67], %78 {strides = array<i32>} : memref<1x128xf32, #tpu.memory_space<vmem>>, vector<1x128xf32>,
      %cst_68 = arith.constant 0.000000e+00 : f32
      %80 = vector.broadcast %cst_68 : f32 to vector<1x128xf32>
      %c0_69 = arith.constant 0 : index
      %c0_70 = arith.constant 0 : index
      %81 = vector.load %arg9[%c0_69, %c0_70] : memref<1x128xf32, #tpu.memory_space<vmem>>, vector<1x128xf32>
      tpu.vector_store %arg9[%c0_69, %c0_70], %80 {strides = array<i32>} : memref<1x128xf32, #tpu.memory_space<vmem>>, vector<1x128xf32>,
    } else {
    }
    %c0 = arith.constant 0 : index
    %c0_1 = arith.constant 0 : index
    %c0_2 = arith.constant 0 : index
    %3 = vector.load %arg3[%c0, %c0_1, %c0_2] : memref<1x361x8xbf16, #tpu.memory_space<vmem>>, vector<1x304x8xbf16>
    %4 = vector.shape_cast %3 : vector<1x304x8xbf16> to vector<304x8xbf16>
    %c0_3 = arith.constant 0 : index
    %c0_4 = arith.constant 0 : index
    %c0_5 = arith.constant 0 : index
    %5 = vector.load %arg4[%c0_3, %c0_4, %c0_5] : memref<9x8x128xbf16, #tpu.memory_space<vmem>>, vector<1x8x128xbf16>
    %6 = vector.shape_cast %5 : vector<1x8x128xbf16> to vector<8x128xbf16>
    %cst = arith.constant dense<0.000000e+00> : vector<304x128xf32>
    %7 = tpu.matmul %4, %6, %cst {dimension_numbers = #tpu.dot_dimension_numbers<[1], [0], [0], [1], [0, 0, 1, 1], [], []>} : vector<304x8xbf16>, vector<8x128xbf16>, vector<304x128xf32> -> vector<304x128xf32>
    %c0_6 = arith.constant 0 : index
    %c1 = arith.constant 1 : index
    %c0_7 = arith.constant 0 : index
    %8 = vector.load %arg3[%c0_6, %c1, %c0_7] : memref<1x361x8xbf16, #tpu.memory_space<vmem>>, vector<1x304x8xbf16>
    %9 = vector.shape_cast %8 : vector<1x304x8xbf16> to vector<304x8xbf16>
    %c1_8 = arith.constant 1 : index
    %c0_9 = arith.constant 0 : index
    %c0_10 = arith.constant 0 : index
    %10 = vector.load %arg4[%c1_8, %c0_9, %c0_10] : memref<9x8x128xbf16, #tpu.memory_space<vmem>>, vector<1x8x128xbf16>
    %11 = vector.shape_cast %10 : vector<1x8x128xbf16> to vector<8x128xbf16>
    %cst_11 = arith.constant dense<0.000000e+00> : vector<304x128xf32>
    %12 = tpu.matmul %9, %11, %cst_11 {dimension_numbers = #tpu.dot_dimension_numbers<[1], [0], [0], [1], [0, 0, 1, 1], [], []>} : vector<304x8xbf16>, vector<8x128xbf16>, vector<304x128xf32> -> vector<304x128xf32>
    %13 = arith.addf %7, %12 : vector<304x128xf32>
    %c0_12 = arith.constant 0 : index
    %c2 = arith.constant 2 : index
    %c0_13 = arith.constant 0 : index
    %14 = vector.load %arg3[%c0_12, %c2, %c0_13] : memref<1x361x8xbf16, #tpu.memory_space<vmem>>, vector<1x304x8xbf16>
    %15 = vector.shape_cast %14 : vector<1x304x8xbf16> to vector<304x8xbf16>
    %c2_14 = arith.constant 2 : index
    %c0_15 = arith.constant 0 : index
    %c0_16 = arith.constant 0 : index
    %16 = vector.load %arg4[%c2_14, %c0_15, %c0_16] : memref<9x8x128xbf16, #tpu.memory_space<vmem>>, vector<1x8x128xbf16>
    %17 = vector.shape_cast %16 : vector<1x8x128xbf16> to vector<8x128xbf16>
    %cst_17 = arith.constant dense<0.000000e+00> : vector<304x128xf32>
    %18 = tpu.matmul %15, %17, %cst_17 {dimension_numbers = #tpu.dot_dimension_numbers<[1], [0], [0], [1], [0, 0, 1, 1], [], []>} : vector<304x8xbf16>, vector<8x128xbf16>, vector<304x128xf32> -> vector<304x128xf32>
    %19 = arith.addf %13, %18 : vector<304x128xf32>
    %c0_18 = arith.constant 0 : index
    %c19 = arith.constant 19 : index
    %c0_19 = arith.constant 0 : index
    %20 = vector.load %arg3[%c0_18, %c19, %c0_19] : memref<1x361x8xbf16, #tpu.memory_space<vmem>>, vector<1x304x8xbf16>
    %21 = vector.shape_cast %20 : vector<1x304x8xbf16> to vector<304x8xbf16>
    %c3 = arith.constant 3 : index
    %c0_20 = arith.constant 0 : index
    %c0_21 = arith.constant 0 : index
    %22 = vector.load %arg4[%c3, %c0_20, %c0_21] : memref<9x8x128xbf16, #tpu.memory_space<vmem>>, vector<1x8x128xbf16>
    %23 = vector.shape_cast %22 : vector<1x8x128xbf16> to vector<8x128xbf16>
    %cst_22 = arith.constant dense<0.000000e+00> : vector<304x128xf32>
    %24 = tpu.matmul %21, %23, %cst_22 {dimension_numbers = #tpu.dot_dimension_numbers<[1], [0], [0], [1], [0, 0, 1, 1], [], []>} : vector<304x8xbf16>, vector<8x128xbf16>, vector<304x128xf32> -> vector<304x128xf32>
    %25 = arith.addf %19, %24 : vector<304x128xf32>
    %c0_23 = arith.constant 0 : index
    %c20 = arith.constant 20 : index
    %c0_24 = arith.constant 0 : index
    %26 = vector.load %arg3[%c0_23, %c20, %c0_24] : memref<1x361x8xbf16, #tpu.memory_space<vmem>>, vector<1x304x8xbf16>
    %27 = vector.shape_cast %26 : vector<1x304x8xbf16> to vector<304x8xbf16>
    %c4 = arith.constant 4 : index
    %c0_25 = arith.constant 0 : index
    %c0_26 = arith.constant 0 : index
    %28 = vector.load %arg4[%c4, %c0_25, %c0_26] : memref<9x8x128xbf16, #tpu.memory_space<vmem>>, vector<1x8x128xbf16>
    %29 = vector.shape_cast %28 : vector<1x8x128xbf16> to vector<8x128xbf16>
    %cst_27 = arith.constant dense<0.000000e+00> : vector<304x128xf32>
    %30 = tpu.matmul %27, %29, %cst_27 {dimension_numbers = #tpu.dot_dimension_numbers<[1], [0], [0], [1], [0, 0, 1, 1], [], []>} : vector<304x8xbf16>, vector<8x128xbf16>, vector<304x128xf32> -> vector<304x128xf32>
    %31 = arith.addf %25, %30 : vector<304x128xf32>
    %c0_28 = arith.constant 0 : index
    %c21 = arith.constant 21 : index
    %c0_29 = arith.constant 0 : index
    %32 = vector.load %arg3[%c0_28, %c21, %c0_29] : memref<1x361x8xbf16, #tpu.memory_space<vmem>>, vector<1x304x8xbf16>
    %33 = vector.shape_cast %32 : vector<1x304x8xbf16> to vector<304x8xbf16>
    %c5 = arith.constant 5 : index
    %c0_30 = arith.constant 0 : index
    %c0_31 = arith.constant 0 : index
    %34 = vector.load %arg4[%c5, %c0_30, %c0_31] : memref<9x8x128xbf16, #tpu.memory_space<vmem>>, vector<1x8x128xbf16>
    %35 = vector.shape_cast %34 : vector<1x8x128xbf16> to vector<8x128xbf16>
    %cst_32 = arith.constant dense<0.000000e+00> : vector<304x128xf32>
    %36 = tpu.matmul %33, %35, %cst_32 {dimension_numbers = #tpu.dot_dimension_numbers<[1], [0], [0], [1], [0, 0, 1, 1], [], []>} : vector<304x8xbf16>, vector<8x128xbf16>, vector<304x128xf32> -> vector<304x128xf32>
    %37 = arith.addf %31, %36 : vector<304x128xf32>
    %c0_33 = arith.constant 0 : index
    %c38 = arith.constant 38 : index
    %c0_34 = arith.constant 0 : index
    %38 = vector.load %arg3[%c0_33, %c38, %c0_34] : memref<1x361x8xbf16, #tpu.memory_space<vmem>>, vector<1x304x8xbf16>
    %39 = vector.shape_cast %38 : vector<1x304x8xbf16> to vector<304x8xbf16>
    %c6 = arith.constant 6 : index
    %c0_35 = arith.constant 0 : index
    %c0_36 = arith.constant 0 : index
    %40 = vector.load %arg4[%c6, %c0_35, %c0_36] : memref<9x8x128xbf16, #tpu.memory_space<vmem>>, vector<1x8x128xbf16>
    %41 = vector.shape_cast %40 : vector<1x8x128xbf16> to vector<8x128xbf16>
    %cst_37 = arith.constant dense<0.000000e+00> : vector<304x128xf32>
    %42 = tpu.matmul %39, %41, %cst_37 {dimension_numbers = #tpu.dot_dimension_numbers<[1], [0], [0], [1], [0, 0, 1, 1], [], []>} : vector<304x8xbf16>, vector<8x128xbf16>, vector<304x128xf32> -> vector<304x128xf32>
    %43 = arith.addf %37, %42 : vector<304x128xf32>
    %c0_38 = arith.constant 0 : index
    %c39 = arith.constant 39 : index
    %c0_39 = arith.constant 0 : index
    %44 = vector.load %arg3[%c0_38, %c39, %c0_39] : memref<1x361x8xbf16, #tpu.memory_space<vmem>>, vector<1x304x8xbf16>
    %45 = vector.shape_cast %44 : vector<1x304x8xbf16> to vector<304x8xbf16>
    %c7 = arith.constant 7 : index
    %c0_40 = arith.constant 0 : index
    %c0_41 = arith.constant 0 : index
    %46 = vector.load %arg4[%c7, %c0_40, %c0_41] : memref<9x8x128xbf16, #tpu.memory_space<vmem>>, vector<1x8x128xbf16>
    %47 = vector.shape_cast %46 : vector<1x8x128xbf16> to vector<8x128xbf16>
    %cst_42 = arith.constant dense<0.000000e+00> : vector<304x128xf32>
    %48 = tpu.matmul %45, %47, %cst_42 {dimension_numbers = #tpu.dot_dimension_numbers<[1], [0], [0], [1], [0, 0, 1, 1], [], []>} : vector<304x8xbf16>, vector<8x128xbf16>, vector<304x128xf32> -> vector<304x128xf32>
    %49 = arith.addf %43, %48 : vector<304x128xf32>
    %c0_43 = arith.constant 0 : index
    %c40 = arith.constant 40 : index
    %c0_44 = arith.constant 0 : index
    %50 = vector.load %arg3[%c0_43, %c40, %c0_44] : memref<1x361x8xbf16, #tpu.memory_space<vmem>>, vector<1x304x8xbf16>
    %51 = vector.shape_cast %50 : vector<1x304x8xbf16> to vector<304x8xbf16>
    %c8 = arith.constant 8 : index
    %c0_45 = arith.constant 0 : index
    %c0_46 = arith.constant 0 : index
    %52 = vector.load %arg4[%c8, %c0_45, %c0_46] : memref<9x8x128xbf16, #tpu.memory_space<vmem>>, vector<1x8x128xbf16>
    %53 = vector.shape_cast %52 : vector<1x8x128xbf16> to vector<8x128xbf16>
    %cst_47 = arith.constant dense<0.000000e+00> : vector<304x128xf32>
    %54 = tpu.matmul %51, %53, %cst_47 {dimension_numbers = #tpu.dot_dimension_numbers<[1], [0], [0], [1], [0, 0, 1, 1], [], []>} : vector<304x8xbf16>, vector<8x128xbf16>, vector<304x128xf32> -> vector<304x128xf32>
    %55 = arith.addf %49, %54 : vector<304x128xf32>
    %c0_48 = arith.constant 0 : index
    %c0_49 = arith.constant 0 : index
    %c0_50 = arith.constant 0 : index
    %56 = vector.load %arg2[%c0_48, %c0_49, %c0_50] : memref<1x304x1xf32, #tpu.memory_space<vmem>>, vector<1x304x1xf32>
    %57 = vector.shape_cast %56 : vector<1x304x1xf32> to vector<304x1xf32>
    %58 = vector.broadcast %57 : vector<304x1xf32> to vector<304x128xf32>
    %59 = arith.mulf %55, %58 : vector<304x128xf32>
    %60 = arith.truncf %59 : vector<304x128xf32> to vector<304x128xbf16>
    %c0_51 = arith.constant 0 : index
    %c0_52 = arith.constant 0 : index
    %c0_53 = arith.constant 0 : index
    %61 = vector.load %arg5[%c0_51, %c0_52, %c0_53] : memref<1x304x128xbf16, #tpu.memory_space<vmem>>, vector<1x304x128xbf16>
    %62 = vector.shape_cast %61 : vector<1x304x128xbf16> to vector<304x128xbf16>
    %63 = vector.shape_cast %60 : vector<304x128xbf16> to vector<1x304x128xbf16>
    tpu.vector_store %arg5[%c0_51, %c0_52, %c0_53], %63 {strides = array<i32>} : memref<1x304x128xbf16, #tpu.memory_space<vmem>>, vector<1x304x128xbf16>,
    %c0_54 = arith.constant 0 : index
    %c0_55 = arith.constant 0 : index
    %64 = vector.load %arg8[%c0_54, %c0_55] : memref<1x128xf32, #tpu.memory_space<vmem>>, vector<1x128xf32>
    %cst_56 = arith.constant dense<0.000000e+00> : vector<128xf32>
    %65 = vector.multi_reduction <add>, %59, %cst_56 [0] : vector<304x128xf32> to vector<128xf32>
    %66 = vector.shape_cast %65 : vector<128xf32> to vector<1x128xf32>
    %67 = arith.addf %64, %66 : vector<1x128xf32>
    %c0_57 = arith.constant 0 : index
    %c0_58 = arith.constant 0 : index
    %68 = vector.load %arg8[%c0_57, %c0_58] : memref<1x128xf32, #tpu.memory_space<vmem>>, vector<1x128xf32>
    tpu.vector_store %arg8[%c0_57, %c0_58], %67 {strides = array<i32>} : memref<1x128xf32, #tpu.memory_space<vmem>>, vector<1x128xf32>,
    %c0_59 = arith.constant 0 : index
    %c0_60 = arith.constant 0 : index
    %69 = vector.load %arg9[%c0_59, %c0_60] : memref<1x128xf32, #tpu.memory_space<vmem>>, vector<1x128xf32>
    %70 = arith.mulf %59, %59 : vector<304x128xf32>
    %cst_61 = arith.constant dense<0.000000e+00> : vector<128xf32>
    %71 = vector.multi_reduction <add>, %70, %cst_61 [0] : vector<304x128xf32> to vector<128xf32>
    %72 = vector.shape_cast %71 : vector<128xf32> to vector<1x128xf32>
    %73 = arith.addf %69, %72 : vector<1x128xf32>
    %c0_62 = arith.constant 0 : index
    %c0_63 = arith.constant 0 : index
    %74 = vector.load %arg9[%c0_62, %c0_63] : memref<1x128xf32, #tpu.memory_space<vmem>>, vector<1x128xf32>
    tpu.vector_store %arg9[%c0_62, %c0_63], %73 {strides = array<i32>} : memref<1x128xf32, #tpu.memory_space<vmem>>, vector<1x128xf32>,
    %c1_i32 = arith.constant 1 : i32
    %75 = arith.cmpi eq, %arg1, %c1_i32 : i32
    %76 = arith.extui %75 : i1 to i32
    %c0_i32_64 = arith.constant 0 : i32
    %77 = arith.cmpi ne, %76, %c0_i32_64 : i32
    scf.if %77 {
      %c0_65 = arith.constant 0 : index
      %c0_66 = arith.constant 0 : index
      %78 = vector.load %arg8[%c0_65, %c0_66] : memref<1x128xf32, #tpu.memory_space<vmem>>, vector<1x128xf32>
      %c0_67 = arith.constant 0 : index
      %c0_68 = arith.constant 0 : index
      %79 = vector.load %arg6[%c0_67, %c0_68] : memref<1x128xf32, #tpu.memory_space<vmem>>, vector<1x128xf32>
      tpu.vector_store %arg6[%c0_67, %c0_68], %78 {strides = array<i32>} : memref<1x128xf32, #tpu.memory_space<vmem>>, vector<1x128xf32>,
      %c0_69 = arith.constant 0 : index
      %c0_70 = arith.constant 0 : index
      %80 = vector.load %arg9[%c0_69, %c0_70] : memref<1x128xf32, #tpu.memory_space<vmem>>, vector<1x128xf32>
      %c0_71 = arith.constant 0 : index
      %c0_72 = arith.constant 0 : index
      %81 = vector.load %arg7[%c0_71, %c0_72] : memref<1x128xf32, #tpu.memory_space<vmem>>, vector<1x128xf32>
      tpu.vector_store %arg7[%c0_71, %c0_72], %80 {strides = array<i32>} : memref<1x128xf32, #tpu.memory_space<vmem>>, vector<1x128xf32>,
    } else {
    }
    return
  }
  func.func @transform_0(%arg0: i32, %arg1: i32) -> (i32, i32, i32) {
    %c0_i32 = arith.constant 0 : i32
    %c0_i32_0 = arith.constant 0 : i32
    %c0_i32_1 = arith.constant 0 : i32
    %c0_i32_2 = arith.constant 0 : i32
    return %c0_i32, %c0_i32_0, %c0_i32_1 : i32, i32, i32
  }
  func.func @transform_1(%arg0: i32, %arg1: i32) -> (i32, i32, i32) {
    %c0_i32 = arith.constant 0 : i32
    %c0_i32_0 = arith.constant 0 : i32
    %c0_i32_1 = arith.constant 0 : i32
    return %arg1, %c0_i32, %c0_i32_0 : i32, i32, i32
  }
  func.func @transform_2(%arg0: i32, %arg1: i32) -> (i32, i32, i32) {
    %c0_i32 = arith.constant 0 : i32
    %c0_i32_0 = arith.constant 0 : i32
    %c0_i32_1 = arith.constant 0 : i32
    return %c0_i32, %c0_i32_0, %arg0 : i32, i32, i32
  }
  func.func @transform_3(%arg0: i32, %arg1: i32) -> (i32, i32, i32) {
    %c0_i32 = arith.constant 0 : i32
    %c0_i32_0 = arith.constant 0 : i32
    return %arg1, %c0_i32, %arg0 : i32, i32, i32
  }
  func.func @transform_4(%arg0: i32, %arg1: i32) -> (i32, i32) {
    %c0_i32 = arith.constant 0 : i32
    %c0_i32_0 = arith.constant 0 : i32
    return %c0_i32, %arg0 : i32, i32
  }
  func.func @transform_5(%arg0: i32, %arg1: i32) -> (i32, i32) {
    %c0_i32 = arith.constant 0 : i32
    %c0_i32_0 = arith.constant 0 : i32
    return %c0_i32, %arg0 : i32, i32
  }
}

</mosaic_0001>

<llo_original>
// kernel: tpu_custom_call.1
$region0: #{tpu_custom_call.1}
  #allocation0 [shape = 'u32[]', space=smem, size = 0x4, offset = 0x4, fixed_abs, tag = 'smem constant byte address 0x4 - core index']
  #allocation1 [shape = 'u32[72,128]{1,0:T(1,128)}', space=vmem, size = 0x9000, scoped, tag = 'internal scratch']
  #allocation2 [shape = 'f32[1,128]{1,0:T(1,128)}', space=vmem, size = 0x200, scoped, tag = 'scratch operand']
  #allocation3 [shape = 'f32[1,128]{1,0:T(1,128)}', space=vmem, size = 0x200, scoped, tag = 'scratch operand']
  %s0 = inlined_call_operand.vmem [shape: f32[1,304,1], index: 0, kind: input, shape index: {}]
  %s1 = inlined_call_operand.vmem [shape: bf16[2,361,8], index: 1, kind: input, shape index: {}]
  %s2 = inlined_call_operand.vmem [shape: bf16[9,8,128], index: 2, kind: input, shape index: {}]
  %s3 = inlined_call_operand.hbm [shape: bf16[2,304,128], index: 3, kind: output, shape index: {0}]
  %s4 = inlined_call_operand.hbm [shape: f32[1,128], index: 4, kind: output, shape index: {1}]
  %s5 = inlined_call_operand.hbm [shape: f32[1,128], index: 5, kind: output, shape index: {2}]
  %6 = xla_tuple %s3, %s4, %s5
  %s7 = sld [smem:[#allocation0]]
  $region69: #{tpu_custom_call.1} parent=0
    _
  %s9 = ssub.s32 1, %s7
  %s10 = scalar_select 0, %s9, %s7
  $region1: #{tpu_custom_call.1} parent=0
    #allocation4 [shape = 'u8[155648]{0}', space=vmem, size = 0x26000, scoped, tag = 'output window, operand 0']
    #allocation5 [shape = 's32[2]{0}', space=sflag, size = 0x8, scoped, tag = 'scoped memory for tpu_custom_call.1']
    #allocation6 [shape = 'u8[512]{0}', space=vmem, size = 0x400, scoped, tag = 'output window, operand 1, single buffered']
    #allocation7 [shape = 's32[1]{0}', space=sflag, size = 0x4, scoped, tag = 'scoped memory for tpu_custom_call.1']
    #allocation8 [shape = 'u8[512]{0}', space=vmem, size = 0x400, scoped, tag = 'output window, operand 2, single buffered']
    %11 = vsyncpa [#allocation5], 0
    %s12 = scalar_lea.sflag [#allocation5], 1
    %13 = vsyncpa %s12, 0
    %14 = vsyncpa [#allocation7], 0
    loop: start=0, step=1, limit=4
    $region2: #{tpu_custom_call.1} parent=1 // loop_pre_header
      _
    $region3: #{tpu_custom_call.1} parent=1 // loop_header
      %s16 = sphi 0, %s20
      %p17 = scmp.ge.s32.totalorder %s16, 4
      %s23 = sphi 0, %s35
      %s24 = sphi 0, %s31
      %s25 = sphi 0, %s23
      %s26 = sphi 0, %s24
      %s27 = sphi 0, %s25
      %s28 = sphi 0, %s26
      %s36 = sphi 0, %s36
      %s38 = sphi 0, %s36
      %s39 = sphi 0, %s38
      %s53 = sphi 0, %s39
      %s59 = sphi 0, %s61
      %s62 = sphi 0, %s59
      %s63 = sphi 0, %s62
      %s79 = sphi 0, %s63
      %s85 = sphi 0, %s87
      %s88 = sphi 0, %s85
      %s89 = sphi 0, %s88
      %s105 = sphi 0, %s89
      %s113 = sphi 0, %s115
      %s116 = sphi 0, %s113
      %s117 = sphi 0, %s116
      %s133 = sphi 0, %s117
      %s139 = sphi 0, %s141
      %s142 = sphi 0, %s139
      %s143 = sphi 0, %s142
      %s159 = sphi 0, %s143
      %s165 = sphi 0, %s167
      %s168 = sphi 0, %s165
      %s169 = sphi 0, %s168
      %s185 = sphi 0, %s169
    $region4: #{tpu_custom_call.1} parent=1 // loop_header_branch
      %19 = sbr.rel (%p17) target = $region8
    $region5: #{tpu_custom_call.1} parent=1 // loop_body
      %s21 = ssub.s32 %s16, 1
      %s22 = ssub.s32 %s16, 2
      %s29 = sadd.s32 1, %s24
      %p30 = scmp.ge.s32.totalorder %s29, 2
      %s31 = scalar_select %p30, 0, %s29
      %s32 = sadd.s32 1, %s23
      %s33 = scalar_select %p30, %s32, %s23
      %p34 = scmp.ge.s32.totalorder %s33, 1
      %s35 = scalar_select %p34, 0, %s33
      %s37 = sadd.s32 %s36, 1
      %p40 = scmp.eq.s32.totalorder %s16, 1
      %p41 = scmp.ne.s32.totalorder %s36, %s38
      %p42 = scmp.eq.s32.totalorder %s16, 0
      %p43 = por %p41, %p42
      %p44 = scmp.ne.s32.totalorder %s36, %s38
      %p45 = scmp.eq.s32.totalorder %s21, 1
      %p46 = por %p44, %p45
      %p47 = scmp.ne.s32.totalorder %s38, %s39
      %p48 = scmp.eq.s32.totalorder %s21, 0
      %p49 = por %p47, %p48
      %p50 = scmp.ne.s32.totalorder %s38, %s39
      %p51 = scmp.eq.s32.totalorder %s22, 1
      %p52 = por %p50, %p51
      %p54 = scmp.ne.s32.totalorder %s39, %s53
      %p55 = scmp.eq.s32.totalorder %s22, 0
      %p56 = por %p54, %p55
      %s57 = ssub.s32 %s24, %s31
      %p58 = scmp.eq.s32.totalorder %s57, 0
      %s60 = sadd.s32 %s59, 1
      %s61 = scalar_select %p58, %s59, %s60
      %p64 = pneg %p58
      %p65 = scmp.eq.s32.totalorder %s16, 1
      %p66 = por %p64, %p65
      %p67 = scmp.ne.s32.totalorder %s59, %s62
      %p68 = scmp.eq.s32.totalorder %s16, 0
      %p69 = por %p67, %p68
      %p70 = scmp.ne.s32.totalorder %s59, %s62
      %p71 = scmp.eq.s32.totalorder %s21, 1
      %p72 = por %p70, %p71
      %p73 = scmp.ne.s32.totalorder %s62, %s63
      %p74 = scmp.eq.s32.totalorder %s21, 0
      %p75 = por %p73, %p74
      %p76 = scmp.ne.s32.totalorder %s62, %s63
      %p77 = scmp.eq.s32.totalorder %s22, 1
      %p78 = por %p76, %p77
      %p80 = scmp.ne.s32.totalorder %s63, %s79
      %p81 = scmp.eq.s32.totalorder %s22, 0
      %p82 = por %p80, %p81
      %s83 = ssub.s32 %s23, %s35
      %p84 = scmp.eq.s32.totalorder %s83, 0
      %s86 = sadd.s32 %s85, 1
      %s87 = scalar_select %p84, %s85, %s86
      %p90 = pneg %p84
      %p91 = scmp.eq.s32.totalorder %s16, 1
      %p92 = por %p90, %p91
      %p93 = scmp.ne.s32.totalorder %s85, %s88
      %p94 = scmp.eq.s32.totalorder %s16, 0
      %p95 = por %p93, %p94
      %p96 = scmp.ne.s32.totalorder %s85, %s88
      %p97 = scmp.eq.s32.totalorder %s21, 1
      %p98 = por %p96, %p97
      %p99 = scmp.ne.s32.totalorder %s88, %s89
      %p100 = scmp.eq.s32.totalorder %s21, 0
      %p101 = por %p99, %p100
      %p102 = scmp.ne.s32.totalorder %s88, %s89
      %p103 = scmp.eq.s32.totalorder %s22, 1
      %p104 = por %p102, %p103
      %p106 = scmp.ne.s32.totalorder %s89, %s105
      %p107 = scmp.eq.s32.totalorder %s22, 0
      %p108 = por %p106, %p107
      %s109 = ssub.s32 %s24, %s31
      %s110 = ssub.s32 %s23, %s35
      %s111 = sor.u32 %s109, %s110
      %p112 = scmp.eq.s32.totalorder %s111, 0
      %s114 = sadd.s32 %s113, 1
      %s115 = scalar_select %p112, %s113, %s114
      %p118 = pneg %p112
      %p119 = scmp.eq.s32.totalorder %s16, 1
      %p120 = por %p118, %p119
      %p121 = scmp.ne.s32.totalorder %s113, %s116
      %p122 = scmp.eq.s32.totalorder %s16, 0
      %p123 = por %p121, %p122
      %p124 = scmp.ne.s32.totalorder %s113, %s116
      %p125 = scmp.eq.s32.totalorder %s21, 1
      %p126 = por %p124, %p125
      %p127 = scmp.ne.s32.totalorder %s116, %s117
      %p128 = scmp.eq.s32.totalorder %s21, 0
      %p129 = por %p127, %p128
      %p130 = scmp.ne.s32.totalorder %s116, %s117
      %p131 = scmp.eq.s32.totalorder %s22, 1
      %p132 = por %p130, %p131
      %p134 = scmp.ne.s32.totalorder %s117, %s133
      %p135 = scmp.eq.s32.totalorder %s22, 0
      %p136 = por %p134, %p135
      %s137 = ssub.s32 %s23, %s35
      %p138 = scmp.eq.s32.totalorder %s137, 0
      %s140 = sadd.s32 %s139, 1
      %s141 = scalar_select %p138, %s139, %s140
      %p144 = pneg %p138
      %p145 = scmp.eq.s32.totalorder %s16, 1
      %p146 = por %p144, %p145
      %p147 = scmp.ne.s32.totalorder %s139, %s142
      %p148 = scmp.eq.s32.totalorder %s16, 0
      %p149 = por %p147, %p148
      %p150 = scmp.ne.s32.totalorder %s139, %s142
      %p151 = scmp.eq.s32.totalorder %s21, 1
      %p152 = por %p150, %p151
      %p153 = scmp.ne.s32.totalorder %s142, %s143
      %p154 = scmp.eq.s32.totalorder %s21, 0
      %p155 = por %p153, %p154
      %p156 = scmp.ne.s32.totalorder %s142, %s143
      %p157 = scmp.eq.s32.totalorder %s22, 1
      %p158 = por %p156, %p157
      %p160 = scmp.ne.s32.totalorder %s143, %s159
      %p161 = scmp.eq.s32.totalorder %s22, 0
      %p162 = por %p160, %p161
      %s163 = ssub.s32 %s23, %s35
      %p164 = scmp.eq.s32.totalorder %s163, 0
      %s166 = sadd.s32 %s165, 1
      %s167 = scalar_select %p164, %s165, %s166
      %p170 = pneg %p164
      %p171 = scmp.eq.s32.totalorder %s16, 1
      %p172 = por %p170, %p171
      %p173 = scmp.ne.s32.totalorder %s165, %s168
      %p174 = scmp.eq.s32.totalorder %s16, 0
      %p175 = por %p173, %p174
      %p176 = scmp.ne.s32.totalorder %s165, %s168
      %p177 = scmp.eq.s32.totalorder %s21, 1
      %p178 = por %p176, %p177
      %p179 = scmp.ne.s32.totalorder %s168, %s169
      %p180 = scmp.eq.s32.totalorder %s21, 0
      %p181 = por %p179, %p180
      %p182 = scmp.ne.s32.totalorder %s168, %s169
      %p183 = scmp.eq.s32.totalorder %s22, 1
      %p184 = por %p182, %p183
      %p186 = scmp.ne.s32.totalorder %s169, %s185
      %p187 = scmp.eq.s32.totalorder %s22, 0
      %p188 = por %p186, %p187
      %p189 = scmp.le.s32.totalorder 1, %s16
      %p190 = scmp.lt.s32.totalorder %s16, 3
      %p191 = pnand %p189, %p190
      %p192 = pneg %p191
      // Predicated region
      $region9: #{tpu_custom_call.1} parent=5 // pred_check
        _
      $region10: #{tpu_custom_call.1} parent=5 // pred_check_branch
        %194 = sbr.rel (%p191) target = $region12
      $region11: #{tpu_custom_call.1} parent=5 // pred_region
        %s195 = ssub.s32 %s16, 1
        // Predicated region
        $region13: #{tpu_custom_call.1} parent=11 // pred_check
          %p196 = pneg %p49
        $region14: #{tpu_custom_call.1} parent=11 // pred_check_branch
          %198 = sbr.rel (%p196) target = $region16
        $region15: #{tpu_custom_call.1} parent=11 // pred_region
          _
        $region16: #{tpu_custom_call.1} parent=11 // pred_fallthru
          _
        // Predicated region
        $region17: #{tpu_custom_call.1} parent=11 // pred_check
          %p199 = pneg %p101
        $region18: #{tpu_custom_call.1} parent=11 // pred_check_branch
          %201 = sbr.rel (%p199) target = $region20
        $region19: #{tpu_custom_call.1} parent=11 // pred_region
          %p202 = scmp.lt.s32.totalorder %s25, 0
          %s203 = scalar_select %p202, %s25, 0
          %s204 = smul.addr %s203, 4
          %s205 = scalar_lea.vmem %s2, %s204
        $region20: #{tpu_custom_call.1} parent=11 // pred_fallthru
          _
      $region12: #{tpu_custom_call.1} parent=5 // pred_fallthru
        _
      %p206 = scmp.lt.s32.totalorder %s16, 2
      // Predicated region
      $region21: #{tpu_custom_call.1} parent=5 // pred_check
        %p207 = pneg %p206
      $region22: #{tpu_custom_call.1} parent=5 // pred_check_branch
        %209 = sbr.rel (%p207) target = $region24
      $region23: #{tpu_custom_call.1} parent=5 // pred_region
        // Predicated region
        $region25: #{tpu_custom_call.1} parent=23 // pred_check
          %p210 = pneg %p69
        $region26: #{tpu_custom_call.1} parent=23 // pred_check_branch
          %212 = sbr.rel (%p210) target = $region28
        $region27: #{tpu_custom_call.1} parent=23 // pred_region
          %p213 = scmp.lt.s32.totalorder %s24, 1
          %s214 = scalar_select %p213, %s24, 1
          %s215 = smul.addr %s214, 46
          %s216 = smul.addr %s215, 4
          %s217 = scalar_lea.vmem %s1, %s216
        $region28: #{tpu_custom_call.1} parent=23 // pred_fallthru
          _
      $region24: #{tpu_custom_call.1} parent=5 // pred_fallthru
        _
      %p218 = scmp.le.s32.totalorder 1, %s16
      %p219 = scmp.lt.s32.totalorder %s16, 3
      %p220 = pnand %p218, %p219
      %p221 = pneg %p220
      // Predicated region
      $region29: #{tpu_custom_call.1} parent=5 // pred_check
        _
      $region30: #{tpu_custom_call.1} parent=5 // pred_check_branch
        %223 = sbr.rel (%p220) target = $region32
      $region31: #{tpu_custom_call.1} parent=5 // pred_region
        %s224 = ssub.s32 %s16, 1
        %p225 = pneg %p49
        %p226 = pneg %p46
        %p227 = scmp.lt.s32.totalorder %s26, 1
        %s228 = scalar_select %p227, %s26, 1
        %s229 = smul.addr %s228, 46
        %s230 = smul.addr %s229, 4
        %s231 = scalar_lea.vmem %s1, %s230
        %p232 = pneg %p75
        %p233 = pneg %p72
        %p234 = scmp.lt.s32.totalorder %s25, 0
        %s235 = scalar_select %p234, %s25, 0
        %s236 = smul.addr %s235, 4
        %s237 = scalar_lea.vmem %s2, %s236
        %p238 = pneg %p101
        %p239 = pneg %p98
        %p240 = pneg %p129
        %p241 = pneg %p126
        %s242 = sand.u32 %s116, 1
        %s243 = scalar_lea.sflag [#allocation5], %s242
        %s244 = sand.u32 %s116, 1
        %s245 = smul.addr %s244, 152
        %s246 = scalar_lea.vmem [#allocation4], %s245
        %p247 = pneg %p155
        %p248 = pneg %p152
        %p249 = pneg %p181
        %p250 = pneg %p178
        %p251 = scmp.lt.s32.totalorder %s26, 1
        %s252 = scalar_select %p251, %s26, 1
        %s253 = smul.addr %s252, 46
        %s254 = smul.addr %s253, 4
        %s255 = scalar_lea.vmem %s1, %s254
        %p256 = scmp.lt.s32.totalorder %s25, 0
        %s257 = scalar_select %p256, %s25, 0
        %s258 = smul.addr %s257, 4
        %s259 = scalar_lea.vmem %s2, %s258
        %p261 = scmp.eq.s32.totalorder %s26, 0
        // Predicated region
        $region33: #{tpu_custom_call.1} parent=31 // pred_check
          %p262 = pneg %p261
        $region34: #{tpu_custom_call.1} parent=31 // pred_check_branch
          %264 = sbr.rel (%p262) target = $region36
        $region35: #{tpu_custom_call.1} parent=31 // pred_region
          %265 = vst [vmem:[#allocation2] sm:$0x1] 0.0
          %266 = vst [vmem:[#allocation3] sm:$0x1] 0.0
        $region36: #{tpu_custom_call.1} parent=31 // pred_fallthru
          _
        %v267 = vld [vmem:[%s255] sm:$0xf]
        %v268 = vld [vmem:[%s255 + $0x4] sm:$0xf]
        %v269 = vld [vmem:[%s255 + $0x8] sm:$0xf]
        %v270 = vld [vmem:[%s255 + $0xc] sm:$0xf]
        %v271 = vld [vmem:[%s255 + $0x10] sm:$0xf]
        %v272 = vld [vmem:[%s255 + $0x14] sm:$0xf]
        %v273 = vld [vmem:[%s255 + $0x18] sm:$0xf]
        %v274 = vld [vmem:[%s255 + $0x1c] sm:$0xf]
        %v275 = vld [vmem:[%s255 + $0x20] sm:$0xf]
        %v276 = vld [vmem:[%s255 + $0x24] sm:$0xf]
        %v277 = vld [vmem:[%s255 + $0x28] sm:$0xf]
        %v278 = vld [vmem:[%s255 + $0x2c] sm:$0xf]
        %v279 = vld [vmem:[%s255 + $0x30] sm:$0xf]
        %v280 = vld [vmem:[%s255 + $0x34] sm:$0xf]
        %v281 = vld [vmem:[%s255 + $0x38] sm:$0xf]
        %v282 = vld [vmem:[%s255 + $0x3c] sm:$0xf]
        %v283 = vld [vmem:[%s255 + $0x40] sm:$0xf]
        %v284 = vld [vmem:[%s255 + $0x44] sm:$0xf]
        %v285 = vld [vmem:[%s255 + $0x48] sm:$0xf]
        %v286 = vld [vmem:[%s255 + $0x4c] sm:$0xf]
        %v287 = vld [vmem:[%s255 + $0x50] sm:$0xf]
        %v288 = vld [vmem:[%s255 + $0x54] sm:$0xf]
        %v289 = vld [vmem:[%s255 + $0x58] sm:$0xf]
        %v290 = vld [vmem:[%s255 + $0x5c] sm:$0xf]
        %v291 = vld [vmem:[%s255 + $0x60] sm:$0xf]
        %v292 = vld [vmem:[%s255 + $0x64] sm:$0xf]
        %v293 = vld [vmem:[%s255 + $0x68] sm:$0xf]
        %v294 = vld [vmem:[%s255 + $0x6c] sm:$0xf]
        %v295 = vld [vmem:[%s255 + $0x70] sm:$0xf]
        %v296 = vld [vmem:[%s255 + $0x74] sm:$0xf]
        %v297 = vld [vmem:[%s255 + $0x78] sm:$0xf]
        %v298 = vld [vmem:[%s255 + $0x7c] sm:$0xf]
        %v299 = vld [vmem:[%s255 + $0x80] sm:$0xf]
        %v300 = vld [vmem:[%s255 + $0x84] sm:$0xf]
        %v301 = vld [vmem:[%s255 + $0x88] sm:$0xf]
        %v302 = vld [vmem:[%s255 + $0x8c] sm:$0xf]
        %v303 = vld [vmem:[%s255 + $0x90] sm:$0xf]
        %v304 = vld [vmem:[%s255 + $0x94] sm:$0xf]
        %v305 = vld [vmem:[%s259] sm:$0xf]
        %v306 = vld [vmem:[%s255 + $0x98] sm:$0x1]
        %s307 = scalar_lea.vmem %s259, 4
        %v308 = vld [vmem:[%s307] sm:$0xf]
        %v348 = vunpack.c.l.b16 %v267
        %v349 = vunpack.c.l.b16 %v268
        %v350 = vunpack.c.l.b16 %v269
        %v351 = vunpack.c.l.b16 %v270
        %v352 = vunpack.c.l.b16 %v271
        %v353 = vunpack.c.l.b16 %v272
        %v354 = vunpack.c.l.b16 %v273
        %v355 = vunpack.c.l.b16 %v274
        %v356 = vunpack.c.l.b16 %v275
        %v357 = vunpack.c.l.b16 %v276
        %v358 = vunpack.c.l.b16 %v277
        %v359 = vunpack.c.l.b16 %v278
        %v360 = vunpack.c.l.b16 %v279
        %v361 = vunpack.c.l.b16 %v280
        %v362 = vunpack.c.l.b16 %v281
        %v363 = vunpack.c.l.b16 %v282
        %v364 = vunpack.c.l.b16 %v283
        %v365 = vunpack.c.l.b16 %v284
        %v366 = vunpack.c.l.b16 %v285
        %v367 = vunpack.c.l.b16 %v286
        %v368 = vunpack.c.l.b16 %v287
        %v369 = vunpack.c.l.b16 %v288
        %v370 = vunpack.c.l.b16 %v289
        %v371 = vunpack.c.l.b16 %v290
        %v372 = vunpack.c.l.b16 %v291
        %v373 = vunpack.c.l.b16 %v292
        %v374 = vunpack.c.l.b16 %v293
        %v375 = vunpack.c.l.b16 %v294
        %v376 = vunpack.c.l.b16 %v295
        %v377 = vunpack.c.l.b16 %v296
        %v378 = vunpack.c.l.b16 %v297
        %v379 = vunpack.c.l.b16 %v298
        %v380 = vunpack.c.l.b16 %v299
        %v381 = vunpack.c.l.b16 %v300
        %v382 = vunpack.c.l.b16 %v301
        %v383 = vunpack.c.l.b16 %v302
        %v384 = vunpack.c.l.b16 %v303
        %v385 = vunpack.c.l.b16 %v304
        %v386 = vunpack.c.l.b16 %v306
        %v387 = vpack.c.b16 %v349, %v348
        %v388 = vpack.c.b16 %v351, %v350
        %v389 = vpack.c.b16 %v353, %v352
        %v390 = vpack.c.b16 %v355, %v354
        %v391 = vpack.c.b16 %v357, %v356
        %v392 = vpack.c.b16 %v359, %v358
        %v393 = vpack.c.b16 %v361, %v360
        %v394 = vpack.c.b16 %v363, %v362
        %v395 = vpack.c.b16 %v365, %v364
        %v396 = vpack.c.b16 %v367, %v366
        %v397 = vpack.c.b16 %v369, %v368
        %v398 = vpack.c.b16 %v371, %v370
        %v399 = vpack.c.b16 %v373, %v372
        %v400 = vpack.c.b16 %v375, %v374
        %v401 = vpack.c.b16 %v377, %v376
        %v402 = vpack.c.b16 %v379, %v378
        %v403 = vpack.c.b16 %v381, %v380
        %v404 = vpack.c.b16 %v383, %v382
        %v405 = vpack.c.b16 %v385, %v384
        %v406 = vpack.c.b16 %v386, %v386
        %vm407 = vsmask.f32 7424
        %v409 = vshrl.u32 %v387, 16
        %v411 = vshll.u32 %v387, 16
        %v413 = vrot.slane %v411, 1
        %v414 = vor.u32 %v409, %v413
        %v416 = vshll.u32 %v388, 16
        %v418 = vrot.slane %v416, 1
        %v419 = vsel %vm407, %v414, %v418
        %v420 = vshrl.u32 %v388, 16
        %v422 = vor.u32 %v420, %v418
        %v424 = vshll.u32 %v389, 16
        %v426 = vrot.slane %v424, 1
        %v427 = vsel %vm407, %v422, %v426
        %v428 = vshrl.u32 %v389, 16
        %v430 = vor.u32 %v428, %v426
        %v432 = vshll.u32 %v390, 16
        %v434 = vrot.slane %v432, 1
        %v435 = vsel %vm407, %v430, %v434
        %v436 = vshrl.u32 %v390, 16
        %v438 = vor.u32 %v436, %v434
        %v440 = vshll.u32 %v391, 16
        %v442 = vrot.slane %v440, 1
        %v443 = vsel %vm407, %v438, %v442
        %v444 = vshrl.u32 %v391, 16
        %v446 = vor.u32 %v444, %v442
        %v448 = vshll.u32 %v392, 16
        %v450 = vrot.slane %v448, 1
        %v451 = vsel %vm407, %v446, %v450
        %v452 = vshrl.u32 %v392, 16
        %v454 = vor.u32 %v452, %v450
        %v456 = vshll.u32 %v393, 16
        %v458 = vrot.slane %v456, 1
        %v459 = vsel %vm407, %v454, %v458
        %v460 = vshrl.u32 %v393, 16
        %v462 = vor.u32 %v460, %v458
        %v464 = vshll.u32 %v394, 16
        %v466 = vrot.slane %v464, 1
        %v467 = vsel %vm407, %v462, %v466
        %v468 = vshrl.u32 %v394, 16
        %v470 = vor.u32 %v468, %v466
        %v472 = vshll.u32 %v395, 16
        %v474 = vrot.slane %v472, 1
        %v475 = vsel %vm407, %v470, %v474
        %v476 = vshrl.u32 %v395, 16
        %v478 = vor.u32 %v476, %v474
        %v480 = vshll.u32 %v396, 16
        %v482 = vrot.slane %v480, 1
        %v483 = vsel %vm407, %v478, %v482
        %v484 = vshrl.u32 %v396, 16
        %v486 = vor.u32 %v484, %v482
        %v488 = vshll.u32 %v397, 16
        %v490 = vrot.slane %v488, 1
        %v491 = vsel %vm407, %v486, %v490
        %v492 = vshrl.u32 %v397, 16
        %v494 = vor.u32 %v492, %v490
        %v496 = vshll.u32 %v398, 16
        %v498 = vrot.slane %v496, 1
        %v499 = vsel %vm407, %v494, %v498
        %v500 = vshrl.u32 %v398, 16
        %v502 = vor.u32 %v500, %v498
        %v504 = vshll.u32 %v399, 16
        %v506 = vrot.slane %v504, 1
        %v507 = vsel %vm407, %v502, %v506
        %v508 = vshrl.u32 %v399, 16
        %v510 = vor.u32 %v508, %v506
        %v512 = vshll.u32 %v400, 16
        %v514 = vrot.slane %v512, 1
        %v515 = vsel %vm407, %v510, %v514
        %v516 = vshrl.u32 %v400, 16
        %v518 = vor.u32 %v516, %v514
        %v520 = vshll.u32 %v401, 16
        %v522 = vrot.slane %v520, 1
        %v523 = vsel %vm407, %v518, %v522
        %v524 = vshrl.u32 %v401, 16
        %v526 = vor.u32 %v524, %v522
        %v528 = vshll.u32 %v402, 16
        %v530 = vrot.slane %v528, 1
        %v531 = vsel %vm407, %v526, %v530
        %v532 = vshrl.u32 %v402, 16
        %v534 = vor.u32 %v532, %v530
        %v536 = vshll.u32 %v403, 16
        %v538 = vrot.slane %v536, 1
        %v539 = vsel %vm407, %v534, %v538
        %v540 = vshrl.u32 %v403, 16
        %v542 = vor.u32 %v540, %v538
        %v544 = vshll.u32 %v404, 16
        %v546 = vrot.slane %v544, 1
        %v547 = vsel %vm407, %v542, %v546
        %v548 = vshrl.u32 %v404, 16
        %v550 = vor.u32 %v548, %v546
        %v552 = vshll.u32 %v405, 16
        %v554 = vrot.slane %v552, 1
        %v555 = vsel %vm407, %v550, %v554
        %v556 = vshrl.u32 %v405, 16
        %v558 = vor.u32 %v556, %v554
        %v560 = vshll.u32 %v406, 16
        %v562 = vrot.slane %v560, 1
        %v563 = vsel %vm407, %v558, %v562
        %vm564 = vcmask 64512
        %v566 = vsel %vm564, %v419, 0
        %v569 = vsel %vm564, %v427, 0
        %v572 = vsel %vm564, %v435, 0
        %v575 = vsel %vm564, %v443, 0
        %v578 = vsel %vm564, %v451, 0
        %v581 = vsel %vm564, %v459, 0
        %v584 = vsel %vm564, %v467, 0
        %v587 = vsel %vm564, %v475, 0
        %v590 = vsel %vm564, %v483, 0
        %v593 = vsel %vm564, %v491, 0
        %v596 = vsel %vm564, %v499, 0
        %v599 = vsel %vm564, %v507, 0
        %v602 = vsel %vm564, %v515, 0
        %v605 = vsel %vm564, %v523, 0
        %v608 = vsel %vm564, %v531, 0
        %v611 = vsel %vm564, %v539, 0
        %v614 = vsel %vm564, %v547, 0
        %v617 = vsel %vm564, %v555, 0
        %v620 = vsel %vm564, %v563, 0
        %vm622 = vcmask 1043456
        %v624 = vsel %vm622, %v308, 0
        %626 = vmatpush.bf16.msra.mxu0 0
        %627 = vmatpush.bf16.msra.mxu0 0
        %628 = vmatpush.bf16.msra.mxu0 0
        %629 = vmatpush.bf16.msra.mxu0 0
        %630 = vmatpush.bf16.msra.mxu0 0
        %631 = vmatpush.bf16.msra.mxu0 0
        %632 = vmatpush.bf16.msra.mxu0 0
        %633 = vmatpush.bf16.msra.mxu0 %v624
        %634 = vmatmul.bf16.gmra.mxu0 %v566
        %v635 = vpop.f32.mrf.mxu0
        %v636 = vadd.f32 0.0, %v635
        %v637 = vpop.f32.mrf.mxu0
        %v638 = vadd.f32 0.0, %v637
        %639 = vmatmul.bf16.gmra.mxu0 %v569
        %v640 = vpop.f32.mrf.mxu0
        %v641 = vadd.f32 0.0, %v640
        %v642 = vpop.f32.mrf.mxu0
        %v643 = vadd.f32 0.0, %v642
        %644 = vmatmul.bf16.gmra.mxu0 %v572
        %v645 = vpop.f32.mrf.mxu0
        %v646 = vadd.f32 0.0, %v645
        %v647 = vpop.f32.mrf.mxu0
        %v648 = vadd.f32 0.0, %v647
        %649 = vmatmul.bf16.gmra.mxu0 %v575
        %v650 = vpop.f32.mrf.mxu0
        %v651 = vadd.f32 0.0, %v650
        %v652 = vpop.f32.mrf.mxu0
        %v653 = vadd.f32 0.0, %v652
        %654 = vmatmul.bf16.gmra.mxu0 %v578
        %v655 = vpop.f32.mrf.mxu0
        %v656 = vadd.f32 0.0, %v655
        %v657 = vpop.f32.mrf.mxu0
        %v658 = vadd.f32 0.0, %v657
        %659 = vmatmul.bf16.gmra.mxu0 %v581
        %v660 = vpop.f32.mrf.mxu0
        %v661 = vadd.f32 0.0, %v660
        %v662 = vpop.f32.mrf.mxu0
        %v663 = vadd.f32 0.0, %v662
        %664 = vmatmul.bf16.gmra.mxu0 %v584
        %v665 = vpop.f32.mrf.mxu0
        %v666 = vadd.f32 0.0, %v665
        %v667 = vpop.f32.mrf.mxu0
        %v668 = vadd.f32 0.0, %v667
        %669 = vmatmul.bf16.gmra.mxu0 %v587
        %v670 = vpop.f32.mrf.mxu0
        %v671 = vadd.f32 0.0, %v670
        %v672 = vpop.f32.mrf.mxu0
        %v673 = vadd.f32 0.0, %v672
        %674 = vmatmul.bf16.gmra.mxu0 %v590
        %v675 = vpop.f32.mrf.mxu0
        %v676 = vadd.f32 0.0, %v675
        %v677 = vpop.f32.mrf.mxu0
        %v678 = vadd.f32 0.0, %v677
        %679 = vmatmul.bf16.gmra.mxu0 %v593
        %v680 = vpop.f32.mrf.mxu0
        %v681 = vadd.f32 0.0, %v680
        %v682 = vpop.f32.mrf.mxu0
        %v683 = vadd.f32 0.0, %v682
        %684 = vmatmul.bf16.gmra.mxu0 %v596
        %v685 = vpop.f32.mrf.mxu0
        %v686 = vadd.f32 0.0, %v685
        %v687 = vpop.f32.mrf.mxu0
        %v688 = vadd.f32 0.0, %v687
        %689 = vmatmul.bf16.gmra.mxu0 %v599
        %v690 = vpop.f32.mrf.mxu0
        %v691 = vadd.f32 0.0, %v690
        %v692 = vpop.f32.mrf.mxu0
        %v693 = vadd.f32 0.0, %v692
        %694 = vmatmul.bf16.gmra.mxu0 %v602
        %v695 = vpop.f32.mrf.mxu0
        %v696 = vadd.f32 0.0, %v695
        %v697 = vpop.f32.mrf.mxu0
        %v698 = vadd.f32 0.0, %v697
        %699 = vmatmul.bf16.gmra.mxu0 %v605
        %v700 = vpop.f32.mrf.mxu0
        %v701 = vadd.f32 0.0, %v700
        %v702 = vpop.f32.mrf.mxu0
        %v703 = vadd.f32 0.0, %v702
        %704 = vmatmul.bf16.gmra.mxu0 %v608
        %v705 = vpop.f32.mrf.mxu0
        %v706 = vadd.f32 0.0, %v705
        %v707 = vpop.f32.mrf.mxu0
        %v708 = vadd.f32 0.0, %v707
        %709 = vmatmul.bf16.gmra.mxu0 %v611
        %v710 = vpop.f32.mrf.mxu0
        %v711 = vadd.f32 0.0, %v710
        %v712 = vpop.f32.mrf.mxu0
        %v713 = vadd.f32 0.0, %v712
        %714 = vmatmul.bf16.gmra.mxu0 %v614
        %v715 = vpop.f32.mrf.mxu0
        %v716 = vadd.f32 0.0, %v715
        %v717 = vpop.f32.mrf.mxu0
        %v718 = vadd.f32 0.0, %v717
        %719 = vmatmul.bf16.gmra.mxu0 %v617
        %v720 = vpop.f32.mrf.mxu0
        %v721 = vadd.f32 0.0, %v720
        %v722 = vpop.f32.mrf.mxu0
        %v723 = vadd.f32 0.0, %v722
        %724 = vmatmul.bf16.gmra.mxu0 %v620
        %v725 = vpop.f32.mrf.mxu0
        %v726 = vadd.f32 0.0, %v725
        %v727 = vpop.f32.mrf.mxu0
        %v728 = vadd.f32 0.0, %v727
        %729 = vdwg.mxu0
        %v730 = vsel %vm564, %v387, 0
        %v732 = vsel %vm564, %v388, 0
        %v734 = vsel %vm564, %v389, 0
        %v736 = vsel %vm564, %v390, 0
        %v738 = vsel %vm564, %v391, 0
        %v740 = vsel %vm564, %v392, 0
        %v742 = vsel %vm564, %v393, 0
        %v744 = vsel %vm564, %v394, 0
        %v746 = vsel %vm564, %v395, 0
        %v748 = vsel %vm564, %v396, 0
        %v750 = vsel %vm564, %v397, 0
        %v752 = vsel %vm564, %v398, 0
        %v754 = vsel %vm564, %v399, 0
        %v756 = vsel %vm564, %v400, 0
        %v758 = vsel %vm564, %v401, 0
        %v760 = vsel %vm564, %v402, 0
        %v762 = vsel %vm564, %v403, 0
        %v764 = vsel %vm564, %v404, 0
        %v766 = vsel %vm564, %v405, 0
        %v769 = vsel %vm622, %v305, 0
        %771 = vmatpush.bf16.msra.mxu0 0
        %772 = vmatpush.bf16.msra.mxu0 0
        %773 = vmatpush.bf16.msra.mxu0 0
        %774 = vmatpush.bf16.msra.mxu0 0
        %775 = vmatpush.bf16.msra.mxu0 0
        %776 = vmatpush.bf16.msra.mxu0 0
        %777 = vmatpush.bf16.msra.mxu0 0
        %778 = vmatpush.bf16.msra.mxu0 %v769
        %779 = vmatmul.bf16.gmra.mxu0 %v730
        %v780 = vpop.f32.mrf.mxu0
        %v781 = vadd.f32 %v636, %v780
        %v782 = vpop.f32.mrf.mxu0
        %v783 = vadd.f32 %v638, %v782
        %784 = vmatmul.bf16.gmra.mxu0 %v732
        %v785 = vpop.f32.mrf.mxu0
        %v786 = vadd.f32 %v641, %v785
        %v787 = vpop.f32.mrf.mxu0
        %v788 = vadd.f32 %v643, %v787
        %789 = vmatmul.bf16.gmra.mxu0 %v734
        %v790 = vpop.f32.mrf.mxu0
        %v791 = vadd.f32 %v646, %v790
        %v792 = vpop.f32.mrf.mxu0
        %v793 = vadd.f32 %v648, %v792
        %794 = vmatmul.bf16.gmra.mxu0 %v736
        %v795 = vpop.f32.mrf.mxu0
        %v796 = vadd.f32 %v651, %v795
        %v797 = vpop.f32.mrf.mxu0
        %v798 = vadd.f32 %v653, %v797
        %799 = vmatmul.bf16.gmra.mxu0 %v738
        %v800 = vpop.f32.mrf.mxu0
        %v801 = vadd.f32 %v656, %v800
        %v802 = vpop.f32.mrf.mxu0
        %v803 = vadd.f32 %v658, %v802
        %804 = vmatmul.bf16.gmra.mxu0 %v740
        %v805 = vpop.f32.mrf.mxu0
        %v806 = vadd.f32 %v661, %v805
        %v807 = vpop.f32.mrf.mxu0
        %v808 = vadd.f32 %v663, %v807
        %809 = vmatmul.bf16.gmra.mxu0 %v742
        %v810 = vpop.f32.mrf.mxu0
        %v811 = vadd.f32 %v666, %v810
        %v812 = vpop.f32.mrf.mxu0
        %v813 = vadd.f32 %v668, %v812
        %814 = vmatmul.bf16.gmra.mxu0 %v744
        %v815 = vpop.f32.mrf.mxu0
        %v816 = vadd.f32 %v671, %v815
        %v817 = vpop.f32.mrf.mxu0
        %v818 = vadd.f32 %v673, %v817
        %819 = vmatmul.bf16.gmra.mxu0 %v746
        %v820 = vpop.f32.mrf.mxu0
        %v821 = vadd.f32 %v676, %v820
        %v822 = vpop.f32.mrf.mxu0
        %v823 = vadd.f32 %v678, %v822
        %824 = vmatmul.bf16.gmra.mxu0 %v748
        %v825 = vpop.f32.mrf.mxu0
        %v826 = vadd.f32 %v681, %v825
        %v827 = vpop.f32.mrf.mxu0
        %v828 = vadd.f32 %v683, %v827
        %829 = vmatmul.bf16.gmra.mxu0 %v750
        %v830 = vpop.f32.mrf.mxu0
        %v831 = vadd.f32 %v686, %v830
        %v832 = vpop.f32.mrf.mxu0
        %v833 = vadd.f32 %v688, %v832
        %834 = vmatmul.bf16.gmra.mxu0 %v752
        %v835 = vpop.f32.mrf.mxu0
        %v836 = vadd.f32 %v691, %v835
        %v837 = vpop.f32.mrf.mxu0
        %v838 = vadd.f32 %v693, %v837
        %839 = vmatmul.bf16.gmra.mxu0 %v754
        %v840 = vpop.f32.mrf.mxu0
        %v841 = vadd.f32 %v696, %v840
        %v842 = vpop.f32.mrf.mxu0
        %v843 = vadd.f32 %v698, %v842
        %844 = vmatmul.bf16.gmra.mxu0 %v756
        %v845 = vpop.f32.mrf.mxu0
        %v846 = vadd.f32 %v701, %v845
        %v847 = vpop.f32.mrf.mxu0
        %v848 = vadd.f32 %v703, %v847
        %849 = vmatmul.bf16.gmra.mxu0 %v758
        %v850 = vpop.f32.mrf.mxu0
        %v851 = vadd.f32 %v706, %v850
        %v852 = vpop.f32.mrf.mxu0
        %v853 = vadd.f32 %v708, %v852
        %854 = vmatmul.bf16.gmra.mxu0 %v760
        %v855 = vpop.f32.mrf.mxu0
        %v856 = vadd.f32 %v711, %v855
        %v857 = vpop.f32.mrf.mxu0
        %v858 = vadd.f32 %v713, %v857
        %859 = vmatmul.bf16.gmra.mxu0 %v762
        %v860 = vpop.f32.mrf.mxu0
        %v861 = vadd.f32 %v716, %v860
        %v862 = vpop.f32.mrf.mxu0
        %v863 = vadd.f32 %v718, %v862
        %864 = vmatmul.bf16.gmra.mxu0 %v764
        %v865 = vpop.f32.mrf.mxu0
        %v866 = vadd.f32 %v721, %v865
        %v867 = vpop.f32.mrf.mxu0
        %v868 = vadd.f32 %v723, %v867
        %869 = vmatmul.bf16.gmra.mxu0 %v766
        %v870 = vpop.f32.mrf.mxu0
        %v871 = vadd.f32 %v726, %v870
        %v872 = vpop.f32.mrf.mxu0
        %v873 = vadd.f32 %v728, %v872
        %874 = vdwg.mxu0
        %v875 = vld [vmem:[%s255] sm:$0xe]
        %s876 = scalar_lea.vmem %s259, 8
        %v877 = vld [vmem:[%s876] sm:$0xf]
        %v879 = vunpack.c.l.b16 %v875
        %v880 = vpack.c.b16 %v349, %v879
        %vm881 = vcmask 1046528
        %v882 = vrot.slane %v880, 1
        %v883 = vrot.slane %v388, 1
        %v884 = vsel %vm881, %v882, %v883
        %v885 = vrot.slane %v389, 1
        %v886 = vsel %vm881, %v883, %v885
        %v887 = vrot.slane %v390, 1
        %v888 = vsel %vm881, %v885, %v887
        %v889 = vrot.slane %v391, 1
        %v890 = vsel %vm881, %v887, %v889
        %v891 = vrot.slane %v392, 1
        %v892 = vsel %vm881, %v889, %v891
        %v893 = vrot.slane %v393, 1
        %v894 = vsel %vm881, %v891, %v893
        %v895 = vrot.slane %v394, 1
        %v896 = vsel %vm881, %v893, %v895
        %v897 = vrot.slane %v395, 1
        %v898 = vsel %vm881, %v895, %v897
        %v899 = vrot.slane %v396, 1
        %v900 = vsel %vm881, %v897, %v899
        %v901 = vrot.slane %v397, 1
        %v902 = vsel %vm881, %v899, %v901
        %v903 = vrot.slane %v398, 1
        %v904 = vsel %vm881, %v901, %v903
        %v905 = vrot.slane %v399, 1
        %v906 = vsel %vm881, %v903, %v905
        %v907 = vrot.slane %v400, 1
        %v908 = vsel %vm881, %v905, %v907
        %v909 = vrot.slane %v401, 1
        %v910 = vsel %vm881, %v907, %v909
        %v911 = vrot.slane %v402, 1
        %v912 = vsel %vm881, %v909, %v911
        %v913 = vrot.slane %v403, 1
        %v914 = vsel %vm881, %v911, %v913
        %v915 = vrot.slane %v404, 1
        %v916 = vsel %vm881, %v913, %v915
        %v917 = vrot.slane %v405, 1
        %v918 = vsel %vm881, %v915, %v917
        %v919 = vrot.slane %v406, 1
        %v920 = vsel %vm881, %v917, %v919
        %v922 = vsel %vm564, %v884, 0
        %v925 = vsel %vm564, %v886, 0
        %v928 = vsel %vm564, %v888, 0
        %v931 = vsel %vm564, %v890, 0
        %v934 = vsel %vm564, %v892, 0
        %v937 = vsel %vm564, %v894, 0
        %v940 = vsel %vm564, %v896, 0
        %v943 = vsel %vm564, %v898, 0
        %v946 = vsel %vm564, %v900, 0
        %v949 = vsel %vm564, %v902, 0
        %v952 = vsel %vm564, %v904, 0
        %v955 = vsel %vm564, %v906, 0
        %v958 = vsel %vm564, %v908, 0
        %v961 = vsel %vm564, %v910, 0
        %v964 = vsel %vm564, %v912, 0
        %v967 = vsel %vm564, %v914, 0
        %v970 = vsel %vm564, %v916, 0
        %v973 = vsel %vm564, %v918, 0
        %v976 = vsel %vm564, %v920, 0
        %v979 = vsel %vm622, %v877, 0
        %981 = vmatpush.bf16.msra.mxu0 0
        %982 = vmatpush.bf16.msra.mxu0 0
        %983 = vmatpush.bf16.msra.mxu0 0
        %984 = vmatpush.bf16.msra.mxu0 0
        %985 = vmatpush.bf16.msra.mxu0 0
        %986 = vmatpush.bf16.msra.mxu0 0
        %987 = vmatpush.bf16.msra.mxu0 0
        %988 = vmatpush.bf16.msra.mxu0 %v979
        %989 = vmatmul.bf16.gmra.mxu0 %v922
        %v990 = vpop.f32.mrf.mxu0
        %v991 = vadd.f32 0.0, %v990
        %v992 = vpop.f32.mrf.mxu0
        %v993 = vadd.f32 0.0, %v992
        %994 = vmatmul.bf16.gmra.mxu0 %v925
        %v995 = vpop.f32.mrf.mxu0
        %v996 = vadd.f32 0.0, %v995
        %v997 = vpop.f32.mrf.mxu0
        %v998 = vadd.f32 0.0, %v997
        %999 = vmatmul.bf16.gmra.mxu0 %v928
        %v1000 = vpop.f32.mrf.mxu0
        %v1001 = vadd.f32 0.0, %v1000
        %v1002 = vpop.f32.mrf.mxu0
        %v1003 = vadd.f32 0.0, %v1002
        %1004 = vmatmul.bf16.gmra.mxu0 %v931
        %v1005 = vpop.f32.mrf.mxu0
        %v1006 = vadd.f32 0.0, %v1005
        %v1007 = vpop.f32.mrf.mxu0
        %v1008 = vadd.f32 0.0, %v1007
        %1009 = vmatmul.bf16.gmra.mxu0 %v934
        %v1010 = vpop.f32.mrf.mxu0
        %v1011 = vadd.f32 0.0, %v1010
        %v1012 = vpop.f32.mrf.mxu0
        %v1013 = vadd.f32 0.0, %v1012
        %1014 = vmatmul.bf16.gmra.mxu0 %v937
        %v1015 = vpop.f32.mrf.mxu0
        %v1016 = vadd.f32 0.0, %v1015
        %v1017 = vpop.f32.mrf.mxu0
        %v1018 = vadd.f32 0.0, %v1017
        %1019 = vmatmul.bf16.gmra.mxu0 %v940
        %v1020 = vpop.f32.mrf.mxu0
        %v1021 = vadd.f32 0.0, %v1020
        %v1022 = vpop.f32.mrf.mxu0
        %v1023 = vadd.f32 0.0, %v1022
        %1024 = vmatmul.bf16.gmra.mxu0 %v943
        %v1025 = vpop.f32.mrf.mxu0
        %v1026 = vadd.f32 0.0, %v1025
        %v1027 = vpop.f32.mrf.mxu0
        %v1028 = vadd.f32 0.0, %v1027
        %1029 = vmatmul.bf16.gmra.mxu0 %v946
        %v1030 = vpop.f32.mrf.mxu0
        %v1031 = vadd.f32 0.0, %v1030
        %v1032 = vpop.f32.mrf.mxu0
        %v1033 = vadd.f32 0.0, %v1032
        %1034 = vmatmul.bf16.gmra.mxu0 %v949
        %v1035 = vpop.f32.mrf.mxu0
        %v1036 = vadd.f32 0.0, %v1035
        %v1037 = vpop.f32.mrf.mxu0
        %v1038 = vadd.f32 0.0, %v1037
        %1039 = vmatmul.bf16.gmra.mxu0 %v952
        %v1040 = vpop.f32.mrf.mxu0
        %v1041 = vadd.f32 0.0, %v1040
        %v1042 = vpop.f32.mrf.mxu0
        %v1043 = vadd.f32 0.0, %v1042
        %1044 = vmatmul.bf16.gmra.mxu0 %v955
        %v1045 = vpop.f32.mrf.mxu0
        %v1046 = vadd.f32 0.0, %v1045
        %v1047 = vpop.f32.mrf.mxu0
        %v1048 = vadd.f32 0.0, %v1047
        %1049 = vmatmul.bf16.gmra.mxu0 %v958
        %v1050 = vpop.f32.mrf.mxu0
        %v1051 = vadd.f32 0.0, %v1050
        %v1052 = vpop.f32.mrf.mxu0
        %v1053 = vadd.f32 0.0, %v1052
        %1054 = vmatmul.bf16.gmra.mxu0 %v961
        %v1055 = vpop.f32.mrf.mxu0
        %v1056 = vadd.f32 0.0, %v1055
        %v1057 = vpop.f32.mrf.mxu0
        %v1058 = vadd.f32 0.0, %v1057
        %1059 = vmatmul.bf16.gmra.mxu0 %v964
        %v1060 = vpop.f32.mrf.mxu0
        %v1061 = vadd.f32 0.0, %v1060
        %v1062 = vpop.f32.mrf.mxu0
        %v1063 = vadd.f32 0.0, %v1062
        %1064 = vmatmul.bf16.gmra.mxu0 %v967
        %v1065 = vpop.f32.mrf.mxu0
        %v1066 = vadd.f32 0.0, %v1065
        %v1067 = vpop.f32.mrf.mxu0
        %v1068 = vadd.f32 0.0, %v1067
        %1069 = vmatmul.bf16.gmra.mxu0 %v970
        %v1070 = vpop.f32.mrf.mxu0
        %v1071 = vadd.f32 0.0, %v1070
        %v1072 = vpop.f32.mrf.mxu0
        %v1073 = vadd.f32 0.0, %v1072
        %1074 = vmatmul.bf16.gmra.mxu0 %v973
        %v1075 = vpop.f32.mrf.mxu0
        %v1076 = vadd.f32 0.0, %v1075
        %v1077 = vpop.f32.mrf.mxu0
        %v1078 = vadd.f32 0.0, %v1077
        %1079 = vmatmul.bf16.gmra.mxu0 %v976
        %v1080 = vpop.f32.mrf.mxu0
        %v1081 = vadd.f32 0.0, %v1080
        %v1082 = vpop.f32.mrf.mxu0
        %v1083 = vadd.f32 0.0, %v1082
        %1084 = vdwg.mxu0
        %v1085 = vadd.f32 %v781, %v991
        %v1086 = vadd.f32 %v783, %v993
        %v1087 = vadd.f32 %v786, %v996
        %v1088 = vadd.f32 %v788, %v998
        %v1089 = vadd.f32 %v791, %v1001
        %v1090 = vadd.f32 %v793, %v1003
        %v1091 = vadd.f32 %v796, %v1006
        %v1092 = vadd.f32 %v798, %v1008
        %v1093 = vadd.f32 %v801, %v1011
        %v1094 = vadd.f32 %v803, %v1013
        %v1095 = vadd.f32 %v806, %v1016
        %v1096 = vadd.f32 %v808, %v1018
        %v1097 = vadd.f32 %v811, %v1021
        %v1098 = vadd.f32 %v813, %v1023
        %v1099 = vadd.f32 %v816, %v1026
        %v1100 = vadd.f32 %v818, %v1028
        %v1101 = vadd.f32 %v821, %v1031
        %v1102 = vadd.f32 %v823, %v1033
        %v1103 = vadd.f32 %v826, %v1036
        %v1104 = vadd.f32 %v828, %v1038
        %v1105 = vadd.f32 %v831, %v1041
        %v1106 = vadd.f32 %v833, %v1043
        %v1107 = vadd.f32 %v836, %v1046
        %v1108 = vadd.f32 %v838, %v1048
        %v1109 = vadd.f32 %v841, %v1051
        %v1110 = vadd.f32 %v843, %v1053
        %v1111 = vadd.f32 %v846, %v1056
        %v1112 = vadd.f32 %v848, %v1058
        %v1113 = vadd.f32 %v851, %v1061
        %v1114 = vadd.f32 %v853, %v1063
        %v1115 = vadd.f32 %v856, %v1066
        %v1116 = vadd.f32 %v858, %v1068
        %v1117 = vadd.f32 %v861, %v1071
        %v1118 = vadd.f32 %v863, %v1073
        %v1119 = vadd.f32 %v866, %v1076
        %v1120 = vadd.f32 %v868, %v1078
        %v1121 = vadd.f32 %v871, %v1081
        %v1122 = vadd.f32 %v873, %v1083
        %v1123 = vld [vmem:[%s255 + $0x8] sm:$0xe]
        %v1124 = vld [vmem:[%s255 + $0xc] sm:$0xf]
        %v1125 = vld [vmem:[%s255 + $0x10] sm:$0xf]
        %v1126 = vld [vmem:[%s255 + $0x14] sm:$0xf]
        %v1127 = vld [vmem:[%s255 + $0x18] sm:$0xf]
        %v1128 = vld [vmem:[%s255 + $0x1c] sm:$0xf]
        %v1129 = vld [vmem:[%s255 + $0x20] sm:$0xf]
        %v1130 = vld [vmem:[%s255 + $0x24] sm:$0xf]
        %v1131 = vld [vmem:[%s255 + $0x28] sm:$0xf]
        %v1132 = vld [vmem:[%s255 + $0x2c] sm:$0xf]
        %v1133 = vld [vmem:[%s255 + $0x30] sm:$0xf]
        %v1134 = vld [vmem:[%s255 + $0x34] sm:$0xf]
        %v1135 = vld [vmem:[%s255 + $0x38] sm:$0xf]
        %v1136 = vld [vmem:[%s255 + $0x3c] sm:$0xf]
        %v1137 = vld [vmem:[%s255 + $0x40] sm:$0xf]
        %v1138 = vld [vmem:[%s255 + $0x44] sm:$0xf]
        %v1139 = vld [vmem:[%s255 + $0x48] sm:$0xf]
        %v1140 = vld [vmem:[%s255 + $0x4c] sm:$0xf]
        %v1141 = vld [vmem:[%s255 + $0x50] sm:$0xf]
        %v1142 = vld [vmem:[%s255 + $0x54] sm:$0xf]
        %v1143 = vld [vmem:[%s255 + $0x58] sm:$0xf]
        %v1144 = vld [vmem:[%s255 + $0x5c] sm:$0xf]
        %v1145 = vld [vmem:[%s255 + $0x60] sm:$0xf]
        %v1146 = vld [vmem:[%s255 + $0x64] sm:$0xf]
        %v1147 = vld [vmem:[%s255 + $0x68] sm:$0xf]
        %v1148 = vld [vmem:[%s255 + $0x6c] sm:$0xf]
        %v1149 = vld [vmem:[%s255 + $0x70] sm:$0xf]
        %v1150 = vld [vmem:[%s255 + $0x74] sm:$0xf]
        %v1151 = vld [vmem:[%s255 + $0x78] sm:$0xf]
        %v1152 = vld [vmem:[%s255 + $0x7c] sm:$0xf]
        %v1153 = vld [vmem:[%s255 + $0x80] sm:$0xf]
        %v1154 = vld [vmem:[%s255 + $0x84] sm:$0xf]
        %v1155 = vld [vmem:[%s255 + $0x88] sm:$0xf]
        %v1156 = vld [vmem:[%s255 + $0x8c] sm:$0xf]
        %v1157 = vld [vmem:[%s255 + $0x90] sm:$0xf]
        %v1158 = vld [vmem:[%s255 + $0x94] sm:$0xf]
        %v1159 = vld [vmem:[%s255 + $0x98] sm:$0xf]
        %v1160 = vld [vmem:[%s255 + $0x9c] sm:$0xf]
        %v1161 = vld [vmem:[%s255 + $0xa0] sm:$0x3]
        %s1162 = scalar_lea.vmem %s259, 12
        %v1163 = vld [vmem:[%s1162] sm:$0xf]
        %v1203 = vunpack.c.l.b16 %v1123
        %v1204 = vunpack.c.l.b16 %v1124
        %v1205 = vunpack.c.l.b16 %v1125
        %v1206 = vunpack.c.l.b16 %v1126
        %v1207 = vunpack.c.l.b16 %v1127
        %v1208 = vunpack.c.l.b16 %v1128
        %v1209 = vunpack.c.l.b16 %v1129
        %v1210 = vunpack.c.l.b16 %v1130
        %v1211 = vunpack.c.l.b16 %v1131
        %v1212 = vunpack.c.l.b16 %v1132
        %v1213 = vunpack.c.l.b16 %v1133
        %v1214 = vunpack.c.l.b16 %v1134
        %v1215 = vunpack.c.l.b16 %v1135
        %v1216 = vunpack.c.l.b16 %v1136
        %v1217 = vunpack.c.l.b16 %v1137
        %v1218 = vunpack.c.l.b16 %v1138
        %v1219 = vunpack.c.l.b16 %v1139
        %v1220 = vunpack.c.l.b16 %v1140
        %v1221 = vunpack.c.l.b16 %v1141
        %v1222 = vunpack.c.l.b16 %v1142
        %v1223 = vunpack.c.l.b16 %v1143
        %v1224 = vunpack.c.l.b16 %v1144
        %v1225 = vunpack.c.l.b16 %v1145
        %v1226 = vunpack.c.l.b16 %v1146
        %v1227 = vunpack.c.l.b16 %v1147
        %v1228 = vunpack.c.l.b16 %v1148
        %v1229 = vunpack.c.l.b16 %v1149
        %v1230 = vunpack.c.l.b16 %v1150
        %v1231 = vunpack.c.l.b16 %v1151
        %v1232 = vunpack.c.l.b16 %v1152
        %v1233 = vunpack.c.l.b16 %v1153
        %v1234 = vunpack.c.l.b16 %v1154
        %v1235 = vunpack.c.l.b16 %v1155
        %v1236 = vunpack.c.l.b16 %v1156
        %v1237 = vunpack.c.l.b16 %v1157
        %v1238 = vunpack.c.l.b16 %v1158
        %v1239 = vunpack.c.l.b16 %v1159
        %v1240 = vunpack.c.l.b16 %v1160
        %v1241 = vunpack.c.l.b16 %v1161
        %v1242 = vpack.c.b16 %v1204, %v1203
        %v1243 = vpack.c.b16 %v1206, %v1205
        %v1244 = vpack.c.b16 %v1208, %v1207
        %v1245 = vpack.c.b16 %v1210, %v1209
        %v1246 = vpack.c.b16 %v1212, %v1211
        %v1247 = vpack.c.b16 %v1214, %v1213
        %v1248 = vpack.c.b16 %v1216, %v1215
        %v1249 = vpack.c.b16 %v1218, %v1217
        %v1250 = vpack.c.b16 %v1220, %v1219
        %v1251 = vpack.c.b16 %v1222, %v1221
        %v1252 = vpack.c.b16 %v1224, %v1223
        %v1253 = vpack.c.b16 %v1226, %v1225
        %v1254 = vpack.c.b16 %v1228, %v1227
        %v1255 = vpack.c.b16 %v1230, %v1229
        %v1256 = vpack.c.b16 %v1232, %v1231
        %v1257 = vpack.c.b16 %v1234, %v1233
        %v1258 = vpack.c.b16 %v1236, %v1235
        %v1259 = vpack.c.b16 %v1238, %v1237
        %v1260 = vpack.c.b16 %v1240, %v1239
        %v1261 = vpack.c.b16 %v1241, %v1241
        %vm1262 = vsmask.f32 6400
        %v1264 = vshrl.u32 %v1242, 16
        %v1266 = vrot.slane %v1264, 1
        %v1267 = vshll.u32 %v1242, 16
        %v1269 = vrot.slane %v1267, 2
        %v1270 = vor.u32 %v1266, %v1269
        %v1272 = vshrl.u32 %v1243, 16
        %v1274 = vrot.slane %v1272, 1
        %v1275 = vshll.u32 %v1243, 16
        %v1277 = vrot.slane %v1275, 2
        %v1278 = vor.u32 %v1274, %v1277
        %v1279 = vsel %vm1262, %v1270, %v1278
        %v1281 = vshrl.u32 %v1244, 16
        %v1283 = vrot.slane %v1281, 1
        %v1284 = vshll.u32 %v1244, 16
        %v1286 = vrot.slane %v1284, 2
        %v1287 = vor.u32 %v1283, %v1286
        %v1288 = vsel %vm1262, %v1278, %v1287
        %v1290 = vshrl.u32 %v1245, 16
        %v1292 = vrot.slane %v1290, 1
        %v1293 = vshll.u32 %v1245, 16
        %v1295 = vrot.slane %v1293, 2
        %v1296 = vor.u32 %v1292, %v1295
        %v1297 = vsel %vm1262, %v1287, %v1296
        %v1299 = vshrl.u32 %v1246, 16
        %v1301 = vrot.slane %v1299, 1
        %v1302 = vshll.u32 %v1246, 16
        %v1304 = vrot.slane %v1302, 2
        %v1305 = vor.u32 %v1301, %v1304
        %v1306 = vsel %vm1262, %v1296, %v1305
        %v1308 = vshrl.u32 %v1247, 16
        %v1310 = vrot.slane %v1308, 1
        %v1311 = vshll.u32 %v1247, 16
        %v1313 = vrot.slane %v1311, 2
        %v1314 = vor.u32 %v1310, %v1313
        %v1315 = vsel %vm1262, %v1305, %v1314
        %v1317 = vshrl.u32 %v1248, 16
        %v1319 = vrot.slane %v1317, 1
        %v1320 = vshll.u32 %v1248, 16
        %v1322 = vrot.slane %v1320, 2
        %v1323 = vor.u32 %v1319, %v1322
        %v1324 = vsel %vm1262, %v1314, %v1323
        %v1326 = vshrl.u32 %v1249, 16
        %v1328 = vrot.slane %v1326, 1
        %v1329 = vshll.u32 %v1249, 16
        %v1331 = vrot.slane %v1329, 2
        %v1332 = vor.u32 %v1328, %v1331
        %v1333 = vsel %vm1262, %v1323, %v1332
        %v1335 = vshrl.u32 %v1250, 16
        %v1337 = vrot.slane %v1335, 1
        %v1338 = vshll.u32 %v1250, 16
        %v1340 = vrot.slane %v1338, 2
        %v1341 = vor.u32 %v1337, %v1340
        %v1342 = vsel %vm1262, %v1332, %v1341
        %v1344 = vshrl.u32 %v1251, 16
        %v1346 = vrot.slane %v1344, 1
        %v1347 = vshll.u32 %v1251, 16
        %v1349 = vrot.slane %v1347, 2
        %v1350 = vor.u32 %v1346, %v1349
        %v1351 = vsel %vm1262, %v1341, %v1350
        %v1353 = vshrl.u32 %v1252, 16
        %v1355 = vrot.slane %v1353, 1
        %v1356 = vshll.u32 %v1252, 16
        %v1358 = vrot.slane %v1356, 2
        %v1359 = vor.u32 %v1355, %v1358
        %v1360 = vsel %vm1262, %v1350, %v1359
        %v1362 = vshrl.u32 %v1253, 16
        %v1364 = vrot.slane %v1362, 1
        %v1365 = vshll.u32 %v1253, 16
        %v1367 = vrot.slane %v1365, 2
        %v1368 = vor.u32 %v1364, %v1367
        %v1369 = vsel %vm1262, %v1359, %v1368
        %v1371 = vshrl.u32 %v1254, 16
        %v1373 = vrot.slane %v1371, 1
        %v1374 = vshll.u32 %v1254, 16
        %v1376 = vrot.slane %v1374, 2
        %v1377 = vor.u32 %v1373, %v1376
        %v1378 = vsel %vm1262, %v1368, %v1377
        %v1380 = vshrl.u32 %v1255, 16
        %v1382 = vrot.slane %v1380, 1
        %v1383 = vshll.u32 %v1255, 16
        %v1385 = vrot.slane %v1383, 2
        %v1386 = vor.u32 %v1382, %v1385
        %v1387 = vsel %vm1262, %v1377, %v1386
        %v1389 = vshrl.u32 %v1256, 16
        %v1391 = vrot.slane %v1389, 1
        %v1392 = vshll.u32 %v1256, 16
        %v1394 = vrot.slane %v1392, 2
        %v1395 = vor.u32 %v1391, %v1394
        %v1396 = vsel %vm1262, %v1386, %v1395
        %v1398 = vshrl.u32 %v1257, 16
        %v1400 = vrot.slane %v1398, 1
        %v1401 = vshll.u32 %v1257, 16
        %v1403 = vrot.slane %v1401, 2
        %v1404 = vor.u32 %v1400, %v1403
        %v1405 = vsel %vm1262, %v1395, %v1404
        %v1407 = vshrl.u32 %v1258, 16
        %v1409 = vrot.slane %v1407, 1
        %v1410 = vshll.u32 %v1258, 16
        %v1412 = vrot.slane %v1410, 2
        %v1413 = vor.u32 %v1409, %v1412
        %v1414 = vsel %vm1262, %v1404, %v1413
        %v1416 = vshrl.u32 %v1259, 16
        %v1418 = vrot.slane %v1416, 1
        %v1419 = vshll.u32 %v1259, 16
        %v1421 = vrot.slane %v1419, 2
        %v1422 = vor.u32 %v1418, %v1421
        %v1423 = vsel %vm1262, %v1413, %v1422
        %v1425 = vshrl.u32 %v1260, 16
        %v1427 = vrot.slane %v1425, 1
        %v1428 = vshll.u32 %v1260, 16
        %v1430 = vrot.slane %v1428, 2
        %v1431 = vor.u32 %v1427, %v1430
        %v1432 = vsel %vm1262, %v1422, %v1431
        %v1434 = vshrl.u32 %v1261, 16
        %v1436 = vrot.slane %v1434, 1
        %v1437 = vshll.u32 %v1261, 16
        %v1439 = vrot.slane %v1437, 2
        %v1440 = vor.u32 %v1436, %v1439
        %v1441 = vsel %vm1262, %v1431, %v1440
        %v1443 = vsel %vm564, %v1279, 0
        %v1446 = vsel %vm564, %v1288, 0
        %v1449 = vsel %vm564, %v1297, 0
        %v1452 = vsel %vm564, %v1306, 0
        %v1455 = vsel %vm564, %v1315, 0
        %v1458 = vsel %vm564, %v1324, 0
        %v1461 = vsel %vm564, %v1333, 0
        %v1464 = vsel %vm564, %v1342, 0
        %v1467 = vsel %vm564, %v1351, 0
        %v1470 = vsel %vm564, %v1360, 0
        %v1473 = vsel %vm564, %v1369, 0
        %v1476 = vsel %vm564, %v1378, 0
        %v1479 = vsel %vm564, %v1387, 0
        %v1482 = vsel %vm564, %v1396, 0
        %v1485 = vsel %vm564, %v1405, 0
        %v1488 = vsel %vm564, %v1414, 0
        %v1491 = vsel %vm564, %v1423, 0
        %v1494 = vsel %vm564, %v1432, 0
        %v1497 = vsel %vm564, %v1441, 0
        %v1500 = vsel %vm622, %v1163, 0
        %1502 = vmatpush.bf16.msra.mxu0 0
        %1503 = vmatpush.bf16.msra.mxu0 0
        %1504 = vmatpush.bf16.msra.mxu0 0
        %1505 = vmatpush.bf16.msra.mxu0 0
        %1506 = vmatpush.bf16.msra.mxu0 0
        %1507 = vmatpush.bf16.msra.mxu0 0
        %1508 = vmatpush.bf16.msra.mxu0 0
        %1509 = vmatpush.bf16.msra.mxu0 %v1500
        %1510 = vmatmul.bf16.gmra.mxu0 %v1443
        %v1511 = vpop.f32.mrf.mxu0
        %v1512 = vadd.f32 0.0, %v1511
        %v1513 = vpop.f32.mrf.mxu0
        %v1514 = vadd.f32 0.0, %v1513
        %1515 = vmatmul.bf16.gmra.mxu0 %v1446
        %v1516 = vpop.f32.mrf.mxu0
        %v1517 = vadd.f32 0.0, %v1516
        %v1518 = vpop.f32.mrf.mxu0
        %v1519 = vadd.f32 0.0, %v1518
        %1520 = vmatmul.bf16.gmra.mxu0 %v1449
        %v1521 = vpop.f32.mrf.mxu0
        %v1522 = vadd.f32 0.0, %v1521
        %v1523 = vpop.f32.mrf.mxu0
        %v1524 = vadd.f32 0.0, %v1523
        %1525 = vmatmul.bf16.gmra.mxu0 %v1452
        %v1526 = vpop.f32.mrf.mxu0
        %v1527 = vadd.f32 0.0, %v1526
        %v1528 = vpop.f32.mrf.mxu0
        %v1529 = vadd.f32 0.0, %v1528
        %1530 = vmatmul.bf16.gmra.mxu0 %v1455
        %v1531 = vpop.f32.mrf.mxu0
        %v1532 = vadd.f32 0.0, %v1531
        %v1533 = vpop.f32.mrf.mxu0
        %v1534 = vadd.f32 0.0, %v1533
        %1535 = vmatmul.bf16.gmra.mxu0 %v1458
        %v1536 = vpop.f32.mrf.mxu0
        %v1537 = vadd.f32 0.0, %v1536
        %v1538 = vpop.f32.mrf.mxu0
        %v1539 = vadd.f32 0.0, %v1538
        %1540 = vmatmul.bf16.gmra.mxu0 %v1461
        %v1541 = vpop.f32.mrf.mxu0
        %v1542 = vadd.f32 0.0, %v1541
        %v1543 = vpop.f32.mrf.mxu0
        %v1544 = vadd.f32 0.0, %v1543
        %1545 = vmatmul.bf16.gmra.mxu0 %v1464
        %v1546 = vpop.f32.mrf.mxu0
        %v1547 = vadd.f32 0.0, %v1546
        %v1548 = vpop.f32.mrf.mxu0
        %v1549 = vadd.f32 0.0, %v1548
        %1550 = vmatmul.bf16.gmra.mxu0 %v1467
        %v1551 = vpop.f32.mrf.mxu0
        %v1552 = vadd.f32 0.0, %v1551
        %v1553 = vpop.f32.mrf.mxu0
        %v1554 = vadd.f32 0.0, %v1553
        %1555 = vmatmul.bf16.gmra.mxu0 %v1470
        %v1556 = vpop.f32.mrf.mxu0
        %v1557 = vadd.f32 0.0, %v1556
        %v1558 = vpop.f32.mrf.mxu0
        %v1559 = vadd.f32 0.0, %v1558
        %1560 = vmatmul.bf16.gmra.mxu0 %v1473
        %v1561 = vpop.f32.mrf.mxu0
        %v1562 = vadd.f32 0.0, %v1561
        %v1563 = vpop.f32.mrf.mxu0
        %v1564 = vadd.f32 0.0, %v1563
        %1565 = vmatmul.bf16.gmra.mxu0 %v1476
        %v1566 = vpop.f32.mrf.mxu0
        %v1567 = vadd.f32 0.0, %v1566
        %v1568 = vpop.f32.mrf.mxu0
        %v1569 = vadd.f32 0.0, %v1568
        %1570 = vmatmul.bf16.gmra.mxu0 %v1479
        %v1571 = vpop.f32.mrf.mxu0
        %v1572 = vadd.f32 0.0, %v1571
        %v1573 = vpop.f32.mrf.mxu0
        %v1574 = vadd.f32 0.0, %v1573
        %1575 = vmatmul.bf16.gmra.mxu0 %v1482
        %v1576 = vpop.f32.mrf.mxu0
        %v1577 = vadd.f32 0.0, %v1576
        %v1578 = vpop.f32.mrf.mxu0
        %v1579 = vadd.f32 0.0, %v1578
        %1580 = vmatmul.bf16.gmra.mxu0 %v1485
        %v1581 = vpop.f32.mrf.mxu0
        %v1582 = vadd.f32 0.0, %v1581
        %v1583 = vpop.f32.mrf.mxu0
        %v1584 = vadd.f32 0.0, %v1583
        %1585 = vmatmul.bf16.gmra.mxu0 %v1488
        %v1586 = vpop.f32.mrf.mxu0
        %v1587 = vadd.f32 0.0, %v1586
        %v1588 = vpop.f32.mrf.mxu0
        %v1589 = vadd.f32 0.0, %v1588
        %1590 = vmatmul.bf16.gmra.mxu0 %v1491
        %v1591 = vpop.f32.mrf.mxu0
        %v1592 = vadd.f32 0.0, %v1591
        %v1593 = vpop.f32.mrf.mxu0
        %v1594 = vadd.f32 0.0, %v1593
        %1595 = vmatmul.bf16.gmra.mxu0 %v1494
        %v1596 = vpop.f32.mrf.mxu0
        %v1597 = vadd.f32 0.0, %v1596
        %v1598 = vpop.f32.mrf.mxu0
        %v1599 = vadd.f32 0.0, %v1598
        %1600 = vmatmul.bf16.gmra.mxu0 %v1497
        %v1601 = vpop.f32.mrf.mxu0
        %v1602 = vadd.f32 0.0, %v1601
        %v1603 = vpop.f32.mrf.mxu0
        %v1604 = vadd.f32 0.0, %v1603
        %1605 = vdwg.mxu0
        %v1606 = vadd.f32 %v1085, %v1512
        %v1607 = vadd.f32 %v1086, %v1514
        %v1608 = vadd.f32 %v1087, %v1517
        %v1609 = vadd.f32 %v1088, %v1519
        %v1610 = vadd.f32 %v1089, %v1522
        %v1611 = vadd.f32 %v1090, %v1524
        %v1612 = vadd.f32 %v1091, %v1527
        %v1613 = vadd.f32 %v1092, %v1529
        %v1614 = vadd.f32 %v1093, %v1532
        %v1615 = vadd.f32 %v1094, %v1534
        %v1616 = vadd.f32 %v1095, %v1537
        %v1617 = vadd.f32 %v1096, %v1539
        %v1618 = vadd.f32 %v1097, %v1542
        %v1619 = vadd.f32 %v1098, %v1544
        %v1620 = vadd.f32 %v1099, %v1547
        %v1621 = vadd.f32 %v1100, %v1549
        %v1622 = vadd.f32 %v1101, %v1552
        %v1623 = vadd.f32 %v1102, %v1554
        %v1624 = vadd.f32 %v1103, %v1557
        %v1625 = vadd.f32 %v1104, %v1559
        %v1626 = vadd.f32 %v1105, %v1562
        %v1627 = vadd.f32 %v1106, %v1564
        %v1628 = vadd.f32 %v1107, %v1567
        %v1629 = vadd.f32 %v1108, %v1569
        %v1630 = vadd.f32 %v1109, %v1572
        %v1631 = vadd.f32 %v1110, %v1574
        %v1632 = vadd.f32 %v1111, %v1577
        %v1633 = vadd.f32 %v1112, %v1579
        %v1634 = vadd.f32 %v1113, %v1582
        %v1635 = vadd.f32 %v1114, %v1584
        %v1636 = vadd.f32 %v1115, %v1587
        %v1637 = vadd.f32 %v1116, %v1589
        %v1638 = vadd.f32 %v1117, %v1592
        %v1639 = vadd.f32 %v1118, %v1594
        %v1640 = vadd.f32 %v1119, %v1597
        %v1641 = vadd.f32 %v1120, %v1599
        %v1642 = vadd.f32 %v1121, %v1602
        %v1643 = vadd.f32 %v1122, %v1604
        %v1644 = vld [vmem:[%s255 + $0x8] sm:$0xc]
        %s1645 = scalar_lea.vmem %s259, 16
        %v1646 = vld [vmem:[%s1645] sm:$0xf]
        %v1648 = vunpack.c.l.b16 %v1644
        %v1649 = vpack.c.b16 %v1204, %v1648
        %vm1650 = vcmask 1045504
        %v1651 = vrot.slane %v1649, 2
        %v1652 = vrot.slane %v1243, 2
        %v1653 = vsel %vm1650, %v1651, %v1652
        %v1654 = vrot.slane %v1244, 2
        %v1655 = vsel %vm1650, %v1652, %v1654
        %v1656 = vrot.slane %v1245, 2
        %v1657 = vsel %vm1650, %v1654, %v1656
        %v1658 = vrot.slane %v1246, 2
        %v1659 = vsel %vm1650, %v1656, %v1658
        %v1660 = vrot.slane %v1247, 2
        %v1661 = vsel %vm1650, %v1658, %v1660
        %v1662 = vrot.slane %v1248, 2
        %v1663 = vsel %vm1650, %v1660, %v1662
        %v1664 = vrot.slane %v1249, 2
        %v1665 = vsel %vm1650, %v1662, %v1664
        %v1666 = vrot.slane %v1250, 2
        %v1667 = vsel %vm1650, %v1664, %v1666
        %v1668 = vrot.slane %v1251, 2
        %v1669 = vsel %vm1650, %v1666, %v1668
        %v1670 = vrot.slane %v1252, 2
        %v1671 = vsel %vm1650, %v1668, %v1670
        %v1672 = vrot.slane %v1253, 2
        %v1673 = vsel %vm1650, %v1670, %v1672
        %v1674 = vrot.slane %v1254, 2
        %v1675 = vsel %vm1650, %v1672, %v1674
        %v1676 = vrot.slane %v1255, 2
        %v1677 = vsel %vm1650, %v1674, %v1676
        %v1678 = vrot.slane %v1256, 2
        %v1679 = vsel %vm1650, %v1676, %v1678
        %v1680 = vrot.slane %v1257, 2
        %v1681 = vsel %vm1650, %v1678, %v1680
        %v1682 = vrot.slane %v1258, 2
        %v1683 = vsel %vm1650, %v1680, %v1682
        %v1684 = vrot.slane %v1259, 2
        %v1685 = vsel %vm1650, %v1682, %v1684
        %v1686 = vrot.slane %v1260, 2
        %v1687 = vsel %vm1650, %v1684, %v1686
        %v1688 = vrot.slane %v1261, 2
        %v1689 = vsel %vm1650, %v1686, %v1688
        %v1691 = vsel %vm564, %v1653, 0
        %v1694 = vsel %vm564, %v1655, 0
        %v1697 = vsel %vm564, %v1657, 0
        %v1700 = vsel %vm564, %v1659, 0
        %v1703 = vsel %vm564, %v1661, 0
        %v1706 = vsel %vm564, %v1663, 0
        %v1709 = vsel %vm564, %v1665, 0
        %v1712 = vsel %vm564, %v1667, 0
        %v1715 = vsel %vm564, %v1669, 0
        %v1718 = vsel %vm564, %v1671, 0
        %v1721 = vsel %vm564, %v1673, 0
        %v1724 = vsel %vm564, %v1675, 0
        %v1727 = vsel %vm564, %v1677, 0
        %v1730 = vsel %vm564, %v1679, 0
        %v1733 = vsel %vm564, %v1681, 0
        %v1736 = vsel %vm564, %v1683, 0
        %v1739 = vsel %vm564, %v1685, 0
        %v1742 = vsel %vm564, %v1687, 0
        %v1745 = vsel %vm564, %v1689, 0
        %v1748 = vsel %vm622, %v1646, 0
        %1750 = vmatpush.bf16.msra.mxu0 0
        %1751 = vmatpush.bf16.msra.mxu0 0
        %1752 = vmatpush.bf16.msra.mxu0 0
        %1753 = vmatpush.bf16.msra.mxu0 0
        %1754 = vmatpush.bf16.msra.mxu0 0
        %1755 = vmatpush.bf16.msra.mxu0 0
        %1756 = vmatpush.bf16.msra.mxu0 0
        %1757 = vmatpush.bf16.msra.mxu0 %v1748
        %1758 = vmatmul.bf16.gmra.mxu0 %v1691
        %v1759 = vpop.f32.mrf.mxu0
        %v1760 = vadd.f32 0.0, %v1759
        %v1761 = vpop.f32.mrf.mxu0
        %v1762 = vadd.f32 0.0, %v1761
        %1763 = vmatmul.bf16.gmra.mxu0 %v1694
        %v1764 = vpop.f32.mrf.mxu0
        %v1765 = vadd.f32 0.0, %v1764
        %v1766 = vpop.f32.mrf.mxu0
        %v1767 = vadd.f32 0.0, %v1766
        %1768 = vmatmul.bf16.gmra.mxu0 %v1697
        %v1769 = vpop.f32.mrf.mxu0
        %v1770 = vadd.f32 0.0, %v1769
        %v1771 = vpop.f32.mrf.mxu0
        %v1772 = vadd.f32 0.0, %v1771
        %1773 = vmatmul.bf16.gmra.mxu0 %v1700
        %v1774 = vpop.f32.mrf.mxu0
        %v1775 = vadd.f32 0.0, %v1774
        %v1776 = vpop.f32.mrf.mxu0
        %v1777 = vadd.f32 0.0, %v1776
        %1778 = vmatmul.bf16.gmra.mxu0 %v1703
        %v1779 = vpop.f32.mrf.mxu0
        %v1780 = vadd.f32 0.0, %v1779
        %v1781 = vpop.f32.mrf.mxu0
        %v1782 = vadd.f32 0.0, %v1781
        %1783 = vmatmul.bf16.gmra.mxu0 %v1706
        %v1784 = vpop.f32.mrf.mxu0
        %v1785 = vadd.f32 0.0, %v1784
        %v1786 = vpop.f32.mrf.mxu0
        %v1787 = vadd.f32 0.0, %v1786
        %1788 = vmatmul.bf16.gmra.mxu0 %v1709
        %v1789 = vpop.f32.mrf.mxu0
        %v1790 = vadd.f32 0.0, %v1789
        %v1791 = vpop.f32.mrf.mxu0
        %v1792 = vadd.f32 0.0, %v1791
        %1793 = vmatmul.bf16.gmra.mxu0 %v1712
        %v1794 = vpop.f32.mrf.mxu0
        %v1795 = vadd.f32 0.0, %v1794
        %v1796 = vpop.f32.mrf.mxu0
        %v1797 = vadd.f32 0.0, %v1796
        %1798 = vmatmul.bf16.gmra.mxu0 %v1715
        %v1799 = vpop.f32.mrf.mxu0
        %v1800 = vadd.f32 0.0, %v1799
        %v1801 = vpop.f32.mrf.mxu0
        %v1802 = vadd.f32 0.0, %v1801
        %1803 = vmatmul.bf16.gmra.mxu0 %v1718
        %v1804 = vpop.f32.mrf.mxu0
        %v1805 = vadd.f32 0.0, %v1804
        %v1806 = vpop.f32.mrf.mxu0
        %v1807 = vadd.f32 0.0, %v1806
        %1808 = vmatmul.bf16.gmra.mxu0 %v1721
        %v1809 = vpop.f32.mrf.mxu0
        %v1810 = vadd.f32 0.0, %v1809
        %v1811 = vpop.f32.mrf.mxu0
        %v1812 = vadd.f32 0.0, %v1811
        %1813 = vmatmul.bf16.gmra.mxu0 %v1724
        %v1814 = vpop.f32.mrf.mxu0
        %v1815 = vadd.f32 0.0, %v1814
        %v1816 = vpop.f32.mrf.mxu0
        %v1817 = vadd.f32 0.0, %v1816
        %1818 = vmatmul.bf16.gmra.mxu0 %v1727
        %v1819 = vpop.f32.mrf.mxu0
        %v1820 = vadd.f32 0.0, %v1819
        %v1821 = vpop.f32.mrf.mxu0
        %v1822 = vadd.f32 0.0, %v1821
        %1823 = vmatmul.bf16.gmra.mxu0 %v1730
        %v1824 = vpop.f32.mrf.mxu0
        %v1825 = vadd.f32 0.0, %v1824
        %v1826 = vpop.f32.mrf.mxu0
        %v1827 = vadd.f32 0.0, %v1826
        %1828 = vmatmul.bf16.gmra.mxu0 %v1733
        %v1829 = vpop.f32.mrf.mxu0
        %v1830 = vadd.f32 0.0, %v1829
        %v1831 = vpop.f32.mrf.mxu0
        %v1832 = vadd.f32 0.0, %v1831
        %1833 = vmatmul.bf16.gmra.mxu0 %v1736
        %v1834 = vpop.f32.mrf.mxu0
        %v1835 = vadd.f32 0.0, %v1834
        %v1836 = vpop.f32.mrf.mxu0
        %v1837 = vadd.f32 0.0, %v1836
        %1838 = vmatmul.bf16.gmra.mxu0 %v1739
        %v1839 = vpop.f32.mrf.mxu0
        %v1840 = vadd.f32 0.0, %v1839
        %v1841 = vpop.f32.mrf.mxu0
        %v1842 = vadd.f32 0.0, %v1841
        %1843 = vmatmul.bf16.gmra.mxu0 %v1742
        %v1844 = vpop.f32.mrf.mxu0
        %v1845 = vadd.f32 0.0, %v1844
        %v1846 = vpop.f32.mrf.mxu0
        %v1847 = vadd.f32 0.0, %v1846
        %1848 = vmatmul.bf16.gmra.mxu0 %v1745
        %v1849 = vpop.f32.mrf.mxu0
        %v1850 = vadd.f32 0.0, %v1849
        %v1851 = vpop.f32.mrf.mxu0
        %v1852 = vadd.f32 0.0, %v1851
        %1853 = vdwg.mxu0
        %v1854 = vadd.f32 %v1606, %v1760
        %v1855 = vadd.f32 %v1607, %v1762
        %v1856 = vadd.f32 %v1608, %v1765
        %v1857 = vadd.f32 %v1609, %v1767
        %v1858 = vadd.f32 %v1610, %v1770
        %v1859 = vadd.f32 %v1611, %v1772
        %v1860 = vadd.f32 %v1612, %v1775
        %v1861 = vadd.f32 %v1613, %v1777
        %v1862 = vadd.f32 %v1614, %v1780
        %v1863 = vadd.f32 %v1615, %v1782
        %v1864 = vadd.f32 %v1616, %v1785
        %v1865 = vadd.f32 %v1617, %v1787
        %v1866 = vadd.f32 %v1618, %v1790
        %v1867 = vadd.f32 %v1619, %v1792
        %v1868 = vadd.f32 %v1620, %v1795
        %v1869 = vadd.f32 %v1621, %v1797
        %v1870 = vadd.f32 %v1622, %v1800
        %v1871 = vadd.f32 %v1623, %v1802
        %v1872 = vadd.f32 %v1624, %v1805
        %v1873 = vadd.f32 %v1625, %v1807
        %v1874 = vadd.f32 %v1626, %v1810
        %v1875 = vadd.f32 %v1627, %v1812
        %v1876 = vadd.f32 %v1628, %v1815
        %v1877 = vadd.f32 %v1629, %v1817
        %v1878 = vadd.f32 %v1630, %v1820
        %v1879 = vadd.f32 %v1631, %v1822
        %v1880 = vadd.f32 %v1632, %v1825
        %v1881 = vadd.f32 %v1633, %v1827
        %v1882 = vadd.f32 %v1634, %v1830
        %v1883 = vadd.f32 %v1635, %v1832
        %v1884 = vadd.f32 %v1636, %v1835
        %v1885 = vadd.f32 %v1637, %v1837
        %v1886 = vadd.f32 %v1638, %v1840
        %v1887 = vadd.f32 %v1639, %v1842
        %v1888 = vadd.f32 %v1640, %v1845
        %v1889 = vadd.f32 %v1641, %v1847
        %v1890 = vadd.f32 %v1642, %v1850
        %v1891 = vadd.f32 %v1643, %v1852
        %v1892 = vld [vmem:[%s255 + $0xa0] sm:$0x7]
        %s1893 = scalar_lea.vmem %s259, 20
        %v1894 = vld [vmem:[%s1893] sm:$0xf]
        %v1896 = vunpack.c.l.b16 %v1892
        %v1897 = vpack.c.b16 %v1896, %v1896
        %vm1898 = vsmask.f32 5376
        %v1900 = vshrl.u32 %v1649, 16
        %v1902 = vrot.slane %v1900, 2
        %v1903 = vshll.u32 %v1649, 16
        %v1905 = vrot.slane %v1903, 3
        %v1906 = vor.u32 %v1902, %v1905
        %v1907 = vrot.slane %v1272, 2
        %v1908 = vrot.slane %v1275, 3
        %v1909 = vor.u32 %v1907, %v1908
        %v1910 = vsel %vm1898, %v1906, %v1909
        %v1911 = vrot.slane %v1281, 2
        %v1912 = vrot.slane %v1284, 3
        %v1913 = vor.u32 %v1911, %v1912
        %v1914 = vsel %vm1898, %v1909, %v1913
        %v1915 = vrot.slane %v1290, 2
        %v1916 = vrot.slane %v1293, 3
        %v1917 = vor.u32 %v1915, %v1916
        %v1918 = vsel %vm1898, %v1913, %v1917
        %v1919 = vrot.slane %v1299, 2
        %v1920 = vrot.slane %v1302, 3
        %v1921 = vor.u32 %v1919, %v1920
        %v1922 = vsel %vm1898, %v1917, %v1921
        %v1923 = vrot.slane %v1308, 2
        %v1924 = vrot.slane %v1311, 3
        %v1925 = vor.u32 %v1923, %v1924
        %v1926 = vsel %vm1898, %v1921, %v1925
        %v1927 = vrot.slane %v1317, 2
        %v1928 = vrot.slane %v1320, 3
        %v1929 = vor.u32 %v1927, %v1928
        %v1930 = vsel %vm1898, %v1925, %v1929
        %v1931 = vrot.slane %v1326, 2
        %v1932 = vrot.slane %v1329, 3
        %v1933 = vor.u32 %v1931, %v1932
        %v1934 = vsel %vm1898, %v1929, %v1933
        %v1935 = vrot.slane %v1335, 2
        %v1936 = vrot.slane %v1338, 3
        %v1937 = vor.u32 %v1935, %v1936
        %v1938 = vsel %vm1898, %v1933, %v1937
        %v1939 = vrot.slane %v1344, 2
        %v1940 = vrot.slane %v1347, 3
        %v1941 = vor.u32 %v1939, %v1940
        %v1942 = vsel %vm1898, %v1937, %v1941
        %v1943 = vrot.slane %v1353, 2
        %v1944 = vrot.slane %v1356, 3
        %v1945 = vor.u32 %v1943, %v1944
        %v1946 = vsel %vm1898, %v1941, %v1945
        %v1947 = vrot.slane %v1362, 2
        %v1948 = vrot.slane %v1365, 3
        %v1949 = vor.u32 %v1947, %v1948
        %v1950 = vsel %vm1898, %v1945, %v1949
        %v1951 = vrot.slane %v1371, 2
        %v1952 = vrot.slane %v1374, 3
        %v1953 = vor.u32 %v1951, %v1952
        %v1954 = vsel %vm1898, %v1949, %v1953
        %v1955 = vrot.slane %v1380, 2
        %v1956 = vrot.slane %v1383, 3
        %v1957 = vor.u32 %v1955, %v1956
        %v1958 = vsel %vm1898, %v1953, %v1957
        %v1959 = vrot.slane %v1389, 2
        %v1960 = vrot.slane %v1392, 3
        %v1961 = vor.u32 %v1959, %v1960
        %v1962 = vsel %vm1898, %v1957, %v1961
        %v1963 = vrot.slane %v1398, 2
        %v1964 = vrot.slane %v1401, 3
        %v1965 = vor.u32 %v1963, %v1964
        %v1966 = vsel %vm1898, %v1961, %v1965
        %v1967 = vrot.slane %v1407, 2
        %v1968 = vrot.slane %v1410, 3
        %v1969 = vor.u32 %v1967, %v1968
        %v1970 = vsel %vm1898, %v1965, %v1969
        %v1971 = vrot.slane %v1416, 2
        %v1972 = vrot.slane %v1419, 3
        %v1973 = vor.u32 %v1971, %v1972
        %v1974 = vsel %vm1898, %v1969, %v1973
        %v1975 = vrot.slane %v1425, 2
        %v1976 = vrot.slane %v1428, 3
        %v1977 = vor.u32 %v1975, %v1976
        %v1978 = vsel %vm1898, %v1973, %v1977
        %v1980 = vshrl.u32 %v1897, 16
        %v1982 = vrot.slane %v1980, 2
        %v1983 = vshll.u32 %v1897, 16
        %v1985 = vrot.slane %v1983, 3
        %v1986 = vor.u32 %v1982, %v1985
        %v1987 = vsel %vm1898, %v1977, %v1986
        %v1989 = vsel %vm564, %v1910, 0
        %v1992 = vsel %vm564, %v1914, 0
        %v1995 = vsel %vm564, %v1918, 0
        %v1998 = vsel %vm564, %v1922, 0
        %v2001 = vsel %vm564, %v1926, 0
        %v2004 = vsel %vm564, %v1930, 0
        %v2007 = vsel %vm564, %v1934, 0
        %v2010 = vsel %vm564, %v1938, 0
        %v2013 = vsel %vm564, %v1942, 0
        %v2016 = vsel %vm564, %v1946, 0
        %v2019 = vsel %vm564, %v1950, 0
        %v2022 = vsel %vm564, %v1954, 0
        %v2025 = vsel %vm564, %v1958, 0
        %v2028 = vsel %vm564, %v1962, 0
        %v2031 = vsel %vm564, %v1966, 0
        %v2034 = vsel %vm564, %v1970, 0
        %v2037 = vsel %vm564, %v1974, 0
        %v2040 = vsel %vm564, %v1978, 0
        %v2043 = vsel %vm564, %v1987, 0
        %v2046 = vsel %vm622, %v1894, 0
        %2048 = vmatpush.bf16.msra.mxu0 0
        %2049 = vmatpush.bf16.msra.mxu0 0
        %2050 = vmatpush.bf16.msra.mxu0 0
        %2051 = vmatpush.bf16.msra.mxu0 0
        %2052 = vmatpush.bf16.msra.mxu0 0
        %2053 = vmatpush.bf16.msra.mxu0 0
        %2054 = vmatpush.bf16.msra.mxu0 0
        %2055 = vmatpush.bf16.msra.mxu0 %v2046
        %2056 = vmatmul.bf16.gmra.mxu0 %v1989
        %v2057 = vpop.f32.mrf.mxu0
        %v2058 = vadd.f32 0.0, %v2057
        %v2059 = vpop.f32.mrf.mxu0
        %v2060 = vadd.f32 0.0, %v2059
        %2061 = vmatmul.bf16.gmra.mxu0 %v1992
        %v2062 = vpop.f32.mrf.mxu0
        %v2063 = vadd.f32 0.0, %v2062
        %v2064 = vpop.f32.mrf.mxu0
        %v2065 = vadd.f32 0.0, %v2064
        %2066 = vmatmul.bf16.gmra.mxu0 %v1995
        %v2067 = vpop.f32.mrf.mxu0
        %v2068 = vadd.f32 0.0, %v2067
        %v2069 = vpop.f32.mrf.mxu0
        %v2070 = vadd.f32 0.0, %v2069
        %2071 = vmatmul.bf16.gmra.mxu0 %v1998
        %v2072 = vpop.f32.mrf.mxu0
        %v2073 = vadd.f32 0.0, %v2072
        %v2074 = vpop.f32.mrf.mxu0
        %v2075 = vadd.f32 0.0, %v2074
        %2076 = vmatmul.bf16.gmra.mxu0 %v2001
        %v2077 = vpop.f32.mrf.mxu0
        %v2078 = vadd.f32 0.0, %v2077
        %v2079 = vpop.f32.mrf.mxu0
        %v2080 = vadd.f32 0.0, %v2079
        %2081 = vmatmul.bf16.gmra.mxu0 %v2004
        %v2082 = vpop.f32.mrf.mxu0
        %v2083 = vadd.f32 0.0, %v2082
        %v2084 = vpop.f32.mrf.mxu0
        %v2085 = vadd.f32 0.0, %v2084
        %2086 = vmatmul.bf16.gmra.mxu0 %v2007
        %v2087 = vpop.f32.mrf.mxu0
        %v2088 = vadd.f32 0.0, %v2087
        %v2089 = vpop.f32.mrf.mxu0
        %v2090 = vadd.f32 0.0, %v2089
        %2091 = vmatmul.bf16.gmra.mxu0 %v2010
        %v2092 = vpop.f32.mrf.mxu0
        %v2093 = vadd.f32 0.0, %v2092
        %v2094 = vpop.f32.mrf.mxu0
        %v2095 = vadd.f32 0.0, %v2094
        %2096 = vmatmul.bf16.gmra.mxu0 %v2013
        %v2097 = vpop.f32.mrf.mxu0
        %v2098 = vadd.f32 0.0, %v2097
        %v2099 = vpop.f32.mrf.mxu0
        %v2100 = vadd.f32 0.0, %v2099
        %2101 = vmatmul.bf16.gmra.mxu0 %v2016
        %v2102 = vpop.f32.mrf.mxu0
        %v2103 = vadd.f32 0.0, %v2102
        %v2104 = vpop.f32.mrf.mxu0
        %v2105 = vadd.f32 0.0, %v2104
        %2106 = vmatmul.bf16.gmra.mxu0 %v2019
        %v2107 = vpop.f32.mrf.mxu0
        %v2108 = vadd.f32 0.0, %v2107
        %v2109 = vpop.f32.mrf.mxu0
        %v2110 = vadd.f32 0.0, %v2109
        %2111 = vmatmul.bf16.gmra.mxu0 %v2022
        %v2112 = vpop.f32.mrf.mxu0
        %v2113 = vadd.f32 0.0, %v2112
        %v2114 = vpop.f32.mrf.mxu0
        %v2115 = vadd.f32 0.0, %v2114
        %2116 = vmatmul.bf16.gmra.mxu0 %v2025
        %v2117 = vpop.f32.mrf.mxu0
        %v2118 = vadd.f32 0.0, %v2117
        %v2119 = vpop.f32.mrf.mxu0
        %v2120 = vadd.f32 0.0, %v2119
        %2121 = vmatmul.bf16.gmra.mxu0 %v2028
        %v2122 = vpop.f32.mrf.mxu0
        %v2123 = vadd.f32 0.0, %v2122
        %v2124 = vpop.f32.mrf.mxu0
        %v2125 = vadd.f32 0.0, %v2124
        %2126 = vmatmul.bf16.gmra.mxu0 %v2031
        %v2127 = vpop.f32.mrf.mxu0
        %v2128 = vadd.f32 0.0, %v2127
        %v2129 = vpop.f32.mrf.mxu0
        %v2130 = vadd.f32 0.0, %v2129
        %2131 = vmatmul.bf16.gmra.mxu0 %v2034
        %v2132 = vpop.f32.mrf.mxu0
        %v2133 = vadd.f32 0.0, %v2132
        %v2134 = vpop.f32.mrf.mxu0
        %v2135 = vadd.f32 0.0, %v2134
        %2136 = vmatmul.bf16.gmra.mxu0 %v2037
        %v2137 = vpop.f32.mrf.mxu0
        %v2138 = vadd.f32 0.0, %v2137
        %v2139 = vpop.f32.mrf.mxu0
        %v2140 = vadd.f32 0.0, %v2139
        %2141 = vmatmul.bf16.gmra.mxu0 %v2040
        %v2142 = vpop.f32.mrf.mxu0
        %v2143 = vadd.f32 0.0, %v2142
        %v2144 = vpop.f32.mrf.mxu0
        %v2145 = vadd.f32 0.0, %v2144
        %2146 = vmatmul.bf16.gmra.mxu0 %v2043
        %v2147 = vpop.f32.mrf.mxu0
        %v2148 = vadd.f32 0.0, %v2147
        %v2149 = vpop.f32.mrf.mxu0
        %v2150 = vadd.f32 0.0, %v2149
        %2151 = vdwg.mxu0
        %v2152 = vadd.f32 %v1854, %v2058
        %v2153 = vadd.f32 %v1855, %v2060
        %v2154 = vadd.f32 %v1856, %v2063
        %v2155 = vadd.f32 %v1857, %v2065
        %v2156 = vadd.f32 %v1858, %v2068
        %v2157 = vadd.f32 %v1859, %v2070
        %v2158 = vadd.f32 %v1860, %v2073
        %v2159 = vadd.f32 %v1861, %v2075
        %v2160 = vadd.f32 %v1862, %v2078
        %v2161 = vadd.f32 %v1863, %v2080
        %v2162 = vadd.f32 %v1864, %v2083
        %v2163 = vadd.f32 %v1865, %v2085
        %v2164 = vadd.f32 %v1866, %v2088
        %v2165 = vadd.f32 %v1867, %v2090
        %v2166 = vadd.f32 %v1868, %v2093
        %v2167 = vadd.f32 %v1869, %v2095
        %v2168 = vadd.f32 %v1870, %v2098
        %v2169 = vadd.f32 %v1871, %v2100
        %v2170 = vadd.f32 %v1872, %v2103
        %v2171 = vadd.f32 %v1873, %v2105
        %v2172 = vadd.f32 %v1874, %v2108
        %v2173 = vadd.f32 %v1875, %v2110
        %v2174 = vadd.f32 %v1876, %v2113
        %v2175 = vadd.f32 %v1877, %v2115
        %v2176 = vadd.f32 %v1878, %v2118
        %v2177 = vadd.f32 %v1879, %v2120
        %v2178 = vadd.f32 %v1880, %v2123
        %v2179 = vadd.f32 %v1881, %v2125
        %v2180 = vadd.f32 %v1882, %v2128
        %v2181 = vadd.f32 %v1883, %v2130
        %v2182 = vadd.f32 %v1884, %v2133
        %v2183 = vadd.f32 %v1885, %v2135
        %v2184 = vadd.f32 %v1886, %v2138
        %v2185 = vadd.f32 %v1887, %v2140
        %v2186 = vadd.f32 %v1888, %v2143
        %v2187 = vadd.f32 %v1889, %v2145
        %v2188 = vadd.f32 %v1890, %v2148
        %v2189 = vadd.f32 %v1891, %v2150
        %v2190 = vld [vmem:[%s255 + $0x10] sm:$0x8]
        %v2191 = vld [vmem:[%s255 + $0x14] sm:$0xf]
        %v2192 = vld [vmem:[%s255 + $0x18] sm:$0xf]
        %v2193 = vld [vmem:[%s255 + $0x1c] sm:$0xf]
        %v2194 = vld [vmem:[%s255 + $0x20] sm:$0xf]
        %v2195 = vld [vmem:[%s255 + $0x24] sm:$0xf]
        %v2196 = vld [vmem:[%s255 + $0x28] sm:$0xf]
        %v2197 = vld [vmem:[%s255 + $0x2c] sm:$0xf]
        %v2198 = vld [vmem:[%s255 + $0x30] sm:$0xf]
        %v2199 = vld [vmem:[%s255 + $0x34] sm:$0xf]
        %v2200 = vld [vmem:[%s255 + $0x38] sm:$0xf]
        %v2201 = vld [vmem:[%s255 + $0x3c] sm:$0xf]
        %v2202 = vld [vmem:[%s255 + $0x40] sm:$0xf]
        %v2203 = vld [vmem:[%s255 + $0x44] sm:$0xf]
        %v2204 = vld [vmem:[%s255 + $0x48] sm:$0xf]
        %v2205 = vld [vmem:[%s255 + $0x4c] sm:$0xf]
        %v2206 = vld [vmem:[%s255 + $0x50] sm:$0xf]
        %v2207 = vld [vmem:[%s255 + $0x54] sm:$0xf]
        %v2208 = vld [vmem:[%s255 + $0x58] sm:$0xf]
        %v2209 = vld [vmem:[%s255 + $0x5c] sm:$0xf]
        %v2210 = vld [vmem:[%s255 + $0x60] sm:$0xf]
        %v2211 = vld [vmem:[%s255 + $0x64] sm:$0xf]
        %v2212 = vld [vmem:[%s255 + $0x68] sm:$0xf]
        %v2213 = vld [vmem:[%s255 + $0x6c] sm:$0xf]
        %v2214 = vld [vmem:[%s255 + $0x70] sm:$0xf]
        %v2215 = vld [vmem:[%s255 + $0x74] sm:$0xf]
        %v2216 = vld [vmem:[%s255 + $0x78] sm:$0xf]
        %v2217 = vld [vmem:[%s255 + $0x7c] sm:$0xf]
        %v2218 = vld [vmem:[%s255 + $0x80] sm:$0xf]
        %v2219 = vld [vmem:[%s255 + $0x84] sm:$0xf]
        %v2220 = vld [vmem:[%s255 + $0x88] sm:$0xf]
        %v2221 = vld [vmem:[%s255 + $0x8c] sm:$0xf]
        %v2222 = vld [vmem:[%s255 + $0x90] sm:$0xf]
        %v2223 = vld [vmem:[%s255 + $0x94] sm:$0xf]
        %v2224 = vld [vmem:[%s255 + $0x98] sm:$0xf]
        %v2225 = vld [vmem:[%s255 + $0x9c] sm:$0xf]
        %v2226 = vld [vmem:[%s255 + $0xa0] sm:$0xf]
        %v2227 = vld [vmem:[%s255 + $0xa4] sm:$0xf]
        %v2228 = vld [vmem:[%s255 + $0xa8] sm:$0x7]
        %s2229 = scalar_lea.vmem %s259, 24
        %v2230 = vld [vmem:[%s2229] sm:$0xf]
        %v2270 = vunpack.c.l.b16 %v2190
        %v2271 = vunpack.c.l.b16 %v2191
        %v2272 = vunpack.c.l.b16 %v2192
        %v2273 = vunpack.c.l.b16 %v2193
        %v2274 = vunpack.c.l.b16 %v2194
        %v2275 = vunpack.c.l.b16 %v2195
        %v2276 = vunpack.c.l.b16 %v2196
        %v2277 = vunpack.c.l.b16 %v2197
        %v2278 = vunpack.c.l.b16 %v2198
        %v2279 = vunpack.c.l.b16 %v2199
        %v2280 = vunpack.c.l.b16 %v2200
        %v2281 = vunpack.c.l.b16 %v2201
        %v2282 = vunpack.c.l.b16 %v2202
        %v2283 = vunpack.c.l.b16 %v2203
        %v2284 = vunpack.c.l.b16 %v2204
        %v2285 = vunpack.c.l.b16 %v2205
        %v2286 = vunpack.c.l.b16 %v2206
        %v2287 = vunpack.c.l.b16 %v2207
        %v2288 = vunpack.c.l.b16 %v2208
        %v2289 = vunpack.c.l.b16 %v2209
        %v2290 = vunpack.c.l.b16 %v2210
        %v2291 = vunpack.c.l.b16 %v2211
        %v2292 = vunpack.c.l.b16 %v2212
        %v2293 = vunpack.c.l.b16 %v2213
        %v2294 = vunpack.c.l.b16 %v2214
        %v2295 = vunpack.c.l.b16 %v2215
        %v2296 = vunpack.c.l.b16 %v2216
        %v2297 = vunpack.c.l.b16 %v2217
        %v2298 = vunpack.c.l.b16 %v2218
        %v2299 = vunpack.c.l.b16 %v2219
        %v2300 = vunpack.c.l.b16 %v2220
        %v2301 = vunpack.c.l.b16 %v2221
        %v2302 = vunpack.c.l.b16 %v2222
        %v2303 = vunpack.c.l.b16 %v2223
        %v2304 = vunpack.c.l.b16 %v2224
        %v2305 = vunpack.c.l.b16 %v2225
        %v2306 = vunpack.c.l.b16 %v2226
        %v2307 = vunpack.c.l.b16 %v2227
        %v2308 = vunpack.c.l.b16 %v2228
        %v2309 = vpack.c.b16 %v2271, %v2270
        %v2310 = vpack.c.b16 %v2273, %v2272
        %v2311 = vpack.c.b16 %v2275, %v2274
        %v2312 = vpack.c.b16 %v2277, %v2276
        %v2313 = vpack.c.b16 %v2279, %v2278
        %v2314 = vpack.c.b16 %v2281, %v2280
        %v2315 = vpack.c.b16 %v2283, %v2282
        %v2316 = vpack.c.b16 %v2285, %v2284
        %v2317 = vpack.c.b16 %v2287, %v2286
        %v2318 = vpack.c.b16 %v2289, %v2288
        %v2319 = vpack.c.b16 %v2291, %v2290
        %v2320 = vpack.c.b16 %v2293, %v2292
        %v2321 = vpack.c.b16 %v2295, %v2294
        %v2322 = vpack.c.b16 %v2297, %v2296
        %v2323 = vpack.c.b16 %v2299, %v2298
        %v2324 = vpack.c.b16 %v2301, %v2300
        %v2325 = vpack.c.b16 %v2303, %v2302
        %v2326 = vpack.c.b16 %v2305, %v2304
        %v2327 = vpack.c.b16 %v2307, %v2306
        %v2328 = vpack.c.b16 %v2308, %v2308
        %vm2329 = vcmask 1044480
        %v2330 = vrot.slane %v2309, 3
        %v2331 = vrot.slane %v2310, 3
        %v2332 = vsel %vm2329, %v2330, %v2331
        %v2333 = vrot.slane %v2311, 3
        %v2334 = vsel %vm2329, %v2331, %v2333
        %v2335 = vrot.slane %v2312, 3
        %v2336 = vsel %vm2329, %v2333, %v2335
        %v2337 = vrot.slane %v2313, 3
        %v2338 = vsel %vm2329, %v2335, %v2337
        %v2339 = vrot.slane %v2314, 3
        %v2340 = vsel %vm2329, %v2337, %v2339
        %v2341 = vrot.slane %v2315, 3
        %v2342 = vsel %vm2329, %v2339, %v2341
        %v2343 = vrot.slane %v2316, 3
        %v2344 = vsel %vm2329, %v2341, %v2343
        %v2345 = vrot.slane %v2317, 3
        %v2346 = vsel %vm2329, %v2343, %v2345
        %v2347 = vrot.slane %v2318, 3
        %v2348 = vsel %vm2329, %v2345, %v2347
        %v2349 = vrot.slane %v2319, 3
        %v2350 = vsel %vm2329, %v2347, %v2349
        %v2351 = vrot.slane %v2320, 3
        %v2352 = vsel %vm2329, %v2349, %v2351
        %v2353 = vrot.slane %v2321, 3
        %v2354 = vsel %vm2329, %v2351, %v2353
        %v2355 = vrot.slane %v2322, 3
        %v2356 = vsel %vm2329, %v2353, %v2355
        %v2357 = vrot.slane %v2323, 3
        %v2358 = vsel %vm2329, %v2355, %v2357
        %v2359 = vrot.slane %v2324, 3
        %v2360 = vsel %vm2329, %v2357, %v2359
        %v2361 = vrot.slane %v2325, 3
        %v2362 = vsel %vm2329, %v2359, %v2361
        %v2363 = vrot.slane %v2326, 3
        %v2364 = vsel %vm2329, %v2361, %v2363
        %v2365 = vrot.slane %v2327, 3
        %v2366 = vsel %vm2329, %v2363, %v2365
        %v2367 = vrot.slane %v2328, 3
        %v2368 = vsel %vm2329, %v2365, %v2367
        %v2370 = vsel %vm564, %v2332, 0
        %v2373 = vsel %vm564, %v2334, 0
        %v2376 = vsel %vm564, %v2336, 0
        %v2379 = vsel %vm564, %v2338, 0
        %v2382 = vsel %vm564, %v2340, 0
        %v2385 = vsel %vm564, %v2342, 0
        %v2388 = vsel %vm564, %v2344, 0
        %v2391 = vsel %vm564, %v2346, 0
        %v2394 = vsel %vm564, %v2348, 0
        %v2397 = vsel %vm564, %v2350, 0
        %v2400 = vsel %vm564, %v2352, 0
        %v2403 = vsel %vm564, %v2354, 0
        %v2406 = vsel %vm564, %v2356, 0
        %v2409 = vsel %vm564, %v2358, 0
        %v2412 = vsel %vm564, %v2360, 0
        %v2415 = vsel %vm564, %v2362, 0
        %v2418 = vsel %vm564, %v2364, 0
        %v2421 = vsel %vm564, %v2366, 0
        %v2424 = vsel %vm564, %v2368, 0
        %v2427 = vsel %vm622, %v2230, 0
        %2429 = vmatpush.bf16.msra.mxu0 0
        %2430 = vmatpush.bf16.msra.mxu0 0
        %2431 = vmatpush.bf16.msra.mxu0 0
        %2432 = vmatpush.bf16.msra.mxu0 0
        %2433 = vmatpush.bf16.msra.mxu0 0
        %2434 = vmatpush.bf16.msra.mxu0 0
        %2435 = vmatpush.bf16.msra.mxu0 0
        %2436 = vmatpush.bf16.msra.mxu0 %v2427
        %2437 = vmatmul.bf16.gmra.mxu0 %v2370
        %v2438 = vpop.f32.mrf.mxu0
        %v2439 = vadd.f32 0.0, %v2438
        %v2440 = vpop.f32.mrf.mxu0
        %v2441 = vadd.f32 0.0, %v2440
        %2442 = vmatmul.bf16.gmra.mxu0 %v2373
        %v2443 = vpop.f32.mrf.mxu0
        %v2444 = vadd.f32 0.0, %v2443
        %v2445 = vpop.f32.mrf.mxu0
        %v2446 = vadd.f32 0.0, %v2445
        %2447 = vmatmul.bf16.gmra.mxu0 %v2376
        %v2448 = vpop.f32.mrf.mxu0
        %v2449 = vadd.f32 0.0, %v2448
        %v2450 = vpop.f32.mrf.mxu0
        %v2451 = vadd.f32 0.0, %v2450
        %2452 = vmatmul.bf16.gmra.mxu0 %v2379
        %v2453 = vpop.f32.mrf.mxu0
        %v2454 = vadd.f32 0.0, %v2453
        %v2455 = vpop.f32.mrf.mxu0
        %v2456 = vadd.f32 0.0, %v2455
        %2457 = vmatmul.bf16.gmra.mxu0 %v2382
        %v2458 = vpop.f32.mrf.mxu0
        %v2459 = vadd.f32 0.0, %v2458
        %v2460 = vpop.f32.mrf.mxu0
        %v2461 = vadd.f32 0.0, %v2460
        %2462 = vmatmul.bf16.gmra.mxu0 %v2385
        %v2463 = vpop.f32.mrf.mxu0
        %v2464 = vadd.f32 0.0, %v2463
        %v2465 = vpop.f32.mrf.mxu0
        %v2466 = vadd.f32 0.0, %v2465
        %2467 = vmatmul.bf16.gmra.mxu0 %v2388
        %v2468 = vpop.f32.mrf.mxu0
        %v2469 = vadd.f32 0.0, %v2468
        %v2470 = vpop.f32.mrf.mxu0
        %v2471 = vadd.f32 0.0, %v2470
        %2472 = vmatmul.bf16.gmra.mxu0 %v2391
        %v2473 = vpop.f32.mrf.mxu0
        %v2474 = vadd.f32 0.0, %v2473
        %v2475 = vpop.f32.mrf.mxu0
        %v2476 = vadd.f32 0.0, %v2475
        %2477 = vmatmul.bf16.gmra.mxu0 %v2394
        %v2478 = vpop.f32.mrf.mxu0
        %v2479 = vadd.f32 0.0, %v2478
        %v2480 = vpop.f32.mrf.mxu0
        %v2481 = vadd.f32 0.0, %v2480
        %2482 = vmatmul.bf16.gmra.mxu0 %v2397
        %v2483 = vpop.f32.mrf.mxu0
        %v2484 = vadd.f32 0.0, %v2483
        %v2485 = vpop.f32.mrf.mxu0
        %v2486 = vadd.f32 0.0, %v2485
        %2487 = vmatmul.bf16.gmra.mxu0 %v2400
        %v2488 = vpop.f32.mrf.mxu0
        %v2489 = vadd.f32 0.0, %v2488
        %v2490 = vpop.f32.mrf.mxu0
        %v2491 = vadd.f32 0.0, %v2490
        %2492 = vmatmul.bf16.gmra.mxu0 %v2403
        %v2493 = vpop.f32.mrf.mxu0
        %v2494 = vadd.f32 0.0, %v2493
        %v2495 = vpop.f32.mrf.mxu0
        %v2496 = vadd.f32 0.0, %v2495
        %2497 = vmatmul.bf16.gmra.mxu0 %v2406
        %v2498 = vpop.f32.mrf.mxu0
        %v2499 = vadd.f32 0.0, %v2498
        %v2500 = vpop.f32.mrf.mxu0
        %v2501 = vadd.f32 0.0, %v2500
        %2502 = vmatmul.bf16.gmra.mxu0 %v2409
        %v2503 = vpop.f32.mrf.mxu0
        %v2504 = vadd.f32 0.0, %v2503
        %v2505 = vpop.f32.mrf.mxu0
        %v2506 = vadd.f32 0.0, %v2505
        %2507 = vmatmul.bf16.gmra.mxu0 %v2412
        %v2508 = vpop.f32.mrf.mxu0
        %v2509 = vadd.f32 0.0, %v2508
        %v2510 = vpop.f32.mrf.mxu0
        %v2511 = vadd.f32 0.0, %v2510
        %2512 = vmatmul.bf16.gmra.mxu0 %v2415
        %v2513 = vpop.f32.mrf.mxu0
        %v2514 = vadd.f32 0.0, %v2513
        %v2515 = vpop.f32.mrf.mxu0
        %v2516 = vadd.f32 0.0, %v2515
        %2517 = vmatmul.bf16.gmra.mxu0 %v2418
        %v2518 = vpop.f32.mrf.mxu0
        %v2519 = vadd.f32 0.0, %v2518
        %v2520 = vpop.f32.mrf.mxu0
        %v2521 = vadd.f32 0.0, %v2520
        %2522 = vmatmul.bf16.gmra.mxu0 %v2421
        %v2523 = vpop.f32.mrf.mxu0
        %v2524 = vadd.f32 0.0, %v2523
        %v2525 = vpop.f32.mrf.mxu0
        %v2526 = vadd.f32 0.0, %v2525
        %2527 = vmatmul.bf16.gmra.mxu0 %v2424
        %v2528 = vpop.f32.mrf.mxu0
        %v2529 = vadd.f32 0.0, %v2528
        %v2530 = vpop.f32.mrf.mxu0
        %v2531 = vadd.f32 0.0, %v2530
        %2532 = vdwg.mxu0
        %v2533 = vadd.f32 %v2152, %v2439
        %v2534 = vadd.f32 %v2153, %v2441
        %v2535 = vadd.f32 %v2154, %v2444
        %v2536 = vadd.f32 %v2155, %v2446
        %v2537 = vadd.f32 %v2156, %v2449
        %v2538 = vadd.f32 %v2157, %v2451
        %v2539 = vadd.f32 %v2158, %v2454
        %v2540 = vadd.f32 %v2159, %v2456
        %v2541 = vadd.f32 %v2160, %v2459
        %v2542 = vadd.f32 %v2161, %v2461
        %v2543 = vadd.f32 %v2162, %v2464
        %v2544 = vadd.f32 %v2163, %v2466
        %v2545 = vadd.f32 %v2164, %v2469
        %v2546 = vadd.f32 %v2165, %v2471
        %v2547 = vadd.f32 %v2166, %v2474
        %v2548 = vadd.f32 %v2167, %v2476
        %v2549 = vadd.f32 %v2168, %v2479
        %v2550 = vadd.f32 %v2169, %v2481
        %v2551 = vadd.f32 %v2170, %v2484
        %v2552 = vadd.f32 %v2171, %v2486
        %v2553 = vadd.f32 %v2172, %v2489
        %v2554 = vadd.f32 %v2173, %v2491
        %v2555 = vadd.f32 %v2174, %v2494
        %v2556 = vadd.f32 %v2175, %v2496
        %v2557 = vadd.f32 %v2176, %v2499
        %v2558 = vadd.f32 %v2177, %v2501
        %v2559 = vadd.f32 %v2178, %v2504
        %v2560 = vadd.f32 %v2179, %v2506
        %v2561 = vadd.f32 %v2180, %v2509
        %v2562 = vadd.f32 %v2181, %v2511
        %v2563 = vadd.f32 %v2182, %v2514
        %v2564 = vadd.f32 %v2183, %v2516
        %v2565 = vadd.f32 %v2184, %v2519
        %v2566 = vadd.f32 %v2185, %v2521
        %v2567 = vadd.f32 %v2186, %v2524
        %v2568 = vadd.f32 %v2187, %v2526
        %v2569 = vadd.f32 %v2188, %v2529
        %v2570 = vadd.f32 %v2189, %v2531
        %v2571 = vld [vmem:[%s255 + $0xa8] sm:$0xf]
        %s2572 = scalar_lea.vmem %s259, 28
        %v2573 = vld [vmem:[%s2572] sm:$0xf]
        %v2575 = vunpack.c.l.b16 %v2571
        %v2576 = vpack.c.b16 %v2575, %v2575
        %vm2577 = vsmask.f32 4352
        %v2579 = vshrl.u32 %v2309, 16
        %v2581 = vrot.slane %v2579, 3
        %v2582 = vshll.u32 %v2309, 16
        %v2584 = vrot.slane %v2582, 4
        %v2585 = vor.u32 %v2581, %v2584
        %v2587 = vshrl.u32 %v2310, 16
        %v2589 = vrot.slane %v2587, 3
        %v2590 = vshll.u32 %v2310, 16
        %v2592 = vrot.slane %v2590, 4
        %v2593 = vor.u32 %v2589, %v2592
        %v2594 = vsel %vm2577, %v2585, %v2593
        %v2596 = vshrl.u32 %v2311, 16
        %v2598 = vrot.slane %v2596, 3
        %v2599 = vshll.u32 %v2311, 16
        %v2601 = vrot.slane %v2599, 4
        %v2602 = vor.u32 %v2598, %v2601
        %v2603 = vsel %vm2577, %v2593, %v2602
        %v2605 = vshrl.u32 %v2312, 16
        %v2607 = vrot.slane %v2605, 3
        %v2608 = vshll.u32 %v2312, 16
        %v2610 = vrot.slane %v2608, 4
        %v2611 = vor.u32 %v2607, %v2610
        %v2612 = vsel %vm2577, %v2602, %v2611
        %v2614 = vshrl.u32 %v2313, 16
        %v2616 = vrot.slane %v2614, 3
        %v2617 = vshll.u32 %v2313, 16
        %v2619 = vrot.slane %v2617, 4
        %v2620 = vor.u32 %v2616, %v2619
        %v2621 = vsel %vm2577, %v2611, %v2620
        %v2623 = vshrl.u32 %v2314, 16
        %v2625 = vrot.slane %v2623, 3
        %v2626 = vshll.u32 %v2314, 16
        %v2628 = vrot.slane %v2626, 4
        %v2629 = vor.u32 %v2625, %v2628
        %v2630 = vsel %vm2577, %v2620, %v2629
        %v2632 = vshrl.u32 %v2315, 16
        %v2634 = vrot.slane %v2632, 3
        %v2635 = vshll.u32 %v2315, 16
        %v2637 = vrot.slane %v2635, 4
        %v2638 = vor.u32 %v2634, %v2637
        %v2639 = vsel %vm2577, %v2629, %v2638
        %v2641 = vshrl.u32 %v2316, 16
        %v2643 = vrot.slane %v2641, 3
        %v2644 = vshll.u32 %v2316, 16
        %v2646 = vrot.slane %v2644, 4
        %v2647 = vor.u32 %v2643, %v2646
        %v2648 = vsel %vm2577, %v2638, %v2647
        %v2650 = vshrl.u32 %v2317, 16
        %v2652 = vrot.slane %v2650, 3
        %v2653 = vshll.u32 %v2317, 16
        %v2655 = vrot.slane %v2653, 4
        %v2656 = vor.u32 %v2652, %v2655
        %v2657 = vsel %vm2577, %v2647, %v2656
        %v2659 = vshrl.u32 %v2318, 16
        %v2661 = vrot.slane %v2659, 3
        %v2662 = vshll.u32 %v2318, 16
        %v2664 = vrot.slane %v2662, 4
        %v2665 = vor.u32 %v2661, %v2664
        %v2666 = vsel %vm2577, %v2656, %v2665
        %v2668 = vshrl.u32 %v2319, 16
        %v2670 = vrot.slane %v2668, 3
        %v2671 = vshll.u32 %v2319, 16
        %v2673 = vrot.slane %v2671, 4
        %v2674 = vor.u32 %v2670, %v2673
        %v2675 = vsel %vm2577, %v2665, %v2674
        %v2677 = vshrl.u32 %v2320, 16
        %v2679 = vrot.slane %v2677, 3
        %v2680 = vshll.u32 %v2320, 16
        %v2682 = vrot.slane %v2680, 4
        %v2683 = vor.u32 %v2679, %v2682
        %v2684 = vsel %vm2577, %v2674, %v2683
        %v2686 = vshrl.u32 %v2321, 16
        %v2688 = vrot.slane %v2686, 3
        %v2689 = vshll.u32 %v2321, 16
        %v2691 = vrot.slane %v2689, 4
        %v2692 = vor.u32 %v2688, %v2691
        %v2693 = vsel %vm2577, %v2683, %v2692
        %v2695 = vshrl.u32 %v2322, 16
        %v2697 = vrot.slane %v2695, 3
        %v2698 = vshll.u32 %v2322, 16
        %v2700 = vrot.slane %v2698, 4
        %v2701 = vor.u32 %v2697, %v2700
        %v2702 = vsel %vm2577, %v2692, %v2701
        %v2704 = vshrl.u32 %v2323, 16
        %v2706 = vrot.slane %v2704, 3
        %v2707 = vshll.u32 %v2323, 16
        %v2709 = vrot.slane %v2707, 4
        %v2710 = vor.u32 %v2706, %v2709
        %v2711 = vsel %vm2577, %v2701, %v2710
        %v2713 = vshrl.u32 %v2324, 16
        %v2715 = vrot.slane %v2713, 3
        %v2716 = vshll.u32 %v2324, 16
        %v2718 = vrot.slane %v2716, 4
        %v2719 = vor.u32 %v2715, %v2718
        %v2720 = vsel %vm2577, %v2710, %v2719
        %v2722 = vshrl.u32 %v2325, 16
        %v2724 = vrot.slane %v2722, 3
        %v2725 = vshll.u32 %v2325, 16
        %v2727 = vrot.slane %v2725, 4
        %v2728 = vor.u32 %v2724, %v2727
        %v2729 = vsel %vm2577, %v2719, %v2728
        %v2731 = vshrl.u32 %v2326, 16
        %v2733 = vrot.slane %v2731, 3
        %v2734 = vshll.u32 %v2326, 16
        %v2736 = vrot.slane %v2734, 4
        %v2737 = vor.u32 %v2733, %v2736
        %v2738 = vsel %vm2577, %v2728, %v2737
        %v2740 = vshrl.u32 %v2327, 16
        %v2742 = vrot.slane %v2740, 3
        %v2743 = vshll.u32 %v2327, 16
        %v2745 = vrot.slane %v2743, 4
        %v2746 = vor.u32 %v2742, %v2745
        %v2747 = vsel %vm2577, %v2737, %v2746
        %v2749 = vshrl.u32 %v2576, 16
        %v2751 = vrot.slane %v2749, 3
        %v2752 = vshll.u32 %v2576, 16
        %v2754 = vrot.slane %v2752, 4
        %v2755 = vor.u32 %v2751, %v2754
        %v2756 = vsel %vm2577, %v2746, %v2755
        %v2758 = vsel %vm564, %v2594, 0
        %v2761 = vsel %vm564, %v2603, 0
        %v2764 = vsel %vm564, %v2612, 0
        %v2767 = vsel %vm564, %v2621, 0
        %v2770 = vsel %vm564, %v2630, 0
        %v2773 = vsel %vm564, %v2639, 0
        %v2776 = vsel %vm564, %v2648, 0
        %v2779 = vsel %vm564, %v2657, 0
        %v2782 = vsel %vm564, %v2666, 0
        %v2785 = vsel %vm564, %v2675, 0
        %v2788 = vsel %vm564, %v2684, 0
        %v2791 = vsel %vm564, %v2693, 0
        %v2794 = vsel %vm564, %v2702, 0
        %v2797 = vsel %vm564, %v2711, 0
        %v2800 = vsel %vm564, %v2720, 0
        %v2803 = vsel %vm564, %v2729, 0
        %v2806 = vsel %vm564, %v2738, 0
        %v2809 = vsel %vm564, %v2747, 0
        %v2812 = vsel %vm564, %v2756, 0
        %v2815 = vsel %vm622, %v2573, 0
        %2817 = vmatpush.bf16.msra.mxu0 0
        %2818 = vmatpush.bf16.msra.mxu0 0
        %2819 = vmatpush.bf16.msra.mxu0 0
        %2820 = vmatpush.bf16.msra.mxu0 0
        %2821 = vmatpush.bf16.msra.mxu0 0
        %2822 = vmatpush.bf16.msra.mxu0 0
        %2823 = vmatpush.bf16.msra.mxu0 0
        %2824 = vmatpush.bf16.msra.mxu0 %v2815
        %2825 = vmatmul.bf16.gmra.mxu0 %v2758
        %v2826 = vpop.f32.mrf.mxu0
        %v2827 = vadd.f32 0.0, %v2826
        %v2828 = vpop.f32.mrf.mxu0
        %v2829 = vadd.f32 0.0, %v2828
        %2830 = vmatmul.bf16.gmra.mxu0 %v2761
        %v2831 = vpop.f32.mrf.mxu0
        %v2832 = vadd.f32 0.0, %v2831
        %v2833 = vpop.f32.mrf.mxu0
        %v2834 = vadd.f32 0.0, %v2833
        %2835 = vmatmul.bf16.gmra.mxu0 %v2764
        %v2836 = vpop.f32.mrf.mxu0
        %v2837 = vadd.f32 0.0, %v2836
        %v2838 = vpop.f32.mrf.mxu0
        %v2839 = vadd.f32 0.0, %v2838
        %2840 = vmatmul.bf16.gmra.mxu0 %v2767
        %v2841 = vpop.f32.mrf.mxu0
        %v2842 = vadd.f32 0.0, %v2841
        %v2843 = vpop.f32.mrf.mxu0
        %v2844 = vadd.f32 0.0, %v2843
        %2845 = vmatmul.bf16.gmra.mxu0 %v2770
        %v2846 = vpop.f32.mrf.mxu0
        %v2847 = vadd.f32 0.0, %v2846
        %v2848 = vpop.f32.mrf.mxu0
        %v2849 = vadd.f32 0.0, %v2848
        %2850 = vmatmul.bf16.gmra.mxu0 %v2773
        %v2851 = vpop.f32.mrf.mxu0
        %v2852 = vadd.f32 0.0, %v2851
        %v2853 = vpop.f32.mrf.mxu0
        %v2854 = vadd.f32 0.0, %v2853
        %2855 = vmatmul.bf16.gmra.mxu0 %v2776
        %v2856 = vpop.f32.mrf.mxu0
        %v2857 = vadd.f32 0.0, %v2856
        %v2858 = vpop.f32.mrf.mxu0
        %v2859 = vadd.f32 0.0, %v2858
        %2860 = vmatmul.bf16.gmra.mxu0 %v2779
        %v2861 = vpop.f32.mrf.mxu0
        %v2862 = vadd.f32 0.0, %v2861
        %v2863 = vpop.f32.mrf.mxu0
        %v2864 = vadd.f32 0.0, %v2863
        %2865 = vmatmul.bf16.gmra.mxu0 %v2782
        %v2866 = vpop.f32.mrf.mxu0
        %v2867 = vadd.f32 0.0, %v2866
        %v2868 = vpop.f32.mrf.mxu0
        %v2869 = vadd.f32 0.0, %v2868
        %2870 = vmatmul.bf16.gmra.mxu0 %v2785
        %v2871 = vpop.f32.mrf.mxu0
        %v2872 = vadd.f32 0.0, %v2871
        %v2873 = vpop.f32.mrf.mxu0
        %v2874 = vadd.f32 0.0, %v2873
        %2875 = vmatmul.bf16.gmra.mxu0 %v2788
        %v2876 = vpop.f32.mrf.mxu0
        %v2877 = vadd.f32 0.0, %v2876
        %v2878 = vpop.f32.mrf.mxu0
        %v2879 = vadd.f32 0.0, %v2878
        %2880 = vmatmul.bf16.gmra.mxu0 %v2791
        %v2881 = vpop.f32.mrf.mxu0
        %v2882 = vadd.f32 0.0, %v2881
        %v2883 = vpop.f32.mrf.mxu0
        %v2884 = vadd.f32 0.0, %v2883
        %2885 = vmatmul.bf16.gmra.mxu0 %v2794
        %v2886 = vpop.f32.mrf.mxu0
        %v2887 = vadd.f32 0.0, %v2886
        %v2888 = vpop.f32.mrf.mxu0
        %v2889 = vadd.f32 0.0, %v2888
        %2890 = vmatmul.bf16.gmra.mxu0 %v2797
        %v2891 = vpop.f32.mrf.mxu0
        %v2892 = vadd.f32 0.0, %v2891
        %v2893 = vpop.f32.mrf.mxu0
        %v2894 = vadd.f32 0.0, %v2893
        %2895 = vmatmul.bf16.gmra.mxu0 %v2800
        %v2896 = vpop.f32.mrf.mxu0
        %v2897 = vadd.f32 0.0, %v2896
        %v2898 = vpop.f32.mrf.mxu0
        %v2899 = vadd.f32 0.0, %v2898
        %2900 = vmatmul.bf16.gmra.mxu0 %v2803
        %v2901 = vpop.f32.mrf.mxu0
        %v2902 = vadd.f32 0.0, %v2901
        %v2903 = vpop.f32.mrf.mxu0
        %v2904 = vadd.f32 0.0, %v2903
        %2905 = vmatmul.bf16.gmra.mxu0 %v2806
        %v2906 = vpop.f32.mrf.mxu0
        %v2907 = vadd.f32 0.0, %v2906
        %v2908 = vpop.f32.mrf.mxu0
        %v2909 = vadd.f32 0.0, %v2908
        %2910 = vmatmul.bf16.gmra.mxu0 %v2809
        %v2911 = vpop.f32.mrf.mxu0
        %v2912 = vadd.f32 0.0, %v2911
        %v2913 = vpop.f32.mrf.mxu0
        %v2914 = vadd.f32 0.0, %v2913
        %2915 = vmatmul.bf16.gmra.mxu0 %v2812
        %v2916 = vpop.f32.mrf.mxu0
        %v2917 = vadd.f32 0.0, %v2916
        %v2918 = vpop.f32.mrf.mxu0
        %v2919 = vadd.f32 0.0, %v2918
        %2920 = vdwg.mxu0
        %v2921 = vadd.f32 %v2533, %v2827
        %v2922 = vadd.f32 %v2534, %v2829
        %v2923 = vadd.f32 %v2535, %v2832
        %v2924 = vadd.f32 %v2536, %v2834
        %v2925 = vadd.f32 %v2537, %v2837
        %v2926 = vadd.f32 %v2538, %v2839
        %v2927 = vadd.f32 %v2539, %v2842
        %v2928 = vadd.f32 %v2540, %v2844
        %v2929 = vadd.f32 %v2541, %v2847
        %v2930 = vadd.f32 %v2542, %v2849
        %v2931 = vadd.f32 %v2543, %v2852
        %v2932 = vadd.f32 %v2544, %v2854
        %v2933 = vadd.f32 %v2545, %v2857
        %v2934 = vadd.f32 %v2546, %v2859
        %v2935 = vadd.f32 %v2547, %v2862
        %v2936 = vadd.f32 %v2548, %v2864
        %v2937 = vadd.f32 %v2549, %v2867
        %v2938 = vadd.f32 %v2550, %v2869
        %v2939 = vadd.f32 %v2551, %v2872
        %v2940 = vadd.f32 %v2552, %v2874
        %v2941 = vadd.f32 %v2553, %v2877
        %v2942 = vadd.f32 %v2554, %v2879
        %v2943 = vadd.f32 %v2555, %v2882
        %v2944 = vadd.f32 %v2556, %v2884
        %v2945 = vadd.f32 %v2557, %v2887
        %v2946 = vadd.f32 %v2558, %v2889
        %v2947 = vadd.f32 %v2559, %v2892
        %v2948 = vadd.f32 %v2560, %v2894
        %v2949 = vadd.f32 %v2561, %v2897
        %v2950 = vadd.f32 %v2562, %v2899
        %v2951 = vadd.f32 %v2563, %v2902
        %v2952 = vadd.f32 %v2564, %v2904
        %v2953 = vadd.f32 %v2565, %v2907
        %v2954 = vadd.f32 %v2566, %v2909
        %v2955 = vadd.f32 %v2567, %v2912
        %v2956 = vadd.f32 %v2568, %v2914
        %v2957 = vadd.f32 %v2569, %v2917
        %v2958 = vadd.f32 %v2570, %v2919
        %s2959 = scalar_lea.vmem %s259, 32
        %v2960 = vld [vmem:[%s2959] sm:$0xf]
        %v2961 = vpack.c.b16 %v2272, %v2271
        %v2962 = vpack.c.b16 %v2274, %v2273
        %v2963 = vpack.c.b16 %v2276, %v2275
        %v2964 = vpack.c.b16 %v2278, %v2277
        %v2965 = vpack.c.b16 %v2280, %v2279
        %v2966 = vpack.c.b16 %v2282, %v2281
        %v2967 = vpack.c.b16 %v2284, %v2283
        %v2968 = vpack.c.b16 %v2286, %v2285
        %v2969 = vpack.c.b16 %v2288, %v2287
        %v2970 = vpack.c.b16 %v2290, %v2289
        %v2971 = vpack.c.b16 %v2292, %v2291
        %v2972 = vpack.c.b16 %v2294, %v2293
        %v2973 = vpack.c.b16 %v2296, %v2295
        %v2974 = vpack.c.b16 %v2298, %v2297
        %v2975 = vpack.c.b16 %v2300, %v2299
        %v2976 = vpack.c.b16 %v2302, %v2301
        %v2977 = vpack.c.b16 %v2304, %v2303
        %v2978 = vpack.c.b16 %v2306, %v2305
        %v2979 = vpack.c.b16 %v2575, %v2307
        %v2981 = vsel %vm564, %v2961, 0
        %v2984 = vsel %vm564, %v2962, 0
        %v2987 = vsel %vm564, %v2963, 0
        %v2990 = vsel %vm564, %v2964, 0
        %v2993 = vsel %vm564, %v2965, 0
        %v2996 = vsel %vm564, %v2966, 0
        %v2999 = vsel %vm564, %v2967, 0
        %v3002 = vsel %vm564, %v2968, 0
        %v3005 = vsel %vm564, %v2969, 0
        %v3008 = vsel %vm564, %v2970, 0
        %v3011 = vsel %vm564, %v2971, 0
        %v3014 = vsel %vm564, %v2972, 0
        %v3017 = vsel %vm564, %v2973, 0
        %v3020 = vsel %vm564, %v2974, 0
        %v3023 = vsel %vm564, %v2975, 0
        %v3026 = vsel %vm564, %v2976, 0
        %v3029 = vsel %vm564, %v2977, 0
        %v3032 = vsel %vm564, %v2978, 0
        %v3035 = vsel %vm564, %v2979, 0
        %v3038 = vsel %vm622, %v2960, 0
        %3040 = vmatpush.bf16.msra.mxu0 0
        %3041 = vmatpush.bf16.msra.mxu0 0
        %3042 = vmatpush.bf16.msra.mxu0 0
        %3043 = vmatpush.bf16.msra.mxu0 0
        %3044 = vmatpush.bf16.msra.mxu0 0
        %3045 = vmatpush.bf16.msra.mxu0 0
        %3046 = vmatpush.bf16.msra.mxu0 0
        %3047 = vmatpush.bf16.msra.mxu0 %v3038
        %3048 = vmatmul.bf16.gmra.mxu0 %v2981
        %v3049 = vpop.f32.mrf.mxu0
        %v3050 = vadd.f32 0.0, %v3049
        %v3051 = vpop.f32.mrf.mxu0
        %v3052 = vadd.f32 0.0, %v3051
        %3053 = vmatmul.bf16.gmra.mxu0 %v2984
        %v3054 = vpop.f32.mrf.mxu0
        %v3055 = vadd.f32 0.0, %v3054
        %v3056 = vpop.f32.mrf.mxu0
        %v3057 = vadd.f32 0.0, %v3056
        %3058 = vmatmul.bf16.gmra.mxu0 %v2987
        %v3059 = vpop.f32.mrf.mxu0
        %v3060 = vadd.f32 0.0, %v3059
        %v3061 = vpop.f32.mrf.mxu0
        %v3062 = vadd.f32 0.0, %v3061
        %3063 = vmatmul.bf16.gmra.mxu0 %v2990
        %v3064 = vpop.f32.mrf.mxu0
        %v3065 = vadd.f32 0.0, %v3064
        %v3066 = vpop.f32.mrf.mxu0
        %v3067 = vadd.f32 0.0, %v3066
        %3068 = vmatmul.bf16.gmra.mxu0 %v2993
        %v3069 = vpop.f32.mrf.mxu0
        %v3070 = vadd.f32 0.0, %v3069
        %v3071 = vpop.f32.mrf.mxu0
        %v3072 = vadd.f32 0.0, %v3071
        %3073 = vmatmul.bf16.gmra.mxu0 %v2996
        %v3074 = vpop.f32.mrf.mxu0
        %v3075 = vadd.f32 0.0, %v3074
        %v3076 = vpop.f32.mrf.mxu0
        %v3077 = vadd.f32 0.0, %v3076
        %3078 = vmatmul.bf16.gmra.mxu0 %v2999
        %v3079 = vpop.f32.mrf.mxu0
        %v3080 = vadd.f32 0.0, %v3079
        %v3081 = vpop.f32.mrf.mxu0
        %v3082 = vadd.f32 0.0, %v3081
        %3083 = vmatmul.bf16.gmra.mxu0 %v3002
        %v3084 = vpop.f32.mrf.mxu0
        %v3085 = vadd.f32 0.0, %v3084
        %v3086 = vpop.f32.mrf.mxu0
        %v3087 = vadd.f32 0.0, %v3086
        %3088 = vmatmul.bf16.gmra.mxu0 %v3005
        %v3089 = vpop.f32.mrf.mxu0
        %v3090 = vadd.f32 0.0, %v3089
        %v3091 = vpop.f32.mrf.mxu0
        %v3092 = vadd.f32 0.0, %v3091
        %3093 = vmatmul.bf16.gmra.mxu0 %v3008
        %v3094 = vpop.f32.mrf.mxu0
        %v3095 = vadd.f32 0.0, %v3094
        %v3096 = vpop.f32.mrf.mxu0
        %v3097 = vadd.f32 0.0, %v3096
        %3098 = vmatmul.bf16.gmra.mxu0 %v3011
        %v3099 = vpop.f32.mrf.mxu0
        %v3100 = vadd.f32 0.0, %v3099
        %v3101 = vpop.f32.mrf.mxu0
        %v3102 = vadd.f32 0.0, %v3101
        %3103 = vmatmul.bf16.gmra.mxu0 %v3014
        %v3104 = vpop.f32.mrf.mxu0
        %v3105 = vadd.f32 0.0, %v3104
        %v3106 = vpop.f32.mrf.mxu0
        %v3107 = vadd.f32 0.0, %v3106
        %3108 = vmatmul.bf16.gmra.mxu0 %v3017
        %v3109 = vpop.f32.mrf.mxu0
        %v3110 = vadd.f32 0.0, %v3109
        %v3111 = vpop.f32.mrf.mxu0
        %v3112 = vadd.f32 0.0, %v3111
        %3113 = vmatmul.bf16.gmra.mxu0 %v3020
        %v3114 = vpop.f32.mrf.mxu0
        %v3115 = vadd.f32 0.0, %v3114
        %v3116 = vpop.f32.mrf.mxu0
        %v3117 = vadd.f32 0.0, %v3116
        %3118 = vmatmul.bf16.gmra.mxu0 %v3023
        %v3119 = vpop.f32.mrf.mxu0
        %v3120 = vadd.f32 0.0, %v3119
        %v3121 = vpop.f32.mrf.mxu0
        %v3122 = vadd.f32 0.0, %v3121
        %3123 = vmatmul.bf16.gmra.mxu0 %v3026
        %v3124 = vpop.f32.mrf.mxu0
        %v3125 = vadd.f32 0.0, %v3124
        %v3126 = vpop.f32.mrf.mxu0
        %v3127 = vadd.f32 0.0, %v3126
        %3128 = vmatmul.bf16.gmra.mxu0 %v3029
        %v3129 = vpop.f32.mrf.mxu0
        %v3130 = vadd.f32 0.0, %v3129
        %v3131 = vpop.f32.mrf.mxu0
        %v3132 = vadd.f32 0.0, %v3131
        %3133 = vmatmul.bf16.gmra.mxu0 %v3032
        %v3134 = vpop.f32.mrf.mxu0
        %v3135 = vadd.f32 0.0, %v3134
        %v3136 = vpop.f32.mrf.mxu0
        %v3137 = vadd.f32 0.0, %v3136
        %3138 = vmatmul.bf16.gmra.mxu0 %v3035
        %v3139 = vpop.f32.mrf.mxu0
        %v3140 = vadd.f32 0.0, %v3139
        %v3141 = vpop.f32.mrf.mxu0
        %v3142 = vadd.f32 0.0, %v3141
        %3143 = vdwg.mxu0
        %v3144 = vadd.f32 %v2921, %v3050
        %v3145 = vadd.f32 %v2922, %v3052
        %v3146 = vadd.f32 %v2923, %v3055
        %v3147 = vadd.f32 %v2924, %v3057
        %v3148 = vadd.f32 %v2925, %v3060
        %v3149 = vadd.f32 %v2926, %v3062
        %v3150 = vadd.f32 %v2927, %v3065
        %v3151 = vadd.f32 %v2928, %v3067
        %v3152 = vadd.f32 %v2929, %v3070
        %v3153 = vadd.f32 %v2930, %v3072
        %v3154 = vadd.f32 %v2931, %v3075
        %v3155 = vadd.f32 %v2932, %v3077
        %v3156 = vadd.f32 %v2933, %v3080
        %v3157 = vadd.f32 %v2934, %v3082
        %v3158 = vadd.f32 %v2935, %v3085
        %v3159 = vadd.f32 %v2936, %v3087
        %v3160 = vadd.f32 %v2937, %v3090
        %v3161 = vadd.f32 %v2938, %v3092
        %v3162 = vadd.f32 %v2939, %v3095
        %v3163 = vadd.f32 %v2940, %v3097
        %v3164 = vadd.f32 %v2941, %v3100
        %v3165 = vadd.f32 %v2942, %v3102
        %v3166 = vadd.f32 %v2943, %v3105
        %v3167 = vadd.f32 %v2944, %v3107
        %v3168 = vadd.f32 %v2945, %v3110
        %v3169 = vadd.f32 %v2946, %v3112
        %v3170 = vadd.f32 %v2947, %v3115
        %v3171 = vadd.f32 %v2948, %v3117
        %v3172 = vadd.f32 %v2949, %v3120
        %v3173 = vadd.f32 %v2950, %v3122
        %v3174 = vadd.f32 %v2951, %v3125
        %v3175 = vadd.f32 %v2952, %v3127
        %v3176 = vadd.f32 %v2953, %v3130
        %v3177 = vadd.f32 %v2954, %v3132
        %v3178 = vadd.f32 %v2955, %v3135
        %v3179 = vadd.f32 %v2956, %v3137
        %v3180 = vadd.f32 %v2957, %v3140
        %v3181 = vadd.f32 %v2958, %v3142
        %v3182 = vld [vmem:[%s0] sm:$0xff]
        %v3183 = vld [vmem:[%s0 + $0x8] sm:$0xff]
        %v3184 = vld [vmem:[%s0 + $0x10] sm:$0xff]
        %v3185 = vld [vmem:[%s0 + $0x18] sm:$0xff]
        %v3186 = vld [vmem:[%s0 + $0x20] sm:$0xff]
        %v3187 = vld [vmem:[%s0 + $0x28] sm:$0xff]
        %v3188 = vld [vmem:[%s0 + $0x30] sm:$0xff]
        %v3189 = vld [vmem:[%s0 + $0x38] sm:$0xff]
        %v3190 = vld [vmem:[%s0 + $0x40] sm:$0xff]
        %v3191 = vld [vmem:[%s0 + $0x48] sm:$0xff]
        %v3192 = vld [vmem:[%s0 + $0x50] sm:$0xff]
        %v3193 = vld [vmem:[%s0 + $0x58] sm:$0xff]
        %v3194 = vld [vmem:[%s0 + $0x60] sm:$0xff]
        %v3195 = vld [vmem:[%s0 + $0x68] sm:$0xff]
        %v3196 = vld [vmem:[%s0 + $0x70] sm:$0xff]
        %v3197 = vld [vmem:[%s0 + $0x78] sm:$0xff]
        %v3198 = vld [vmem:[%s0 + $0x80] sm:$0xff]
        %v3199 = vld [vmem:[%s0 + $0x88] sm:$0xff]
        %v3200 = vld [vmem:[%s0 + $0x90] sm:$0xff]
        %v3201 = vld [vmem:[%s0 + $0x98] sm:$0xff]
        %v3202 = vld [vmem:[%s0 + $0xa0] sm:$0xff]
        %v3203 = vld [vmem:[%s0 + $0xa8] sm:$0xff]
        %v3204 = vld [vmem:[%s0 + $0xb0] sm:$0xff]
        %v3205 = vld [vmem:[%s0 + $0xb8] sm:$0xff]
        %v3206 = vld [vmem:[%s0 + $0xc0] sm:$0xff]
        %v3207 = vld [vmem:[%s0 + $0xc8] sm:$0xff]
        %v3208 = vld [vmem:[%s0 + $0xd0] sm:$0xff]
        %v3209 = vld [vmem:[%s0 + $0xd8] sm:$0xff]
        %v3210 = vld [vmem:[%s0 + $0xe0] sm:$0xff]
        %v3211 = vld [vmem:[%s0 + $0xe8] sm:$0xff]
        %v3212 = vld [vmem:[%s0 + $0xf0] sm:$0xff]
        %v3213 = vld [vmem:[%s0 + $0xf8] sm:$0xff]
        %v3214 = vld [vmem:[%s0 + $0x100] sm:$0xff]
        %v3215 = vld [vmem:[%s0 + $0x108] sm:$0xff]
        %v3216 = vld [vmem:[%s0 + $0x110] sm:$0xff]
        %v3217 = vld [vmem:[%s0 + $0x118] sm:$0xff]
        %v3218 = vld [vmem:[%s0 + $0x120] sm:$0xff]
        %v3219 = vld [vmem:[%s0 + $0x128] sm:$0xff]
        %3221 = vset.pattern.permute.xlu0 0
        %3222 = vperm.xlu0 %3221, %v3182
        %v3223 = vpop.permute.xlu0 %3222
        %3226 = vset.pattern.permute.xlu0 0
        %3227 = vperm.xlu0 %3226, %v3183
        %v3228 = vpop.permute.xlu0 %3227
        %3231 = vset.pattern.permute.xlu0 0
        %3232 = vperm.xlu0 %3231, %v3184
        %v3233 = vpop.permute.xlu0 %3232
        %3236 = vset.pattern.permute.xlu0 0
        %3237 = vperm.xlu0 %3236, %v3185
        %v3238 = vpop.permute.xlu0 %3237
        %3241 = vset.pattern.permute.xlu0 0
        %3242 = vperm.xlu0 %3241, %v3186
        %v3243 = vpop.permute.xlu0 %3242
        %3246 = vset.pattern.permute.xlu0 0
        %3247 = vperm.xlu0 %3246, %v3187
        %v3248 = vpop.permute.xlu0 %3247
        %3251 = vset.pattern.permute.xlu0 0
        %3252 = vperm.xlu0 %3251, %v3188
        %v3253 = vpop.permute.xlu0 %3252
        %3256 = vset.pattern.permute.xlu0 0
        %3257 = vperm.xlu0 %3256, %v3189
        %v3258 = vpop.permute.xlu0 %3257
        %3261 = vset.pattern.permute.xlu0 0
        %3262 = vperm.xlu0 %3261, %v3190
        %v3263 = vpop.permute.xlu0 %3262
        %3266 = vset.pattern.permute.xlu0 0
        %3267 = vperm.xlu0 %3266, %v3191
        %v3268 = vpop.permute.xlu0 %3267
        %3271 = vset.pattern.permute.xlu0 0
        %3272 = vperm.xlu0 %3271, %v3192
        %v3273 = vpop.permute.xlu0 %3272
        %3276 = vset.pattern.permute.xlu0 0
        %3277 = vperm.xlu0 %3276, %v3193
        %v3278 = vpop.permute.xlu0 %3277
        %3281 = vset.pattern.permute.xlu0 0
        %3282 = vperm.xlu0 %3281, %v3194
        %v3283 = vpop.permute.xlu0 %3282
        %3286 = vset.pattern.permute.xlu0 0
        %3287 = vperm.xlu0 %3286, %v3195
        %v3288 = vpop.permute.xlu0 %3287
        %3291 = vset.pattern.permute.xlu0 0
        %3292 = vperm.xlu0 %3291, %v3196
        %v3293 = vpop.permute.xlu0 %3292
        %3296 = vset.pattern.permute.xlu0 0
        %3297 = vperm.xlu0 %3296, %v3197
        %v3298 = vpop.permute.xlu0 %3297
        %3301 = vset.pattern.permute.xlu0 0
        %3302 = vperm.xlu0 %3301, %v3198
        %v3303 = vpop.permute.xlu0 %3302
        %3306 = vset.pattern.permute.xlu0 0
        %3307 = vperm.xlu0 %3306, %v3199
        %v3308 = vpop.permute.xlu0 %3307
        %3311 = vset.pattern.permute.xlu0 0
        %3312 = vperm.xlu0 %3311, %v3200
        %v3313 = vpop.permute.xlu0 %3312
        %3316 = vset.pattern.permute.xlu0 0
        %3317 = vperm.xlu0 %3316, %v3201
        %v3318 = vpop.permute.xlu0 %3317
        %3321 = vset.pattern.permute.xlu0 0
        %3322 = vperm.xlu0 %3321, %v3202
        %v3323 = vpop.permute.xlu0 %3322
        %3326 = vset.pattern.permute.xlu0 0
        %3327 = vperm.xlu0 %3326, %v3203
        %v3328 = vpop.permute.xlu0 %3327
        %3331 = vset.pattern.permute.xlu0 0
        %3332 = vperm.xlu0 %3331, %v3204
        %v3333 = vpop.permute.xlu0 %3332
        %3336 = vset.pattern.permute.xlu0 0
        %3337 = vperm.xlu0 %3336, %v3205
        %v3338 = vpop.permute.xlu0 %3337
        %3341 = vset.pattern.permute.xlu0 0
        %3342 = vperm.xlu0 %3341, %v3206
        %v3343 = vpop.permute.xlu0 %3342
        %3346 = vset.pattern.permute.xlu0 0
        %3347 = vperm.xlu0 %3346, %v3207
        %v3348 = vpop.permute.xlu0 %3347
        %3351 = vset.pattern.permute.xlu0 0
        %3352 = vperm.xlu0 %3351, %v3208
        %v3353 = vpop.permute.xlu0 %3352
        %3356 = vset.pattern.permute.xlu0 0
        %3357 = vperm.xlu0 %3356, %v3209
        %v3358 = vpop.permute.xlu0 %3357
        %3361 = vset.pattern.permute.xlu0 0
        %3362 = vperm.xlu0 %3361, %v3210
        %v3363 = vpop.permute.xlu0 %3362
        %3366 = vset.pattern.permute.xlu0 0
        %3367 = vperm.xlu0 %3366, %v3211
        %v3368 = vpop.permute.xlu0 %3367
        %3371 = vset.pattern.permute.xlu0 0
        %3372 = vperm.xlu0 %3371, %v3212
        %v3373 = vpop.permute.xlu0 %3372
        %3376 = vset.pattern.permute.xlu0 0
        %3377 = vperm.xlu0 %3376, %v3213
        %v3378 = vpop.permute.xlu0 %3377
        %3381 = vset.pattern.permute.xlu0 0
        %3382 = vperm.xlu0 %3381, %v3214
        %v3383 = vpop.permute.xlu0 %3382
        %3386 = vset.pattern.permute.xlu0 0
        %3387 = vperm.xlu0 %3386, %v3215
        %v3388 = vpop.permute.xlu0 %3387
        %3391 = vset.pattern.permute.xlu0 0
        %3392 = vperm.xlu0 %3391, %v3216
        %v3393 = vpop.permute.xlu0 %3392
        %3396 = vset.pattern.permute.xlu0 0
        %3397 = vperm.xlu0 %3396, %v3217
        %v3398 = vpop.permute.xlu0 %3397
        %3401 = vset.pattern.permute.xlu0 0
        %3402 = vperm.xlu0 %3401, %v3218
        %v3403 = vpop.permute.xlu0 %3402
        %3406 = vset.pattern.permute.xlu0 0
        %3407 = vperm.xlu0 %3406, %v3219
        %v3408 = vpop.permute.xlu0 %3407
        %v3410 = vmul.f32 %v3144, %v3223
        %v3411 = vmul.f32 %v3145, %v3228
        %v3412 = vmul.f32 %v3146, %v3233
        %v3413 = vmul.f32 %v3147, %v3238
        %v3414 = vmul.f32 %v3148, %v3243
        %v3415 = vmul.f32 %v3149, %v3248
        %v3416 = vmul.f32 %v3150, %v3253
        %v3417 = vmul.f32 %v3151, %v3258
        %v3418 = vmul.f32 %v3152, %v3263
        %v3419 = vmul.f32 %v3153, %v3268
        %v3420 = vmul.f32 %v3154, %v3273
        %v3421 = vmul.f32 %v3155, %v3278
        %v3422 = vmul.f32 %v3156, %v3283
        %v3423 = vmul.f32 %v3157, %v3288
        %v3424 = vmul.f32 %v3158, %v3293
        %v3425 = vmul.f32 %v3159, %v3298
        %v3426 = vmul.f32 %v3160, %v3303
        %v3427 = vmul.f32 %v3161, %v3308
        %v3428 = vmul.f32 %v3162, %v3313
        %v3429 = vmul.f32 %v3163, %v3318
        %v3430 = vmul.f32 %v3164, %v3323
        %v3431 = vmul.f32 %v3165, %v3328
        %v3432 = vmul.f32 %v3166, %v3333
        %v3433 = vmul.f32 %v3167, %v3338
        %v3434 = vmul.f32 %v3168, %v3343
        %v3435 = vmul.f32 %v3169, %v3348
        %v3436 = vmul.f32 %v3170, %v3353
        %v3437 = vmul.f32 %v3171, %v3358
        %v3438 = vmul.f32 %v3172, %v3363
        %v3439 = vmul.f32 %v3173, %v3368
        %v3440 = vmul.f32 %v3174, %v3373
        %v3441 = vmul.f32 %v3175, %v3378
        %v3442 = vmul.f32 %v3176, %v3383
        %v3443 = vmul.f32 %v3177, %v3388
        %v3444 = vmul.f32 %v3178, %v3393
        %v3445 = vmul.f32 %v3179, %v3398
        %v3446 = vmul.f32 %v3180, %v3403
        %v3447 = vmul.f32 %v3181, %v3408
        %v3448 = vpack.c.bf16 %v3410, %v3410
        %v3449 = vpack.c.bf16 %v3411, %v3411
        %v3450 = vpack.c.bf16 %v3412, %v3412
        %v3451 = vpack.c.bf16 %v3413, %v3413
        %v3452 = vpack.c.bf16 %v3414, %v3414
        %v3453 = vpack.c.bf16 %v3415, %v3415
        %v3454 = vpack.c.bf16 %v3416, %v3416
        %v3455 = vpack.c.bf16 %v3417, %v3417
        %v3456 = vpack.c.bf16 %v3418, %v3418
        %v3457 = vpack.c.bf16 %v3419, %v3419
        %v3458 = vpack.c.bf16 %v3420, %v3420
        %v3459 = vpack.c.bf16 %v3421, %v3421
        %v3460 = vpack.c.bf16 %v3422, %v3422
        %v3461 = vpack.c.bf16 %v3423, %v3423
        %v3462 = vpack.c.bf16 %v3424, %v3424
        %v3463 = vpack.c.bf16 %v3425, %v3425
        %v3464 = vpack.c.bf16 %v3426, %v3426
        %v3465 = vpack.c.bf16 %v3427, %v3427
        %v3466 = vpack.c.bf16 %v3428, %v3428
        %v3467 = vpack.c.bf16 %v3429, %v3429
        %v3468 = vpack.c.bf16 %v3430, %v3430
        %v3469 = vpack.c.bf16 %v3431, %v3431
        %v3470 = vpack.c.bf16 %v3432, %v3432
        %v3471 = vpack.c.bf16 %v3433, %v3433
        %v3472 = vpack.c.bf16 %v3434, %v3434
        %v3473 = vpack.c.bf16 %v3435, %v3435
        %v3474 = vpack.c.bf16 %v3436, %v3436
        %v3475 = vpack.c.bf16 %v3437, %v3437
        %v3476 = vpack.c.bf16 %v3438, %v3438
        %v3477 = vpack.c.bf16 %v3439, %v3439
        %v3478 = vpack.c.bf16 %v3440, %v3440
        %v3479 = vpack.c.bf16 %v3441, %v3441
        %v3480 = vpack.c.bf16 %v3442, %v3442
        %v3481 = vpack.c.bf16 %v3443, %v3443
        %v3482 = vpack.c.bf16 %v3444, %v3444
        %v3483 = vpack.c.bf16 %v3445, %v3445
        %v3484 = vpack.c.bf16 %v3446, %v3446
        %v3485 = vpack.c.bf16 %v3447, %v3447
        %3486 = vst [vmem:[%s246] sm:$0xf] %v3448
        %3487 = vst [vmem:[%s246 + $0x4] sm:$0xf] %v3449
        %3488 = vst [vmem:[%s246 + $0x8] sm:$0xf] %v3450
        %3489 = vst [vmem:[%s246 + $0xc] sm:$0xf] %v3451
        %3490 = vst [vmem:[%s246 + $0x10] sm:$0xf] %v3452
        %3491 = vst [vmem:[%s246 + $0x14] sm:$0xf] %v3453
        %3492 = vst [vmem:[%s246 + $0x18] sm:$0xf] %v3454
        %3493 = vst [vmem:[%s246 + $0x1c] sm:$0xf] %v3455
        %3494 = vst [vmem:[%s246 + $0x20] sm:$0xf] %v3456
        %3495 = vst [vmem:[%s246 + $0x24] sm:$0xf] %v3457
        %3496 = vst [vmem:[%s246 + $0x28] sm:$0xf] %v3458
        %3497 = vst [vmem:[%s246 + $0x2c] sm:$0xf] %v3459
        %3498 = vst [vmem:[%s246 + $0x30] sm:$0xf] %v3460
        %3499 = vst [vmem:[%s246 + $0x34] sm:$0xf] %v3461
        %3500 = vst [vmem:[%s246 + $0x38] sm:$0xf] %v3462
        %3501 = vst [vmem:[%s246 + $0x3c] sm:$0xf] %v3463
        %3502 = vst [vmem:[%s246 + $0x40] sm:$0xf] %v3464
        %3503 = vst [vmem:[%s246 + $0x44] sm:$0xf] %v3465
        %3504 = vst [vmem:[%s246 + $0x48] sm:$0xf] %v3466
        %3505 = vst [vmem:[%s246 + $0x4c] sm:$0xf] %v3467
        %3506 = vst [vmem:[%s246 + $0x50] sm:$0xf] %v3468
        %3507 = vst [vmem:[%s246 + $0x54] sm:$0xf] %v3469
        %3508 = vst [vmem:[%s246 + $0x58] sm:$0xf] %v3470
        %3509 = vst [vmem:[%s246 + $0x5c] sm:$0xf] %v3471
        %3510 = vst [vmem:[%s246 + $0x60] sm:$0xf] %v3472
        %3511 = vst [vmem:[%s246 + $0x64] sm:$0xf] %v3473
        %3512 = vst [vmem:[%s246 + $0x68] sm:$0xf] %v3474
        %3513 = vst [vmem:[%s246 + $0x6c] sm:$0xf] %v3475
        %3514 = vst [vmem:[%s246 + $0x70] sm:$0xf] %v3476
        %3515 = vst [vmem:[%s246 + $0x74] sm:$0xf] %v3477
        %3516 = vst [vmem:[%s246 + $0x78] sm:$0xf] %v3478
        %3517 = vst [vmem:[%s246 + $0x7c] sm:$0xf] %v3479
        %3518 = vst [vmem:[%s246 + $0x80] sm:$0xf] %v3480
        %3519 = vst [vmem:[%s246 + $0x84] sm:$0xf] %v3481
        %3520 = vst [vmem:[%s246 + $0x88] sm:$0xf] %v3482
        %3521 = vst [vmem:[%s246 + $0x8c] sm:$0xf] %v3483
        %3522 = vst [vmem:[%s246 + $0x90] sm:$0xf] %v3484
        %3523 = vst [vmem:[%s246 + $0x94] sm:$0xf] %v3485
        %v3524 = vld [vmem:[#allocation2] sm:$0x1]
        %v3525 = vadd.f32 %v3410, %v3411
        %v3526 = vadd.f32 %v3525, %v3412
        %v3527 = vadd.f32 %v3526, %v3413
        %v3528 = vadd.f32 %v3527, %v3414
        %v3529 = vadd.f32 %v3528, %v3415
        %v3530 = vadd.f32 %v3529, %v3416
        %v3531 = vadd.f32 %v3530, %v3417
        %v3532 = vadd.f32 %v3531, %v3418
        %v3533 = vadd.f32 %v3532, %v3419
        %v3534 = vadd.f32 %v3533, %v3420
        %v3535 = vadd.f32 %v3534, %v3421
        %v3536 = vadd.f32 %v3535, %v3422
        %v3537 = vadd.f32 %v3536, %v3423
        %v3538 = vadd.f32 %v3537, %v3424
        %v3539 = vadd.f32 %v3538, %v3425
        %v3540 = vadd.f32 %v3539, %v3426
        %v3541 = vadd.f32 %v3540, %v3427
        %v3542 = vadd.f32 %v3541, %v3428
        %v3543 = vadd.f32 %v3542, %v3429
        %v3544 = vadd.f32 %v3543, %v3430
        %v3545 = vadd.f32 %v3544, %v3431
        %v3546 = vadd.f32 %v3545, %v3432
        %v3547 = vadd.f32 %v3546, %v3433
        %v3548 = vadd.f32 %v3547, %v3434
        %v3549 = vadd.f32 %v3548, %v3435
        %v3550 = vadd.f32 %v3549, %v3436
        %v3551 = vadd.f32 %v3550, %v3437
        %v3552 = vadd.f32 %v3551, %v3438
        %v3553 = vadd.f32 %v3552, %v3439
        %v3554 = vadd.f32 %v3553, %v3440
        %v3555 = vadd.f32 %v3554, %v3441
        %v3556 = vadd.f32 %v3555, %v3442
        %v3557 = vadd.f32 %v3556, %v3443
        %v3558 = vadd.f32 %v3557, %v3444
        %v3559 = vadd.f32 %v3558, %v3445
        %v3560 = vadd.f32 %v3559, %v3446
        %v3561 = vadd.f32 %v3560, %v3447
        %v3562 = vrot.slane %v3561, 4
        %v3563 = vadd.f32 %v3561, %v3562
        %v3564 = vrot.slane %v3563, 2
        %v3565 = vadd.f32 %v3563, %v3564
        %v3566 = vrot.slane %v3565, 1
        %v3567 = vadd.f32 %v3565, %v3566
        %v3568 = vadd.f32 %v3524, %v3567
        %3569 = vst [vmem:[#allocation2] sm:$0x1] %v3568
        %v3570 = vld [vmem:[#allocation3] sm:$0x1]
        %v3571 = vmul.f32 %v3410, %v3410
        %v3572 = vmul.f32 %v3411, %v3411
        %v3573 = vmul.f32 %v3412, %v3412
        %v3574 = vmul.f32 %v3413, %v3413
        %v3575 = vmul.f32 %v3414, %v3414
        %v3576 = vmul.f32 %v3415, %v3415
        %v3577 = vmul.f32 %v3416, %v3416
        %v3578 = vmul.f32 %v3417, %v3417
        %v3579 = vmul.f32 %v3418, %v3418
        %v3580 = vmul.f32 %v3419, %v3419
        %v3581 = vmul.f32 %v3420, %v3420
        %v3582 = vmul.f32 %v3421, %v3421
        %v3583 = vmul.f32 %v3422, %v3422
        %v3584 = vmul.f32 %v3423, %v3423
        %v3585 = vmul.f32 %v3424, %v3424
        %v3586 = vmul.f32 %v3425, %v3425
        %v3587 = vmul.f32 %v3426, %v3426
        %v3588 = vmul.f32 %v3427, %v3427
        %v3589 = vmul.f32 %v3428, %v3428
        %v3590 = vmul.f32 %v3429, %v3429
        %v3591 = vmul.f32 %v3430, %v3430
        %v3592 = vmul.f32 %v3431, %v3431
        %v3593 = vmul.f32 %v3432, %v3432
        %v3594 = vmul.f32 %v3433, %v3433
        %v3595 = vmul.f32 %v3434, %v3434
        %v3596 = vmul.f32 %v3435, %v3435
        %v3597 = vmul.f32 %v3436, %v3436
        %v3598 = vmul.f32 %v3437, %v3437
        %v3599 = vmul.f32 %v3438, %v3438
        %v3600 = vmul.f32 %v3439, %v3439
        %v3601 = vmul.f32 %v3440, %v3440
        %v3602 = vmul.f32 %v3441, %v3441
        %v3603 = vmul.f32 %v3442, %v3442
        %v3604 = vmul.f32 %v3443, %v3443
        %v3605 = vmul.f32 %v3444, %v3444
        %v3606 = vmul.f32 %v3445, %v3445
        %v3607 = vmul.f32 %v3446, %v3446
        %v3608 = vmul.f32 %v3447, %v3447
        %v3609 = vadd.f32 %v3571, %v3572
        %v3610 = vadd.f32 %v3609, %v3573
        %v3611 = vadd.f32 %v3610, %v3574
        %v3612 = vadd.f32 %v3611, %v3575
        %v3613 = vadd.f32 %v3612, %v3576
        %v3614 = vadd.f32 %v3613, %v3577
        %v3615 = vadd.f32 %v3614, %v3578
        %v3616 = vadd.f32 %v3615, %v3579
        %v3617 = vadd.f32 %v3616, %v3580
        %v3618 = vadd.f32 %v3617, %v3581
        %v3619 = vadd.f32 %v3618, %v3582
        %v3620 = vadd.f32 %v3619, %v3583
        %v3621 = vadd.f32 %v3620, %v3584
        %v3622 = vadd.f32 %v3621, %v3585
        %v3623 = vadd.f32 %v3622, %v3586
        %v3624 = vadd.f32 %v3623, %v3587
        %v3625 = vadd.f32 %v3624, %v3588
        %v3626 = vadd.f32 %v3625, %v3589
        %v3627 = vadd.f32 %v3626, %v3590
        %v3628 = vadd.f32 %v3627, %v3591
        %v3629 = vadd.f32 %v3628, %v3592
        %v3630 = vadd.f32 %v3629, %v3593
        %v3631 = vadd.f32 %v3630, %v3594
        %v3632 = vadd.f32 %v3631, %v3595
        %v3633 = vadd.f32 %v3632, %v3596
        %v3634 = vadd.f32 %v3633, %v3597
        %v3635 = vadd.f32 %v3634, %v3598
        %v3636 = vadd.f32 %v3635, %v3599
        %v3637 = vadd.f32 %v3636, %v3600
        %v3638 = vadd.f32 %v3637, %v3601
        %v3639 = vadd.f32 %v3638, %v3602
        %v3640 = vadd.f32 %v3639, %v3603
        %v3641 = vadd.f32 %v3640, %v3604
        %v3642 = vadd.f32 %v3641, %v3605
        %v3643 = vadd.f32 %v3642, %v3606
        %v3644 = vadd.f32 %v3643, %v3607
        %v3645 = vadd.f32 %v3644, %v3608
        %v3646 = vrot.slane %v3645, 4
        %v3647 = vadd.f32 %v3645, %v3646
        %v3648 = vrot.slane %v3647, 2
        %v3649 = vadd.f32 %v3647, %v3648
        %v3650 = vrot.slane %v3649, 1
        %v3651 = vadd.f32 %v3649, %v3650
        %v3652 = vadd.f32 %v3570, %v3651
        %3653 = vst [vmem:[#allocation3] sm:$0x1] %v3652
        %p3654 = scmp.eq.s32.totalorder %s26, 1
        // Predicated region
        $region37: #{tpu_custom_call.1} parent=31 // pred_check
          %p3655 = pneg %p3654
        $region38: #{tpu_custom_call.1} parent=31 // pred_check_branch
          %3657 = sbr.rel (%p3655) target = $region40
        $region39: #{tpu_custom_call.1} parent=31 // pred_region
          %v3658 = vld [vmem:[#allocation2] sm:$0x1]
          %3659 = vst [vmem:[#allocation6] sm:$0x1] %v3658
          %v3660 = vld [vmem:[#allocation3] sm:$0x1]
          %3661 = vst [vmem:[#allocation8] sm:$0x1] %v3660
        $region40: #{tpu_custom_call.1} parent=31 // pred_fallthru
          _
        %s3662 = sand.u32 %s116, 1
        %s3663 = scalar_lea.sflag [#allocation5], %s3662
        %s3664 = sand.u32 %s116, 1
        %s3665 = smul.addr %s3664, 152
        %s3666 = scalar_lea.vmem [#allocation4], %s3665
        // Predicated region
        $region41: #{tpu_custom_call.1} parent=31 // pred_check
          %p3667 = pneg %p126
        $region42: #{tpu_custom_call.1} parent=31 // pred_check_branch
          %3669 = sbr.rel (%p3667) target = $region44
        $region43: #{tpu_custom_call.1} parent=31 // pred_region
          %3671 = vsyncadd %s3663, 0
          %s3672 = smul.addr %s26, 38
          %s3673 = sadd.s32 %s25, %s3672
          %s3674 = smul.addr %s3673, 4
          %s3675 = scalar_lea.hbm %s3, %s3674
          %s3676 = sshll.u32 %s3666, 4
          %s3677 = int_to_ptr.vmem [resolvable:$true] %s3676
          %s3678 = sshll.u32 %s3675, 4
          %s3679 = int_to_ptr.hbm [resolvable:$true] %s3678
          %3684 = dma.vmem_to_hbm [thread:$0]  %s3677, 2432, %s3679, %s3663, 64, 64, 4
        $region44: #{tpu_custom_call.1} parent=31 // pred_fallthru
          _
        // Predicated region
        $region45: #{tpu_custom_call.1} parent=31 // pred_check
          %p3685 = pneg %p152
        $region46: #{tpu_custom_call.1} parent=31 // pred_check_branch
          %3687 = sbr.rel (%p3685) target = $region48
        $region47: #{tpu_custom_call.1} parent=31 // pred_region
          %3689 = vsyncadd [#allocation7], 0
          %s3690 = scalar_lea.hbm %s4, %s25
          %s3692 = sshll.u32 [#allocation6], 4
          %s3693 = int_to_ptr.vmem [resolvable:$true] %s3692
          %s3694 = sshll.u32 %s3690, 4
          %s3695 = int_to_ptr.hbm [resolvable:$true] %s3694
          %3697 = dma.vmem_to_hbm [thread:$0]  %s3693, 16, %s3695, [#allocation7]
        $region48: #{tpu_custom_call.1} parent=31 // pred_fallthru
          _
        // Predicated region
        $region49: #{tpu_custom_call.1} parent=31 // pred_check
          %p3698 = pneg %p178
        $region50: #{tpu_custom_call.1} parent=31 // pred_check_branch
          %3700 = sbr.rel (%p3698) target = $region52
        $region51: #{tpu_custom_call.1} parent=31 // pred_region
          %3702 = vsyncadd [#allocation7], 0
          %s3703 = scalar_lea.hbm %s5, %s25
          %s3705 = sshll.u32 [#allocation8], 4
          %s3706 = int_to_ptr.vmem [resolvable:$true] %s3705
          %s3707 = sshll.u32 %s3703, 4
          %s3708 = int_to_ptr.hbm [resolvable:$true] %s3707
          %3710 = dma.vmem_to_hbm [thread:$0]  %s3706, 16, %s3708, [#allocation7]
        $region52: #{tpu_custom_call.1} parent=31 // pred_fallthru
          _
        // Predicated region
        $region53: #{tpu_custom_call.1} parent=31 // pred_check
          %p3711 = pneg %p152
        $region54: #{tpu_custom_call.1} parent=31 // pred_check_branch
          %3713 = sbr.rel (%p3711) target = $region56
        $region55: #{tpu_custom_call.1} parent=31 // pred_region
          %3715 = dma.done [#allocation7], 16
        $region56: #{tpu_custom_call.1} parent=31 // pred_fallthru
          _
        // Predicated region
        $region57: #{tpu_custom_call.1} parent=31 // pred_check
          %p3716 = pneg %p178
        $region58: #{tpu_custom_call.1} parent=31 // pred_check_branch
          %3718 = sbr.rel (%p3716) target = $region60
        $region59: #{tpu_custom_call.1} parent=31 // pred_region
          %3720 = dma.done [#allocation7], 16
        $region60: #{tpu_custom_call.1} parent=31 // pred_fallthru
          _
      $region32: #{tpu_custom_call.1} parent=5 // pred_fallthru
        _
      %p3721 = scmp.le.s32.totalorder 2, %s16
      // Predicated region
      $region61: #{tpu_custom_call.1} parent=5 // pred_check
        %p3722 = pneg %p3721
      $region62: #{tpu_custom_call.1} parent=5 // pred_check_branch
        %3724 = sbr.rel (%p3722) target = $region64
      $region63: #{tpu_custom_call.1} parent=5 // pred_region
        %s3725 = ssub.s32 %s16, 2
        // Predicated region
        $region65: #{tpu_custom_call.1} parent=63 // pred_check
          %p3726 = pneg %p132
        $region66: #{tpu_custom_call.1} parent=63 // pred_check_branch
          %3728 = sbr.rel (%p3726) target = $region68
        $region67: #{tpu_custom_call.1} parent=63 // pred_region
          %s3729 = sand.u32 %s117, 1
          %s3730 = scalar_lea.sflag [#allocation5], %s3729
          %s3731 = sand.u32 %s117, 1
          %s3732 = smul.addr %s3731, 152
          %s3733 = scalar_lea.vmem [#allocation4], %s3732
          %3735 = dma.done %s3730, 2432
        $region68: #{tpu_custom_call.1} parent=63 // pred_fallthru
          _
      $region64: #{tpu_custom_call.1} parent=5 // pred_fallthru
        _
    $region6: #{tpu_custom_call.1} parent=1 // loop_footer
      %s20 = sadd.s32 1, %s16
    $region7: #{tpu_custom_call.1} parent=1 // loop_footer_branch
      %15 = sbr.rel target = $region3
    $region8: #{tpu_custom_call.1} parent=1 // loop_exit
      _
    %3736 = vsyncpa [#allocation5], 1
    %s3737 = scalar_lea.sflag [#allocation5], 1
    %3738 = vsyncpa %s3737, 1
    %3739 = vsyncpa [#allocation7], 1

</llo_original>
